<compile_context>
chip_gen: v7x
topology: tpu7x:2x2x1
jax: 0.10.0
libtpu: 0.0.40
codegen_flags: <defaults>
</compile_context>

<pallas_src>
import numpy as np
import jax
import jax.numpy as jnp
from jax.experimental import pallas as pl
from jax.experimental.pallas import tpu as pltpu


# ----------------------------- Pallas kernel --------------------------------

def pnn_kernel(ids_ref, t_ref, w1p_ref, b1_ref, w2_ref, b2_ref, w3_ref, b3_ref,
               out_ref):
    """One batch tile: fused embedding gather + pairwise inner products + MLP.

    ids_ref : [tb, F]   int32 global (offset) ids
    t_ref   : [Vp, 256] bf16  folded table: per-field  table @ [S_L|S_R|W1_flat|0]
    w1p_ref : [128,128] bf16  D-expanded pair weights (rows 0..P*D-1, cols 0..H1-1)
    """
    tb, nf = ids_ref.shape
    vp = t_ref.shape[0]

    # --- multi-hot gather: one lane-dense bf16 MXU pass does gather+flatten+W1_flat ---
    ids = ids_ref[...]                                               # [tb, F] int32
    viota = jax.lax.broadcasted_iota(jnp.int32, (tb, vp), 1)         # [tb, Vp]
    mh = (ids[:, 0:1] == viota).astype(jnp.float32)
    for f in range(1, nf):                                           # static F
        mh = mh + (ids[:, f:f + 1] == viota).astype(jnp.float32)
    out1 = jnp.dot(mh.astype(jnp.bfloat16), t_ref[...],
                   preferred_element_type=jnp.float32)               # [tb, 256]

    lr = out1[:, :128]       # lanes 0..63: "left" pair embeds, 64..127: "right"
    hflat = out1[:, 128:]    # lanes 0..H1-1: flat @ W1_flat, rest exactly 0

    # all pairwise e_i[d]*e_j[d] products: swap the 64-lane halves (XLU) and multiply (VPU)
    prod = lr * pltpu.roll(lr, shift=64, axis=1)                     # [tb, 128] f32

    # first Linear (pair part) + flat part + bias, ReLU
    h = (jnp.dot(prod.astype(jnp.bfloat16), w1p_ref[...],
                 preferred_element_type=jnp.float32)
         + hflat + b1_ref[...])                                      # [tb, 128]
    h = jnp.maximum(h, 0.0)

    # second Linear + ReLU (padded to 128 lanes; pad columns stay 0)
    h = jnp.dot(h.astype(jnp.bfloat16), w2_ref[...],
                preferred_element_type=jnp.float32) + b2_ref[...]
    h = jnp.maximum(h, 0.0)                                          # [tb, 128]

    # final H2 -> 1 layer as VPU multiply + lane reduction (avoid an N=1 matmul)
    y = jnp.sum(h * w3_ref[...], axis=1, keepdims=True) + b3_ref[...]
    out_ref[...] = jax.nn.sigmoid(y)


# ------------------------------ Wrapper --------------------------------------

def _round_up(x, m):
    return ((x + m - 1) // m) * m


def pnn_forward_pallas(x_ids, table, field_dims, w1, b1, w2, b2, w3, b3, *,
                       embed_dim, tile_b=None):
    """x_ids: [B, F] int32 per-field ids (not offset).  table: [sum(field_dims), D] f32.
    w1: [F*D + P, H1], w2: [H1, H2], w3: [H2, 1]  (torch Linear weights pre-transposed
    to [in, out]).  Returns sigmoid probabilities, shape [B]."""
    B, F = x_ids.shape
    D = embed_dim
    FD = F * D
    P = F * (F - 1) // 2
    PD = P * D
    H1 = w1.shape[1]
    H2 = w2.shape[1]
    V = int(sum(field_dims))
    assert w1.shape[0] == FD + P
    # Demo-sized PNN: everything fits one lane-tile.
    assert PD <= 64 and H1 <= 128 and H2 <= 128
    # TODO(synk): for big vocabularies use an in-kernel jnp.take / manual-DMA gather
    # instead of the multi-hot matmul (which is O(B*V) work).

    H1p, H2p = 128, 128
    Vp = _round_up(max(V, 1), 128)

    # --- host-side weight folding (f32; MXU operands then cast to bf16) ---------
    offsets_np = np.concatenate(
        [[0], np.cumsum(np.asarray(field_dims[:-1]))]).astype(np.int32)

    # 0/1 selection matrices (padded to 64 lanes each): col p*D+d of S_left picks
    # e_{i_p}[d], of S_right picks e_{j_p}[d], pair order = (i<j) loop order.
    pairs = [(i, j) for i in range(F) for j in range(i + 1, F)]
    sel_np = np.zeros((FD, 128), np.float32)
    for p, (i, j) in enumerate(pairs):
        for d in range(D):
            sel_np[i * D + d, p * D + d] = 1.0            # S_left  -> lanes 0..63
            sel_np[j * D + d, 64 + p * D + d] = 1.0       # S_right -> lanes 64..127

    # packed first-stage RHS: [ S_left | S_right | W1_flat | 0 ]   -> [FD, 256]
    pack_rhs = jnp.concatenate(
        [jnp.asarray(sel_np), w1[:FD].astype(jnp.float32),
         jnp.zeros((FD, 128 - H1), jnp.float32)], axis=1)

    # fold the embedding table through the packed RHS, per field:
    #   T[v, :] = table[v] @ pack_rhs[f(v)*D:(f(v)+1)*D, :]
    t_blocks = []
    for f in range(F):
        lo = int(offsets_np[f])
        hi = lo + int(field_dims[f])
        t_blocks.append(table[lo:hi].astype(jnp.float32)
                        @ pack_rhs[f * D:(f + 1) * D])
    T = jnp.concatenate(t_blocks, axis=0)                  # [V, 256]
    T = jnp.pad(T, ((0, Vp - V), (0, 0)))                  # [Vp, 256]

    w1p_exp = jnp.repeat(w1[FD:].astype(jnp.float32), D, axis=0)      # [PD, H1]
    w1p_pad = jnp.pad(w1p_exp, ((0, 128 - PD), (0, H1p - H1)))        # [128, H1p]
    b1_pad = jnp.pad(jnp.reshape(b1, (1, H1)).astype(jnp.float32),
                     ((0, 0), (0, H1p - H1)))
    w2_pad = jnp.pad(w2.astype(jnp.float32), ((0, H1p - H1), (0, H2p - H2)))
    b2_pad = jnp.pad(jnp.reshape(b2, (1, H2)).astype(jnp.float32),
                     ((0, 0), (0, H2p - H2)))
    w3_pad = jnp.pad(jnp.reshape(w3, (1, H2)).astype(jnp.float32),
                     ((0, 0), (0, H2p - H2)))
    b3_pad = jnp.reshape(b3, (1, 1)).astype(jnp.float32)

    # bf16 for MXU operands; biases / w3 / b3 stay f32 (VPU adds; exact).
    T_bf = T.astype(jnp.bfloat16)
    w1p_bf = w1p_pad.astype(jnp.bfloat16)
    w2_bf = w2_pad.astype(jnp.bfloat16)

    # global (offset) ids: only 16 B/row streamed from HBM into the kernel
    gids = x_ids.astype(jnp.int32) + jnp.asarray(offsets_np)[None, :]

    # --- batch tiling ------------------------------------------------------------
    if tile_b is None:
        # Default: two tiles so the "parallel" batch axis can be split across v7x's
        # two TensorCores; v5e/v6e just run the two large tiles back to back.
        tile_b = max(8, _round_up((B + 1) // 2, 8))
    tile_b = min(tile_b, 2048)                       # stay well inside scoped VMEM
    tb = min(tile_b, _round_up(B, 8))
    num_tiles = pl.cdiv(B, tb)
    B_pad = num_tiles * tb
    if B_pad != B:
        gids = jnp.pad(gids, ((0, B_pad - B), (0, 0)))   # padded rows: id 0, sliced off

    # --- advisory cost estimate ----------------------------------------------------
    flops_row = 2 * (Vp * 256 + 128 * H1p + H1p * H2p + H2p) + F * Vp + 6 * 128
    cost = pl.CostEstimate(
        flops=int(B_pad * flops_row),
        transcendentals=int(B_pad),
        bytes_accessed=int(4 * B_pad * (F + 1)
                           + 2 * (Vp * 256 + 128 * H1p + H1p * H2p)
                           + 4 * (H1p + 2 * H2p + 1)),
    )

    grid_spec = pltpu.PrefetchScalarGridSpec(
        num_scalar_prefetch=0,
        grid=(num_tiles,),
        in_specs=[
            pl.BlockSpec((tb, F), lambda i: (i, 0)),        # ids (streamed, tiny)
            pl.BlockSpec((Vp, 256), lambda i: (0, 0)),      # folded table (resident)
            pl.BlockSpec((128, H1p), lambda i: (0, 0)),     # W1_pair expanded (resident)
            pl.BlockSpec((1, H1p), lambda i: (0, 0)),       # b1
            pl.BlockSpec((H1p, H2p), lambda i: (0, 0)),     # W2
            pl.BlockSpec((1, H2p), lambda i: (0, 0)),       # b2
            pl.BlockSpec((1, H2p), lambda i: (0, 0)),       # w3 (row)
            pl.BlockSpec((1, 1), lambda i: (0, 0)),         # b3
        ],
        out_specs=pl.BlockSpec((tb, 1), lambda i: (i, 0)),
    )

    out = pl.pallas_call(
        pnn_kernel,
        out_shape=jax.ShapeDtypeStruct((B_pad, 1), jnp.float32),
        grid_spec=grid_spec,
        compiler_params=pltpu.CompilerParams(
            dimension_semantics=("parallel",)),
        cost_estimate=cost,
    )(gids, T_bf, w1p_bf, b1_pad, w2_bf, b2_pad, w3_pad, b3_pad)

    return out[:B, 0]                                # torch's .squeeze()


# ------------------------------ JAX reference ---------------------------------

def features_embedding(x, table, offsets):
    """x: [B, F] int32 categorical ids; table: [sum(field_dims), D] -> [B, F, D]."""
    idx = x + offsets[None, :]
    return table[idx]


def pure_jax_reference(x, table, offsets, w1, b1, w2, b2, w3, b3):
    """Mirrors the original module math (pair loop + concat + single W1 matmul), f32."""
    e = features_embedding(x, table, offsets)
    B, F, D = e.shape
    flat = e.reshape(B, F * D)
    pairs = []
    for i in range(F):
        for j in range(i + 1, F):
            pairs.append(jnp.sum(e[:, i, :] * e[:, j, :], axis=-1, keepdims=True))
    p = jnp.concatenate([flat] + pairs, axis=1)
    h = jnp.maximum(p @ w1 + b1, 0.0)
    h = jnp.maximum(h @ w2 + b2, 0.0)
    y = h @ w3 + b3
    return jax.nn.sigmoid(y)[:, 0]


# ------------------------------- main ------------------------------------------

if __name__ == "__main__":
    # Module-consistent config: 4 categorical fields, embed_dim=8, hidden=(32,16),
    # need_inner=True, need_outer=False.  Batch of 1000 exercises the 2-tile grid
    # (last tile zero-padded).
    field_dims = (10, 20, 30, 40)
    F = len(field_dims)
    D = 8
    hidden_dims = (32, 16)
    B = 1000

    concat_embed_dim = F * D
    product_size = F * (F - 1) // 2
    mlp_in = concat_embed_dim + product_size        # 32 + 6 = 38

    key = jax.random.PRNGKey(0)
    k_tab, k_x, k1, k2, k3, kb1, kb2, kb3 = jax.random.split(key, 8)

    # Deterministic synthetic parameters (shapes follow the module __init__).
    table = jax.random.normal(k_tab, (sum(field_dims), D), jnp.float32) * 0.1
    offsets = jnp.asarray([0] + list(np.cumsum(field_dims[:-1])), dtype=jnp.int32)

    # torch.nn.Linear weights are [out, in]; stored pre-transposed as [in, out].
    w1 = jax.random.normal(k1, (mlp_in, hidden_dims[0]), jnp.float32) * 0.1
    b1 = jax.random.normal(kb1, (1, hidden_dims[0]), jnp.float32) * 0.01
    w2 = jax.random.normal(k2, (hidden_dims[0], hidden_dims[1]), jnp.float32) * 0.1
    b2 = jax.random.normal(kb2, (1, hidden_dims[1]), jnp.float32) * 0.01
    w3 = jax.random.normal(k3, (hidden_dims[1], 1), jnp.float32) * 0.1
    b3 = jax.random.normal(kb3, (1, 1), jnp.float32) * 0.01

    # Input: [batch_size, num_fields] categorical indices.
    x = jnp.stack(
        [jax.random.randint(jax.random.fold_in(k_x, i), (B,), 0, field_dims[i],
                            jnp.int32)
         for i in range(F)], axis=1)                 # [B, F]

    out = pnn_forward_pallas(x, table, field_dims, w1, b1, w2, b2, w3, b3,
                             embed_dim=D)
    out = jax.block_until_ready(out)

    ref = pure_jax_reference(x, table, offsets, w1, b1, w2, b2, w3, b3)
    assert out.shape == (B,)
    # Tolerance covers the bf16 MXU-operand casts (folded table / W1 / W2) vs. the
    # all-f32 reference; outputs are sigmoid-bounded so absolute tolerance is meaningful.
    max_err = float(jnp.max(jnp.abs(out - ref)))
    assert jnp.allclose(out, ref, atol=2e-2, rtol=2e-2), max_err

    print("KERNEL_OK")
</pallas_src>

<mosaic_0001>
module attributes {stable_mosaic.version = 11 : i64} {
  func.func @pnn_kernel(%arg0: i32, %arg1: memref<504x4xi32, #tpu.memory_space<vmem>>, %arg2: memref<128x256xbf16, #tpu.memory_space<vmem>>, %arg3: memref<128x128xbf16, #tpu.memory_space<vmem>>, %arg4: memref<1x128xf32, #tpu.memory_space<vmem>>, %arg5: memref<128x128xbf16, #tpu.memory_space<vmem>>, %arg6: memref<1x128xf32, #tpu.memory_space<vmem>>, %arg7: memref<1x128xf32, #tpu.memory_space<vmem>>, %arg8: memref<1x1xf32, #tpu.memory_space<vmem>>, %arg9: memref<504x1xf32, #tpu.memory_space<vmem>>) attributes {dimension_semantics = [#tpu.dimension_semantics<parallel>], iteration_bounds = array<i64: 2>, scalar_prefetch = 0 : i64, scratch_operands = 0 : i64, tpu.core_type = #tpu.core_type<tc>, window_params = [{transform_indices = @transform_0, window_bounds = array<i64: 504, 4>}, {pipeline_mode = #tpu.pipeline_mode<synchronous>, transform_indices = @transform_1, window_bounds = array<i64: 128, 256>}, {pipeline_mode = #tpu.pipeline_mode<synchronous>, transform_indices = @transform_2, window_bounds = array<i64: 128, 128>}, {pipeline_mode = #tpu.pipeline_mode<synchronous>, transform_indices = @transform_3, window_bounds = array<i64: 1, 128>}, {pipeline_mode = #tpu.pipeline_mode<synchronous>, transform_indices = @transform_4, window_bounds = array<i64: 128, 128>}, {pipeline_mode = #tpu.pipeline_mode<synchronous>, transform_indices = @transform_5, window_bounds = array<i64: 1, 128>}, {pipeline_mode = #tpu.pipeline_mode<synchronous>, transform_indices = @transform_6, window_bounds = array<i64: 1, 128>}, {pipeline_mode = #tpu.pipeline_mode<synchronous>, transform_indices = @transform_7, window_bounds = array<i64: 1, 1>}, {transform_indices = @transform_8, window_bounds = array<i64: 504, 1>}]} {
    %c0 = arith.constant 0 : index
    %c0_0 = arith.constant 0 : index
    %0 = vector.load %arg1[%c0, %c0_0] : memref<504x4xi32, #tpu.memory_space<vmem>>, vector<504x4xi32>
    %1 = tpu.iota {dimensions = array<i32: 1>} : vector<504x128xi32>
    %2 = vector.extract_strided_slice %0 {offsets = [0, 0], sizes = [504, 1], strides = [1, 1]} : vector<504x4xi32> to vector<504x1xi32>
    %3 = vector.broadcast %2 : vector<504x1xi32> to vector<504x128xi32>
    %4 = arith.cmpi eq, %3, %1 : vector<504x128xi32>
    %5 = arith.extui %4 : vector<504x128xi1> to vector<504x128xi32>
    %6 = arith.sitofp %5 : vector<504x128xi32> to vector<504x128xf32>
    %7 = vector.extract_strided_slice %0 {offsets = [0, 1], sizes = [504, 1], strides = [1, 1]} : vector<504x4xi32> to vector<504x1xi32>
    %8 = vector.broadcast %7 : vector<504x1xi32> to vector<504x128xi32>
    %9 = arith.cmpi eq, %8, %1 : vector<504x128xi32>
    %10 = arith.extui %9 : vector<504x128xi1> to vector<504x128xi32>
    %11 = arith.sitofp %10 : vector<504x128xi32> to vector<504x128xf32>
    %12 = arith.addf %6, %11 : vector<504x128xf32>
    %13 = vector.extract_strided_slice %0 {offsets = [0, 2], sizes = [504, 1], strides = [1, 1]} : vector<504x4xi32> to vector<504x1xi32>
    %14 = vector.broadcast %13 : vector<504x1xi32> to vector<504x128xi32>
    %15 = arith.cmpi eq, %14, %1 : vector<504x128xi32>
    %16 = arith.extui %15 : vector<504x128xi1> to vector<504x128xi32>
    %17 = arith.sitofp %16 : vector<504x128xi32> to vector<504x128xf32>
    %18 = arith.addf %12, %17 : vector<504x128xf32>
    %19 = vector.extract_strided_slice %0 {offsets = [0, 3], sizes = [504, 1], strides = [1, 1]} : vector<504x4xi32> to vector<504x1xi32>
    %20 = vector.broadcast %19 : vector<504x1xi32> to vector<504x128xi32>
    %21 = arith.cmpi eq, %20, %1 : vector<504x128xi32>
    %22 = arith.extui %21 : vector<504x128xi1> to vector<504x128xi32>
    %23 = arith.sitofp %22 : vector<504x128xi32> to vector<504x128xf32>
    %24 = arith.addf %18, %23 : vector<504x128xf32>
    %25 = arith.truncf %24 : vector<504x128xf32> to vector<504x128xbf16>
    %c0_1 = arith.constant 0 : index
    %c0_2 = arith.constant 0 : index
    %26 = vector.load %arg2[%c0_1, %c0_2] : memref<128x256xbf16, #tpu.memory_space<vmem>>, vector<128x256xbf16>
    %cst = arith.constant dense<0.000000e+00> : vector<504x256xf32>
    %27 = tpu.matmul %25, %26, %cst {dimension_numbers = #tpu.dot_dimension_numbers<[1], [0], [0], [1], [0, 0, 1, 1], [], []>} : vector<504x128xbf16>, vector<128x256xbf16>, vector<504x256xf32> -> vector<504x256xf32>
    %28 = vector.extract_strided_slice %27 {offsets = [0, 0], sizes = [504, 128], strides = [1, 1]} : vector<504x256xf32> to vector<504x128xf32>
    %29 = vector.extract_strided_slice %27 {offsets = [0, 128], sizes = [504, 128], strides = [1, 1]} : vector<504x256xf32> to vector<504x128xf32>
    %c64_i32 = arith.constant 64 : i32
    %30 = tpu.dynamic_rotate %28 by %c64_i32 dim 1 : vector<504x128xf32>, i32 -> vector<504x128xf32>
    %31 = arith.mulf %28, %30 : vector<504x128xf32>
    %32 = arith.truncf %31 : vector<504x128xf32> to vector<504x128xbf16>
    %c0_3 = arith.constant 0 : index
    %c0_4 = arith.constant 0 : index
    %33 = vector.load %arg3[%c0_3, %c0_4] : memref<128x128xbf16, #tpu.memory_space<vmem>>, vector<128x128xbf16>
    %cst_5 = arith.constant dense<0.000000e+00> : vector<504x128xf32>
    %34 = tpu.matmul %32, %33, %cst_5 {dimension_numbers = #tpu.dot_dimension_numbers<[1], [0], [0], [1], [0, 0, 1, 1], [], []>} : vector<504x128xbf16>, vector<128x128xbf16>, vector<504x128xf32> -> vector<504x128xf32>
    %35 = arith.addf %34, %29 : vector<504x128xf32>
    %c0_6 = arith.constant 0 : index
    %c0_7 = arith.constant 0 : index
    %36 = vector.load %arg4[%c0_6, %c0_7] : memref<1x128xf32, #tpu.memory_space<vmem>>, vector<1x128xf32>
    %37 = vector.broadcast %36 : vector<1x128xf32> to vector<504x128xf32>
    %38 = arith.addf %35, %37 : vector<504x128xf32>
    %cst_8 = arith.constant 0.000000e+00 : f32
    %39 = vector.broadcast %cst_8 : f32 to vector<504x128xf32>
    %40 = arith.maximumf %38, %39 : vector<504x128xf32>
    %41 = arith.truncf %40 : vector<504x128xf32> to vector<504x128xbf16>
    %c0_9 = arith.constant 0 : index
    %c0_10 = arith.constant 0 : index
    %42 = vector.load %arg5[%c0_9, %c0_10] : memref<128x128xbf16, #tpu.memory_space<vmem>>, vector<128x128xbf16>
    %cst_11 = arith.constant dense<0.000000e+00> : vector<504x128xf32>
    %43 = tpu.matmul %41, %42, %cst_11 {dimension_numbers = #tpu.dot_dimension_numbers<[1], [0], [0], [1], [0, 0, 1, 1], [], []>} : vector<504x128xbf16>, vector<128x128xbf16>, vector<504x128xf32> -> vector<504x128xf32>
    %c0_12 = arith.constant 0 : index
    %c0_13 = arith.constant 0 : index
    %44 = vector.load %arg6[%c0_12, %c0_13] : memref<1x128xf32, #tpu.memory_space<vmem>>, vector<1x128xf32>
    %45 = vector.broadcast %44 : vector<1x128xf32> to vector<504x128xf32>
    %46 = arith.addf %43, %45 : vector<504x128xf32>
    %cst_14 = arith.constant 0.000000e+00 : f32
    %47 = vector.broadcast %cst_14 : f32 to vector<504x128xf32>
    %48 = arith.maximumf %46, %47 : vector<504x128xf32>
    %c0_15 = arith.constant 0 : index
    %c0_16 = arith.constant 0 : index
    %49 = vector.load %arg7[%c0_15, %c0_16] : memref<1x128xf32, #tpu.memory_space<vmem>>, vector<1x128xf32>
    %50 = vector.broadcast %49 : vector<1x128xf32> to vector<504x128xf32>
    %51 = arith.mulf %48, %50 : vector<504x128xf32>
    %cst_17 = arith.constant dense<0.000000e+00> : vector<504xf32>
    %52 = vector.multi_reduction <add>, %51, %cst_17 [1] : vector<504x128xf32> to vector<504xf32>
    %53 = vector.shape_cast %52 : vector<504xf32> to vector<504x1xf32>
    %c0_18 = arith.constant 0 : index
    %c0_19 = arith.constant 0 : index
    %54 = vector.load %arg8[%c0_18, %c0_19] : memref<1x1xf32, #tpu.memory_space<vmem>>, vector<1x1xf32>
    %55 = vector.broadcast %54 : vector<1x1xf32> to vector<504x1xf32>
    %56 = arith.addf %53, %55 : vector<504x1xf32>
    %57 = arith.negf %56 : vector<504x1xf32>
    %58 = math.exp %57 : vector<504x1xf32>
    %cst_20 = arith.constant 1.000000e+00 : f32
    %59 = vector.broadcast %cst_20 : f32 to vector<504x1xf32>
    %60 = arith.addf %59, %58 : vector<504x1xf32>
    %61 = arith.divf %59, %60 : vector<504x1xf32>
    %c0_21 = arith.constant 0 : index
    %c0_22 = arith.constant 0 : index
    %62 = vector.load %arg9[%c0_21, %c0_22] : memref<504x1xf32, #tpu.memory_space<vmem>>, vector<504x1xf32>
    tpu.vector_store %arg9[%c0_21, %c0_22], %61 {strides = array<i32>} : memref<504x1xf32, #tpu.memory_space<vmem>>, vector<504x1xf32>,
    return
  }
  func.func @transform_0(%arg0: i32) -> (i32, i32) {
    %c0_i32 = arith.constant 0 : i32
    %c0_i32_0 = arith.constant 0 : i32
    return %arg0, %c0_i32 : i32, i32
  }
  func.func @transform_1(%arg0: i32) -> (i32, i32) {
    %c0_i32 = arith.constant 0 : i32
    %c0_i32_0 = arith.constant 0 : i32
    %c0_i32_1 = arith.constant 0 : i32
    return %c0_i32, %c0_i32_0 : i32, i32
  }
  func.func @transform_2(%arg0: i32) -> (i32, i32) {
    %c0_i32 = arith.constant 0 : i32
    %c0_i32_0 = arith.constant 0 : i32
    %c0_i32_1 = arith.constant 0 : i32
    return %c0_i32, %c0_i32_0 : i32, i32
  }
  func.func @transform_3(%arg0: i32) -> (i32, i32) {
    %c0_i32 = arith.constant 0 : i32
    %c0_i32_0 = arith.constant 0 : i32
    %c0_i32_1 = arith.constant 0 : i32
    return %c0_i32, %c0_i32_0 : i32, i32
  }
  func.func @transform_4(%arg0: i32) -> (i32, i32) {
    %c0_i32 = arith.constant 0 : i32
    %c0_i32_0 = arith.constant 0 : i32
    %c0_i32_1 = arith.constant 0 : i32
    return %c0_i32, %c0_i32_0 : i32, i32
  }
  func.func @transform_5(%arg0: i32) -> (i32, i32) {
    %c0_i32 = arith.constant 0 : i32
    %c0_i32_0 = arith.constant 0 : i32
    %c0_i32_1 = arith.constant 0 : i32
    return %c0_i32, %c0_i32_0 : i32, i32
  }
  func.func @transform_6(%arg0: i32) -> (i32, i32) {
    %c0_i32 = arith.constant 0 : i32
    %c0_i32_0 = arith.constant 0 : i32
    %c0_i32_1 = arith.constant 0 : i32
    return %c0_i32, %c0_i32_0 : i32, i32
  }
  func.func @transform_7(%arg0: i32) -> (i32, i32) {
    %c0_i32 = arith.constant 0 : i32
    %c0_i32_0 = arith.constant 0 : i32
    %c0_i32_1 = arith.constant 0 : i32
    return %c0_i32, %c0_i32_0 : i32, i32
  }
  func.func @transform_8(%arg0: i32) -> (i32, i32) {
    %c0_i32 = arith.constant 0 : i32
    %c0_i32_0 = arith.constant 0 : i32
    return %arg0, %c0_i32 : i32, i32
  }
}

</mosaic_0001>

<llo_original>
// kernel: tpu_custom_call.1
$region0: #{tpu_custom_call.1}
  #allocation0 [shape = 'u32[]', space=smem, size = 0x4, offset = 0x4, fixed_abs, tag = 'smem constant byte address 0x4 - core index']
  #allocation1 [shape = 'u32[144,128]{1,0:T(1,128)}', space=vmem, size = 0x12000, scoped, tag = 'internal scratch']
  #allocation2 [shape = 'f32[1,1]{1,0:T(1,128)S(1)}', space=vmem, size = 0x200, scoped, tag = 'scoped memory for tpu_custom_call.1']
  %s0 = inlined_call_operand.vmem [shape: s32[1008,4], index: 0, kind: input, shape index: {}]
  %s1 = inlined_call_operand.vmem [shape: bf16[128,256], index: 1, kind: input, shape index: {}]
  %s2 = inlined_call_operand.vmem [shape: bf16[128,128], index: 2, kind: input, shape index: {}]
  %s3 = inlined_call_operand.vmem [shape: f32[1,128], index: 3, kind: input, shape index: {}]
  %s4 = inlined_call_operand.vmem [shape: bf16[128,128], index: 4, kind: input, shape index: {}]
  %s5 = inlined_call_operand.vmem [shape: f32[1,128], index: 5, kind: input, shape index: {}]
  %s6 = inlined_call_operand.vmem [shape: f32[1,128], index: 6, kind: input, shape index: {}]
  %s7 = inlined_call_operand.<no memory space> [shape: f32[1,1], index: 7, kind: input, shape index: {}]
  %s8 = inlined_call_operand.vmem [shape: f32[1008,1], index: 8, kind: output, shape index: {}]
  %s9 = sld [smem:[#allocation0]]
  $region65: #{tpu_custom_call.1} parent=0
    _
  %s11 = ssub.s32 1, %s9
  %s12 = scalar_select 0, %s11, %s9
  %v13 = vstv %s7
  %14 = vst [vmem:[#allocation2] sm:$0x1] %v13
  loop: start=0, step=1, limit=4
  $region2: #{tpu_custom_call.1} parent=0 // loop_pre_header
    _
  $region3: #{tpu_custom_call.1} parent=0 // loop_header
    %s16 = sphi 0, %s20
    %p17 = scmp.ge.s32.totalorder %s16, 4
    %s26 = sphi 0, %s28
    %s29 = sphi 0, %s26
    %s30 = sphi 0, %s29
    %s46 = sphi 0, %s30
    %s50 = sphi 0, %s50
    %s52 = sphi 0, %s50
    %s53 = sphi 0, %s52
    %s67 = sphi 0, %s53
    %s71 = sphi 0, %s71
    %s73 = sphi 0, %s71
    %s74 = sphi 0, %s73
    %s88 = sphi 0, %s74
    %s92 = sphi 0, %s92
    %s94 = sphi 0, %s92
    %s95 = sphi 0, %s94
    %s109 = sphi 0, %s95
    %s113 = sphi 0, %s113
    %s115 = sphi 0, %s113
    %s116 = sphi 0, %s115
    %s130 = sphi 0, %s116
    %s134 = sphi 0, %s134
    %s136 = sphi 0, %s134
    %s137 = sphi 0, %s136
    %s151 = sphi 0, %s137
    %s155 = sphi 0, %s155
    %s157 = sphi 0, %s155
    %s158 = sphi 0, %s157
    %s172 = sphi 0, %s158
    %s176 = sphi 0, %s176
    %s178 = sphi 0, %s176
    %s179 = sphi 0, %s178
    %s193 = sphi 0, %s179
    %s199 = sphi 0, %s201
    %s202 = sphi 0, %s199
    %s203 = sphi 0, %s202
    %s219 = sphi 0, %s203
  $region4: #{tpu_custom_call.1} parent=0 // loop_header_branch
    %19 = sbr.rel (%p17) target = $region8
  $region5: #{tpu_custom_call.1} parent=0 // loop_body
    %s21 = ssub.s32 %s16, 1
    %s22 = ssub.s32 %s16, 2
    %s23 = sadd.s32 %s16, 1
    %s24 = ssub.s32 %s16, %s23
    %p25 = scmp.eq.s32.totalorder %s24, 0
    %s27 = sadd.s32 %s26, 1
    %s28 = scalar_select %p25, %s26, %s27
    %p31 = pneg %p25
    %p32 = scmp.eq.s32.totalorder %s16, 1
    %p33 = por %p31, %p32
    %p34 = scmp.ne.s32.totalorder %s26, %s29
    %p35 = scmp.eq.s32.totalorder %s16, 0
    %p36 = por %p34, %p35
    %p37 = scmp.ne.s32.totalorder %s26, %s29
    %p38 = scmp.eq.s32.totalorder %s21, 1
    %p39 = por %p37, %p38
    %p40 = scmp.ne.s32.totalorder %s29, %s30
    %p41 = scmp.eq.s32.totalorder %s21, 0
    %p42 = por %p40, %p41
    %p43 = scmp.ne.s32.totalorder %s29, %s30
    %p44 = scmp.eq.s32.totalorder %s22, 1
    %p45 = por %p43, %p44
    %p47 = scmp.ne.s32.totalorder %s30, %s46
    %p48 = scmp.eq.s32.totalorder %s22, 0
    %p49 = por %p47, %p48
    %s51 = sadd.s32 %s50, 1
    %p54 = scmp.eq.s32.totalorder %s16, 1
    %p55 = scmp.ne.s32.totalorder %s50, %s52
    %p56 = scmp.eq.s32.totalorder %s16, 0
    %p57 = por %p55, %p56
    %p58 = scmp.ne.s32.totalorder %s50, %s52
    %p59 = scmp.eq.s32.totalorder %s21, 1
    %p60 = por %p58, %p59
    %p61 = scmp.ne.s32.totalorder %s52, %s53
    %p62 = scmp.eq.s32.totalorder %s21, 0
    %p63 = por %p61, %p62
    %p64 = scmp.ne.s32.totalorder %s52, %s53
    %p65 = scmp.eq.s32.totalorder %s22, 1
    %p66 = por %p64, %p65
    %p68 = scmp.ne.s32.totalorder %s53, %s67
    %p69 = scmp.eq.s32.totalorder %s22, 0
    %p70 = por %p68, %p69
    %s72 = sadd.s32 %s71, 1
    %p75 = scmp.eq.s32.totalorder %s16, 1
    %p76 = scmp.ne.s32.totalorder %s71, %s73
    %p77 = scmp.eq.s32.totalorder %s16, 0
    %p78 = por %p76, %p77
    %p79 = scmp.ne.s32.totalorder %s71, %s73
    %p80 = scmp.eq.s32.totalorder %s21, 1
    %p81 = por %p79, %p80
    %p82 = scmp.ne.s32.totalorder %s73, %s74
    %p83 = scmp.eq.s32.totalorder %s21, 0
    %p84 = por %p82, %p83
    %p85 = scmp.ne.s32.totalorder %s73, %s74
    %p86 = scmp.eq.s32.totalorder %s22, 1
    %p87 = por %p85, %p86
    %p89 = scmp.ne.s32.totalorder %s74, %s88
    %p90 = scmp.eq.s32.totalorder %s22, 0
    %p91 = por %p89, %p90
    %s93 = sadd.s32 %s92, 1
    %p96 = scmp.eq.s32.totalorder %s16, 1
    %p97 = scmp.ne.s32.totalorder %s92, %s94
    %p98 = scmp.eq.s32.totalorder %s16, 0
    %p99 = por %p97, %p98
    %p100 = scmp.ne.s32.totalorder %s92, %s94
    %p101 = scmp.eq.s32.totalorder %s21, 1
    %p102 = por %p100, %p101
    %p103 = scmp.ne.s32.totalorder %s94, %s95
    %p104 = scmp.eq.s32.totalorder %s21, 0
    %p105 = por %p103, %p104
    %p106 = scmp.ne.s32.totalorder %s94, %s95
    %p107 = scmp.eq.s32.totalorder %s22, 1
    %p108 = por %p106, %p107
    %p110 = scmp.ne.s32.totalorder %s95, %s109
    %p111 = scmp.eq.s32.totalorder %s22, 0
    %p112 = por %p110, %p111
    %s114 = sadd.s32 %s113, 1
    %p117 = scmp.eq.s32.totalorder %s16, 1
    %p118 = scmp.ne.s32.totalorder %s113, %s115
    %p119 = scmp.eq.s32.totalorder %s16, 0
    %p120 = por %p118, %p119
    %p121 = scmp.ne.s32.totalorder %s113, %s115
    %p122 = scmp.eq.s32.totalorder %s21, 1
    %p123 = por %p121, %p122
    %p124 = scmp.ne.s32.totalorder %s115, %s116
    %p125 = scmp.eq.s32.totalorder %s21, 0
    %p126 = por %p124, %p125
    %p127 = scmp.ne.s32.totalorder %s115, %s116
    %p128 = scmp.eq.s32.totalorder %s22, 1
    %p129 = por %p127, %p128
    %p131 = scmp.ne.s32.totalorder %s116, %s130
    %p132 = scmp.eq.s32.totalorder %s22, 0
    %p133 = por %p131, %p132
    %s135 = sadd.s32 %s134, 1
    %p138 = scmp.eq.s32.totalorder %s16, 1
    %p139 = scmp.ne.s32.totalorder %s134, %s136
    %p140 = scmp.eq.s32.totalorder %s16, 0
    %p141 = por %p139, %p140
    %p142 = scmp.ne.s32.totalorder %s134, %s136
    %p143 = scmp.eq.s32.totalorder %s21, 1
    %p144 = por %p142, %p143
    %p145 = scmp.ne.s32.totalorder %s136, %s137
    %p146 = scmp.eq.s32.totalorder %s21, 0
    %p147 = por %p145, %p146
    %p148 = scmp.ne.s32.totalorder %s136, %s137
    %p149 = scmp.eq.s32.totalorder %s22, 1
    %p150 = por %p148, %p149
    %p152 = scmp.ne.s32.totalorder %s137, %s151
    %p153 = scmp.eq.s32.totalorder %s22, 0
    %p154 = por %p152, %p153
    %s156 = sadd.s32 %s155, 1
    %p159 = scmp.eq.s32.totalorder %s16, 1
    %p160 = scmp.ne.s32.totalorder %s155, %s157
    %p161 = scmp.eq.s32.totalorder %s16, 0
    %p162 = por %p160, %p161
    %p163 = scmp.ne.s32.totalorder %s155, %s157
    %p164 = scmp.eq.s32.totalorder %s21, 1
    %p165 = por %p163, %p164
    %p166 = scmp.ne.s32.totalorder %s157, %s158
    %p167 = scmp.eq.s32.totalorder %s21, 0
    %p168 = por %p166, %p167
    %p169 = scmp.ne.s32.totalorder %s157, %s158
    %p170 = scmp.eq.s32.totalorder %s22, 1
    %p171 = por %p169, %p170
    %p173 = scmp.ne.s32.totalorder %s158, %s172
    %p174 = scmp.eq.s32.totalorder %s22, 0
    %p175 = por %p173, %p174
    %s177 = sadd.s32 %s176, 1
    %p180 = scmp.eq.s32.totalorder %s16, 1
    %p181 = scmp.ne.s32.totalorder %s176, %s178
    %p182 = scmp.eq.s32.totalorder %s16, 0
    %p183 = por %p181, %p182
    %p184 = scmp.ne.s32.totalorder %s176, %s178
    %p185 = scmp.eq.s32.totalorder %s21, 1
    %p186 = por %p184, %p185
    %p187 = scmp.ne.s32.totalorder %s178, %s179
    %p188 = scmp.eq.s32.totalorder %s21, 0
    %p189 = por %p187, %p188
    %p190 = scmp.ne.s32.totalorder %s178, %s179
    %p191 = scmp.eq.s32.totalorder %s22, 1
    %p192 = por %p190, %p191
    %p194 = scmp.ne.s32.totalorder %s179, %s193
    %p195 = scmp.eq.s32.totalorder %s22, 0
    %p196 = por %p194, %p195
    %s197 = ssub.s32 %s16, %s23
    %p198 = scmp.eq.s32.totalorder %s197, 0
    %s200 = sadd.s32 %s199, 1
    %s201 = scalar_select %p198, %s199, %s200
    %p204 = pneg %p198
    %p205 = scmp.eq.s32.totalorder %s16, 1
    %p206 = por %p204, %p205
    %p207 = scmp.ne.s32.totalorder %s199, %s202
    %p208 = scmp.eq.s32.totalorder %s16, 0
    %p209 = por %p207, %p208
    %p210 = scmp.ne.s32.totalorder %s199, %s202
    %p211 = scmp.eq.s32.totalorder %s21, 1
    %p212 = por %p210, %p211
    %p213 = scmp.ne.s32.totalorder %s202, %s203
    %p214 = scmp.eq.s32.totalorder %s21, 0
    %p215 = por %p213, %p214
    %p216 = scmp.ne.s32.totalorder %s202, %s203
    %p217 = scmp.eq.s32.totalorder %s22, 1
    %p218 = por %p216, %p217
    %p220 = scmp.ne.s32.totalorder %s203, %s219
    %p221 = scmp.eq.s32.totalorder %s22, 0
    %p222 = por %p220, %p221
    %p223 = scmp.le.s32.totalorder 1, %s16
    %p224 = scmp.lt.s32.totalorder %s16, 3
    %p225 = pnand %p223, %p224
    %p226 = pneg %p225
    // Predicated region
    $region9: #{tpu_custom_call.1} parent=5 // pred_check
      _
    $region10: #{tpu_custom_call.1} parent=5 // pred_check_branch
      %228 = sbr.rel (%p225) target = $region12
    $region11: #{tpu_custom_call.1} parent=5 // pred_region
      %s229 = ssub.s32 %s16, 1
      // Predicated region
      $region13: #{tpu_custom_call.1} parent=11 // pred_check
        %p230 = pneg %p63
      $region14: #{tpu_custom_call.1} parent=11 // pred_check_branch
        %232 = sbr.rel (%p230) target = $region16
      $region15: #{tpu_custom_call.1} parent=11 // pred_region
        _
      $region16: #{tpu_custom_call.1} parent=11 // pred_fallthru
        _
      // Predicated region
      $region17: #{tpu_custom_call.1} parent=11 // pred_check
        %p233 = pneg %p84
      $region18: #{tpu_custom_call.1} parent=11 // pred_check_branch
        %235 = sbr.rel (%p233) target = $region20
      $region19: #{tpu_custom_call.1} parent=11 // pred_region
        _
      $region20: #{tpu_custom_call.1} parent=11 // pred_fallthru
        _
      // Predicated region
      $region21: #{tpu_custom_call.1} parent=11 // pred_check
        %p236 = pneg %p105
      $region22: #{tpu_custom_call.1} parent=11 // pred_check_branch
        %238 = sbr.rel (%p236) target = $region24
      $region23: #{tpu_custom_call.1} parent=11 // pred_region
        _
      $region24: #{tpu_custom_call.1} parent=11 // pred_fallthru
        _
      // Predicated region
      $region25: #{tpu_custom_call.1} parent=11 // pred_check
        %p239 = pneg %p126
      $region26: #{tpu_custom_call.1} parent=11 // pred_check_branch
        %241 = sbr.rel (%p239) target = $region28
      $region27: #{tpu_custom_call.1} parent=11 // pred_region
        _
      $region28: #{tpu_custom_call.1} parent=11 // pred_fallthru
        _
      // Predicated region
      $region29: #{tpu_custom_call.1} parent=11 // pred_check
        %p242 = pneg %p147
      $region30: #{tpu_custom_call.1} parent=11 // pred_check_branch
        %244 = sbr.rel (%p242) target = $region32
      $region31: #{tpu_custom_call.1} parent=11 // pred_region
        _
      $region32: #{tpu_custom_call.1} parent=11 // pred_fallthru
        _
      // Predicated region
      $region33: #{tpu_custom_call.1} parent=11 // pred_check
        %p245 = pneg %p168
      $region34: #{tpu_custom_call.1} parent=11 // pred_check_branch
        %247 = sbr.rel (%p245) target = $region36
      $region35: #{tpu_custom_call.1} parent=11 // pred_region
        _
      $region36: #{tpu_custom_call.1} parent=11 // pred_fallthru
        _
      // Predicated region
      $region37: #{tpu_custom_call.1} parent=11 // pred_check
        %p248 = pneg %p189
      $region38: #{tpu_custom_call.1} parent=11 // pred_check_branch
        %250 = sbr.rel (%p248) target = $region40
      $region39: #{tpu_custom_call.1} parent=11 // pred_region
        _
      $region40: #{tpu_custom_call.1} parent=11 // pred_fallthru
        _
    $region12: #{tpu_custom_call.1} parent=5 // pred_fallthru
      _
    %p251 = scmp.lt.s32.totalorder %s16, 2
    // Predicated region
    $region41: #{tpu_custom_call.1} parent=5 // pred_check
      %p252 = pneg %p251
    $region42: #{tpu_custom_call.1} parent=5 // pred_check_branch
      %254 = sbr.rel (%p252) target = $region44
    $region43: #{tpu_custom_call.1} parent=5 // pred_region
      // Predicated region
      $region45: #{tpu_custom_call.1} parent=43 // pred_check
        %p255 = pneg %p36
      $region46: #{tpu_custom_call.1} parent=43 // pred_check_branch
        %257 = sbr.rel (%p255) target = $region48
      $region47: #{tpu_custom_call.1} parent=43 // pred_region
        %s258 = smul.u32 63, %s16
        %p259 = scmp.lt.s32.totalorder %s258, 125
        %s260 = scalar_select %p259, %s258, 125
        %s261 = smul.addr %s260, 8
        %s262 = scalar_lea.vmem %s0, %s261
        %s263 = smul.u32 63, %s16
      $region48: #{tpu_custom_call.1} parent=43 // pred_fallthru
        _
    $region44: #{tpu_custom_call.1} parent=5 // pred_fallthru
      _
    %p264 = scmp.le.s32.totalorder 1, %s16
    %p265 = scmp.lt.s32.totalorder %s16, 3
    %p266 = pnand %p264, %p265
    %p267 = pneg %p266
    // Predicated region
    $region49: #{tpu_custom_call.1} parent=5 // pred_check
      _
    $region50: #{tpu_custom_call.1} parent=5 // pred_check_branch
      %269 = sbr.rel (%p266) target = $region52
    $region51: #{tpu_custom_call.1} parent=5 // pred_region
      %s270 = ssub.s32 %s16, 1
      %s271 = smul.u32 63, %s21
      %p272 = scmp.lt.s32.totalorder %s271, 125
      %s273 = scalar_select %p272, %s271, 125
      %s274 = smul.addr %s273, 8
      %s275 = scalar_lea.vmem %s0, %s274
      %p276 = pneg %p42
      %p277 = pneg %p39
      %p278 = pneg %p63
      %p279 = pneg %p60
      %p280 = pneg %p84
      %p281 = pneg %p81
      %p282 = pneg %p105
      %p283 = pneg %p102
      %p284 = pneg %p126
      %p285 = pneg %p123
      %p286 = pneg %p147
      %p287 = pneg %p144
      %p288 = pneg %p168
      %p289 = pneg %p165
      %p290 = pneg %p189
      %p291 = pneg %p186
      %p292 = pneg %p215
      %p293 = pneg %p212
      %s294 = smul.u32 63, %s21
      %p295 = scmp.lt.s32.totalorder %s294, 125
      %s296 = scalar_select %p295, %s294, 125
      %s297 = smul.addr %s296, 8
      %s298 = scalar_lea.vmem %s8, %s297
      %s299 = smul.u32 63, %s21
      %p300 = scmp.lt.s32.totalorder %s299, 125
      %s301 = scalar_select %p300, %s299, 125
      %s302 = smul.addr %s301, 8
      %s303 = scalar_lea.vmem %s0, %s302
      %s304 = smul.u32 63, %s21
      %s305 = smul.u32 63, %s21
      %p306 = scmp.lt.s32.totalorder %s305, 125
      %s307 = scalar_select %p306, %s305, 125
      %s308 = smul.addr %s307, 8
      %s309 = scalar_lea.vmem %s8, %s308
      %s310 = smul.u32 63, %s21
      %v312 = vld [vmem:[%s303] sm:$0xff]
      %v313 = vld [vmem:[%s303 + $0x8] sm:$0xff]
      %v314 = vld [vmem:[%s303 + $0x10] sm:$0xff]
      %v315 = vld [vmem:[%s303 + $0x18] sm:$0xff]
      %v316 = vld [vmem:[%s303 + $0x20] sm:$0xff]
      %v317 = vld [vmem:[%s303 + $0x28] sm:$0xff]
      %v318 = vld [vmem:[%s303 + $0x30] sm:$0xff]
      %v319 = vld [vmem:[%s303 + $0x38] sm:$0xff]
      %v320 = vld [vmem:[%s303 + $0x40] sm:$0xff]
      %v321 = vld [vmem:[%s303 + $0x48] sm:$0xff]
      %v322 = vld [vmem:[%s303 + $0x50] sm:$0xff]
      %v323 = vld [vmem:[%s303 + $0x58] sm:$0xff]
      %v324 = vld [vmem:[%s303 + $0x60] sm:$0xff]
      %v325 = vld [vmem:[%s303 + $0x68] sm:$0xff]
      %v326 = vld [vmem:[%s303 + $0x70] sm:$0xff]
      %v327 = vld [vmem:[%s303 + $0x78] sm:$0xff]
      %v328 = vld [vmem:[%s303 + $0x80] sm:$0xff]
      %v329 = vld [vmem:[%s303 + $0x88] sm:$0xff]
      %v330 = vld [vmem:[%s303 + $0x90] sm:$0xff]
      %v331 = vld [vmem:[%s303 + $0x98] sm:$0xff]
      %v332 = vld [vmem:[%s303 + $0xa0] sm:$0xff]
      %v333 = vld [vmem:[%s303 + $0xa8] sm:$0xff]
      %v334 = vld [vmem:[%s303 + $0xb0] sm:$0xff]
      %v335 = vld [vmem:[%s303 + $0xb8] sm:$0xff]
      %v336 = vld [vmem:[%s303 + $0xc0] sm:$0xff]
      %v337 = vld [vmem:[%s303 + $0xc8] sm:$0xff]
      %v338 = vld [vmem:[%s303 + $0xd0] sm:$0xff]
      %v339 = vld [vmem:[%s303 + $0xd8] sm:$0xff]
      %v340 = vld [vmem:[%s303 + $0xe0] sm:$0xff]
      %v341 = vld [vmem:[%s303 + $0xe8] sm:$0xff]
      %v342 = vld [vmem:[%s303 + $0xf0] sm:$0xff]
      %v343 = vld [vmem:[%s303 + $0xf8] sm:$0xff]
      %v344 = vld [vmem:[%s303 + $0x100] sm:$0xff]
      %v345 = vld [vmem:[%s303 + $0x108] sm:$0xff]
      %v346 = vld [vmem:[%s303 + $0x110] sm:$0xff]
      %v347 = vld [vmem:[%s303 + $0x118] sm:$0xff]
      %v348 = vld [vmem:[%s303 + $0x120] sm:$0xff]
      %v349 = vld [vmem:[%s303 + $0x128] sm:$0xff]
      %v350 = vld [vmem:[%s303 + $0x130] sm:$0xff]
      %v351 = vld [vmem:[%s303 + $0x138] sm:$0xff]
      %v352 = vld [vmem:[%s303 + $0x140] sm:$0xff]
      %v353 = vld [vmem:[%s303 + $0x148] sm:$0xff]
      %v354 = vld [vmem:[%s303 + $0x150] sm:$0xff]
      %v355 = vld [vmem:[%s303 + $0x158] sm:$0xff]
      %v356 = vld [vmem:[%s303 + $0x160] sm:$0xff]
      %v357 = vld [vmem:[%s303 + $0x168] sm:$0xff]
      %v358 = vld [vmem:[%s303 + $0x170] sm:$0xff]
      %v359 = vld [vmem:[%s303 + $0x178] sm:$0xff]
      %v360 = vld [vmem:[%s303 + $0x180] sm:$0xff]
      %v361 = vld [vmem:[%s303 + $0x188] sm:$0xff]
      %v362 = vld [vmem:[%s303 + $0x190] sm:$0xff]
      %v363 = vld [vmem:[%s303 + $0x198] sm:$0xff]
      %v364 = vld [vmem:[%s303 + $0x1a0] sm:$0xff]
      %v365 = vld [vmem:[%s303 + $0x1a8] sm:$0xff]
      %v366 = vld [vmem:[%s303 + $0x1b0] sm:$0xff]
      %v367 = vld [vmem:[%s303 + $0x1b8] sm:$0xff]
      %v368 = vld [vmem:[%s303 + $0x1c0] sm:$0xff]
      %v369 = vld [vmem:[%s303 + $0x1c8] sm:$0xff]
      %v370 = vld [vmem:[%s303 + $0x1d0] sm:$0xff]
      %v371 = vld [vmem:[%s303 + $0x1d8] sm:$0xff]
      %v372 = vld [vmem:[%s303 + $0x1e0] sm:$0xff]
      %v373 = vld [vmem:[%s303 + $0x1e8] sm:$0xff]
      %v374 = vld [vmem:[%s303 + $0x1f0] sm:$0xff]
      %v375 = vlaneseq
      %v376 = vand.u32 %v375, 127
      %377 = vset.pattern.permute.xlu0 0
      %378 = vperm.xlu0 %377, %v312
      %v379 = vpop.permute.xlu0 %378
      %380 = vset.pattern.permute.xlu0 0
      %381 = vperm.xlu0 %380, %v313
      %v382 = vpop.permute.xlu0 %381
      %383 = vset.pattern.permute.xlu0 0
      %384 = vperm.xlu0 %383, %v314
      %v385 = vpop.permute.xlu0 %384
      %386 = vset.pattern.permute.xlu0 0
      %387 = vperm.xlu0 %386, %v315
      %v388 = vpop.permute.xlu0 %387
      %389 = vset.pattern.permute.xlu0 0
      %390 = vperm.xlu0 %389, %v316
      %v391 = vpop.permute.xlu0 %390
      %392 = vset.pattern.permute.xlu0 0
      %393 = vperm.xlu0 %392, %v317
      %v394 = vpop.permute.xlu0 %393
      %395 = vset.pattern.permute.xlu0 0
      %396 = vperm.xlu0 %395, %v318
      %v397 = vpop.permute.xlu0 %396
      %398 = vset.pattern.permute.xlu0 0
      %399 = vperm.xlu0 %398, %v319
      %v400 = vpop.permute.xlu0 %399
      %401 = vset.pattern.permute.xlu0 0
      %402 = vperm.xlu0 %401, %v320
      %v403 = vpop.permute.xlu0 %402
      %404 = vset.pattern.permute.xlu0 0
      %405 = vperm.xlu0 %404, %v321
      %v406 = vpop.permute.xlu0 %405
      %407 = vset.pattern.permute.xlu0 0
      %408 = vperm.xlu0 %407, %v322
      %v409 = vpop.permute.xlu0 %408
      %410 = vset.pattern.permute.xlu0 0
      %411 = vperm.xlu0 %410, %v323
      %v412 = vpop.permute.xlu0 %411
      %413 = vset.pattern.permute.xlu0 0
      %414 = vperm.xlu0 %413, %v324
      %v415 = vpop.permute.xlu0 %414
      %416 = vset.pattern.permute.xlu0 0
      %417 = vperm.xlu0 %416, %v325
      %v418 = vpop.permute.xlu0 %417
      %419 = vset.pattern.permute.xlu0 0
      %420 = vperm.xlu0 %419, %v326
      %v421 = vpop.permute.xlu0 %420
      %422 = vset.pattern.permute.xlu0 0
      %423 = vperm.xlu0 %422, %v327
      %v424 = vpop.permute.xlu0 %423
      %425 = vset.pattern.permute.xlu0 0
      %426 = vperm.xlu0 %425, %v328
      %v427 = vpop.permute.xlu0 %426
      %428 = vset.pattern.permute.xlu0 0
      %429 = vperm.xlu0 %428, %v329
      %v430 = vpop.permute.xlu0 %429
      %431 = vset.pattern.permute.xlu0 0
      %432 = vperm.xlu0 %431, %v330
      %v433 = vpop.permute.xlu0 %432
      %434 = vset.pattern.permute.xlu0 0
      %435 = vperm.xlu0 %434, %v331
      %v436 = vpop.permute.xlu0 %435
      %437 = vset.pattern.permute.xlu0 0
      %438 = vperm.xlu0 %437, %v332
      %v439 = vpop.permute.xlu0 %438
      %440 = vset.pattern.permute.xlu0 0
      %441 = vperm.xlu0 %440, %v333
      %v442 = vpop.permute.xlu0 %441
      %443 = vset.pattern.permute.xlu0 0
      %444 = vperm.xlu0 %443, %v334
      %v445 = vpop.permute.xlu0 %444
      %446 = vset.pattern.permute.xlu0 0
      %447 = vperm.xlu0 %446, %v335
      %v448 = vpop.permute.xlu0 %447
      %449 = vset.pattern.permute.xlu0 0
      %450 = vperm.xlu0 %449, %v336
      %v451 = vpop.permute.xlu0 %450
      %452 = vset.pattern.permute.xlu0 0
      %453 = vperm.xlu0 %452, %v337
      %v454 = vpop.permute.xlu0 %453
      %455 = vset.pattern.permute.xlu0 0
      %456 = vperm.xlu0 %455, %v338
      %v457 = vpop.permute.xlu0 %456
      %458 = vset.pattern.permute.xlu0 0
      %459 = vperm.xlu0 %458, %v339
      %v460 = vpop.permute.xlu0 %459
      %461 = vset.pattern.permute.xlu0 0
      %462 = vperm.xlu0 %461, %v340
      %v463 = vpop.permute.xlu0 %462
      %464 = vset.pattern.permute.xlu0 0
      %465 = vperm.xlu0 %464, %v341
      %v466 = vpop.permute.xlu0 %465
      %467 = vset.pattern.permute.xlu0 0
      %468 = vperm.xlu0 %467, %v342
      %v469 = vpop.permute.xlu0 %468
      %470 = vset.pattern.permute.xlu0 0
      %471 = vperm.xlu0 %470, %v343
      %v472 = vpop.permute.xlu0 %471
      %473 = vset.pattern.permute.xlu0 0
      %474 = vperm.xlu0 %473, %v344
      %v475 = vpop.permute.xlu0 %474
      %476 = vset.pattern.permute.xlu0 0
      %477 = vperm.xlu0 %476, %v345
      %v478 = vpop.permute.xlu0 %477
      %479 = vset.pattern.permute.xlu0 0
      %480 = vperm.xlu0 %479, %v346
      %v481 = vpop.permute.xlu0 %480
      %482 = vset.pattern.permute.xlu0 0
      %483 = vperm.xlu0 %482, %v347
      %v484 = vpop.permute.xlu0 %483
      %485 = vset.pattern.permute.xlu0 0
      %486 = vperm.xlu0 %485, %v348
      %v487 = vpop.permute.xlu0 %486
      %488 = vset.pattern.permute.xlu0 0
      %489 = vperm.xlu0 %488, %v349
      %v490 = vpop.permute.xlu0 %489
      %491 = vset.pattern.permute.xlu0 0
      %492 = vperm.xlu0 %491, %v350
      %v493 = vpop.permute.xlu0 %492
      %494 = vset.pattern.permute.xlu0 0
      %495 = vperm.xlu0 %494, %v351
      %v496 = vpop.permute.xlu0 %495
      %497 = vset.pattern.permute.xlu0 0
      %498 = vperm.xlu0 %497, %v352
      %v499 = vpop.permute.xlu0 %498
      %500 = vset.pattern.permute.xlu0 0
      %501 = vperm.xlu0 %500, %v353
      %v502 = vpop.permute.xlu0 %501
      %503 = vset.pattern.permute.xlu0 0
      %504 = vperm.xlu0 %503, %v354
      %v505 = vpop.permute.xlu0 %504
      %506 = vset.pattern.permute.xlu0 0
      %507 = vperm.xlu0 %506, %v355
      %v508 = vpop.permute.xlu0 %507
      %509 = vset.pattern.permute.xlu0 0
      %510 = vperm.xlu0 %509, %v356
      %v511 = vpop.permute.xlu0 %510
      %512 = vset.pattern.permute.xlu0 0
      %513 = vperm.xlu0 %512, %v357
      %v514 = vpop.permute.xlu0 %513
      %515 = vset.pattern.permute.xlu0 0
      %516 = vperm.xlu0 %515, %v358
      %v517 = vpop.permute.xlu0 %516
      %518 = vset.pattern.permute.xlu0 0
      %519 = vperm.xlu0 %518, %v359
      %v520 = vpop.permute.xlu0 %519
      %521 = vset.pattern.permute.xlu0 0
      %522 = vperm.xlu0 %521, %v360
      %v523 = vpop.permute.xlu0 %522
      %524 = vset.pattern.permute.xlu0 0
      %525 = vperm.xlu0 %524, %v361
      %v526 = vpop.permute.xlu0 %525
      %527 = vset.pattern.permute.xlu0 0
      %528 = vperm.xlu0 %527, %v362
      %v529 = vpop.permute.xlu0 %528
      %530 = vset.pattern.permute.xlu0 0
      %531 = vperm.xlu0 %530, %v363
      %v532 = vpop.permute.xlu0 %531
      %533 = vset.pattern.permute.xlu0 0
      %534 = vperm.xlu0 %533, %v364
      %v535 = vpop.permute.xlu0 %534
      %536 = vset.pattern.permute.xlu0 0
      %537 = vperm.xlu0 %536, %v365
      %v538 = vpop.permute.xlu0 %537
      %539 = vset.pattern.permute.xlu0 0
      %540 = vperm.xlu0 %539, %v366
      %v541 = vpop.permute.xlu0 %540
      %542 = vset.pattern.permute.xlu0 0
      %543 = vperm.xlu0 %542, %v367
      %v544 = vpop.permute.xlu0 %543
      %545 = vset.pattern.permute.xlu0 0
      %546 = vperm.xlu0 %545, %v368
      %v547 = vpop.permute.xlu0 %546
      %548 = vset.pattern.permute.xlu0 0
      %549 = vperm.xlu0 %548, %v369
      %v550 = vpop.permute.xlu0 %549
      %551 = vset.pattern.permute.xlu0 0
      %552 = vperm.xlu0 %551, %v370
      %v553 = vpop.permute.xlu0 %552
      %554 = vset.pattern.permute.xlu0 0
      %555 = vperm.xlu0 %554, %v371
      %v556 = vpop.permute.xlu0 %555
      %557 = vset.pattern.permute.xlu0 0
      %558 = vperm.xlu0 %557, %v372
      %v559 = vpop.permute.xlu0 %558
      %560 = vset.pattern.permute.xlu0 0
      %561 = vperm.xlu0 %560, %v373
      %v562 = vpop.permute.xlu0 %561
      %563 = vset.pattern.permute.xlu0 0
      %564 = vperm.xlu0 %563, %v374
      %v565 = vpop.permute.xlu0 %564
      %vm566 = vcmp.eq.s32.totalorder %v379, %v376
      %vm567 = vcmp.eq.s32.totalorder %v382, %v376
      %vm568 = vcmp.eq.s32.totalorder %v385, %v376
      %vm569 = vcmp.eq.s32.totalorder %v388, %v376
      %vm570 = vcmp.eq.s32.totalorder %v391, %v376
      %vm571 = vcmp.eq.s32.totalorder %v394, %v376
      %vm572 = vcmp.eq.s32.totalorder %v397, %v376
      %vm573 = vcmp.eq.s32.totalorder %v400, %v376
      %vm574 = vcmp.eq.s32.totalorder %v403, %v376
      %vm575 = vcmp.eq.s32.totalorder %v406, %v376
      %vm576 = vcmp.eq.s32.totalorder %v409, %v376
      %vm577 = vcmp.eq.s32.totalorder %v412, %v376
      %vm578 = vcmp.eq.s32.totalorder %v415, %v376
      %vm579 = vcmp.eq.s32.totalorder %v418, %v376
      %vm580 = vcmp.eq.s32.totalorder %v421, %v376
      %vm581 = vcmp.eq.s32.totalorder %v424, %v376
      %vm582 = vcmp.eq.s32.totalorder %v427, %v376
      %vm583 = vcmp.eq.s32.totalorder %v430, %v376
      %vm584 = vcmp.eq.s32.totalorder %v433, %v376
      %vm585 = vcmp.eq.s32.totalorder %v436, %v376
      %vm586 = vcmp.eq.s32.totalorder %v439, %v376
      %vm587 = vcmp.eq.s32.totalorder %v442, %v376
      %vm588 = vcmp.eq.s32.totalorder %v445, %v376
      %vm589 = vcmp.eq.s32.totalorder %v448, %v376
      %vm590 = vcmp.eq.s32.totalorder %v451, %v376
      %vm591 = vcmp.eq.s32.totalorder %v454, %v376
      %vm592 = vcmp.eq.s32.totalorder %v457, %v376
      %vm593 = vcmp.eq.s32.totalorder %v460, %v376
      %vm594 = vcmp.eq.s32.totalorder %v463, %v376
      %vm595 = vcmp.eq.s32.totalorder %v466, %v376
      %vm596 = vcmp.eq.s32.totalorder %v469, %v376
      %vm597 = vcmp.eq.s32.totalorder %v472, %v376
      %vm598 = vcmp.eq.s32.totalorder %v475, %v376
      %vm599 = vcmp.eq.s32.totalorder %v478, %v376
      %vm600 = vcmp.eq.s32.totalorder %v481, %v376
      %vm601 = vcmp.eq.s32.totalorder %v484, %v376
      %vm602 = vcmp.eq.s32.totalorder %v487, %v376
      %vm603 = vcmp.eq.s32.totalorder %v490, %v376
      %vm604 = vcmp.eq.s32.totalorder %v493, %v376
      %vm605 = vcmp.eq.s32.totalorder %v496, %v376
      %vm606 = vcmp.eq.s32.totalorder %v499, %v376
      %vm607 = vcmp.eq.s32.totalorder %v502, %v376
      %vm608 = vcmp.eq.s32.totalorder %v505, %v376
      %vm609 = vcmp.eq.s32.totalorder %v508, %v376
      %vm610 = vcmp.eq.s32.totalorder %v511, %v376
      %vm611 = vcmp.eq.s32.totalorder %v514, %v376
      %vm612 = vcmp.eq.s32.totalorder %v517, %v376
      %vm613 = vcmp.eq.s32.totalorder %v520, %v376
      %vm614 = vcmp.eq.s32.totalorder %v523, %v376
      %vm615 = vcmp.eq.s32.totalorder %v526, %v376
      %vm616 = vcmp.eq.s32.totalorder %v529, %v376
      %vm617 = vcmp.eq.s32.totalorder %v532, %v376
      %vm618 = vcmp.eq.s32.totalorder %v535, %v376
      %vm619 = vcmp.eq.s32.totalorder %v538, %v376
      %vm620 = vcmp.eq.s32.totalorder %v541, %v376
      %vm621 = vcmp.eq.s32.totalorder %v544, %v376
      %vm622 = vcmp.eq.s32.totalorder %v547, %v376
      %vm623 = vcmp.eq.s32.totalorder %v550, %v376
      %vm624 = vcmp.eq.s32.totalorder %v553, %v376
      %vm625 = vcmp.eq.s32.totalorder %v556, %v376
      %vm626 = vcmp.eq.s32.totalorder %v559, %v376
      %vm627 = vcmp.eq.s32.totalorder %v562, %v376
      %vm628 = vcmp.eq.s32.totalorder %v565, %v376
      %v629 = vsel %vm566, 1, 0
      %v630 = vsel %vm567, 1, 0
      %v631 = vsel %vm568, 1, 0
      %v632 = vsel %vm569, 1, 0
      %v633 = vsel %vm570, 1, 0
      %v634 = vsel %vm571, 1, 0
      %v635 = vsel %vm572, 1, 0
      %v636 = vsel %vm573, 1, 0
      %v637 = vsel %vm574, 1, 0
      %v638 = vsel %vm575, 1, 0
      %v639 = vsel %vm576, 1, 0
      %v640 = vsel %vm577, 1, 0
      %v641 = vsel %vm578, 1, 0
      %v642 = vsel %vm579, 1, 0
      %v643 = vsel %vm580, 1, 0
      %v644 = vsel %vm581, 1, 0
      %v645 = vsel %vm582, 1, 0
      %v646 = vsel %vm583, 1, 0
      %v647 = vsel %vm584, 1, 0
      %v648 = vsel %vm585, 1, 0
      %v649 = vsel %vm586, 1, 0
      %v650 = vsel %vm587, 1, 0
      %v651 = vsel %vm588, 1, 0
      %v652 = vsel %vm589, 1, 0
      %v653 = vsel %vm590, 1, 0
      %v654 = vsel %vm591, 1, 0
      %v655 = vsel %vm592, 1, 0
      %v656 = vsel %vm593, 1, 0
      %v657 = vsel %vm594, 1, 0
      %v658 = vsel %vm595, 1, 0
      %v659 = vsel %vm596, 1, 0
      %v660 = vsel %vm597, 1, 0
      %v661 = vsel %vm598, 1, 0
      %v662 = vsel %vm599, 1, 0
      %v663 = vsel %vm600, 1, 0
      %v664 = vsel %vm601, 1, 0
      %v665 = vsel %vm602, 1, 0
      %v666 = vsel %vm603, 1, 0
      %v667 = vsel %vm604, 1, 0
      %v668 = vsel %vm605, 1, 0
      %v669 = vsel %vm606, 1, 0
      %v670 = vsel %vm607, 1, 0
      %v671 = vsel %vm608, 1, 0
      %v672 = vsel %vm609, 1, 0
      %v673 = vsel %vm610, 1, 0
      %v674 = vsel %vm611, 1, 0
      %v675 = vsel %vm612, 1, 0
      %v676 = vsel %vm613, 1, 0
      %v677 = vsel %vm614, 1, 0
      %v678 = vsel %vm615, 1, 0
      %v679 = vsel %vm616, 1, 0
      %v680 = vsel %vm617, 1, 0
      %v681 = vsel %vm618, 1, 0
      %v682 = vsel %vm619, 1, 0
      %v683 = vsel %vm620, 1, 0
      %v684 = vsel %vm621, 1, 0
      %v685 = vsel %vm622, 1, 0
      %v686 = vsel %vm623, 1, 0
      %v687 = vsel %vm624, 1, 0
      %v688 = vsel %vm625, 1, 0
      %v689 = vsel %vm626, 1, 0
      %v690 = vsel %vm627, 1, 0
      %v691 = vsel %vm628, 1, 0
      %v692 = vcvt.s32.f32 %v629
      %v693 = vcvt.s32.f32 %v630
      %v694 = vcvt.s32.f32 %v631
      %v695 = vcvt.s32.f32 %v632
      %v696 = vcvt.s32.f32 %v633
      %v697 = vcvt.s32.f32 %v634
      %v698 = vcvt.s32.f32 %v635
      %v699 = vcvt.s32.f32 %v636
      %v700 = vcvt.s32.f32 %v637
      %v701 = vcvt.s32.f32 %v638
      %v702 = vcvt.s32.f32 %v639
      %v703 = vcvt.s32.f32 %v640
      %v704 = vcvt.s32.f32 %v641
      %v705 = vcvt.s32.f32 %v642
      %v706 = vcvt.s32.f32 %v643
      %v707 = vcvt.s32.f32 %v644
      %v708 = vcvt.s32.f32 %v645
      %v709 = vcvt.s32.f32 %v646
      %v710 = vcvt.s32.f32 %v647
      %v711 = vcvt.s32.f32 %v648
      %v712 = vcvt.s32.f32 %v649
      %v713 = vcvt.s32.f32 %v650
      %v714 = vcvt.s32.f32 %v651
      %v715 = vcvt.s32.f32 %v652
      %v716 = vcvt.s32.f32 %v653
      %v717 = vcvt.s32.f32 %v654
      %v718 = vcvt.s32.f32 %v655
      %v719 = vcvt.s32.f32 %v656
      %v720 = vcvt.s32.f32 %v657
      %v721 = vcvt.s32.f32 %v658
      %v722 = vcvt.s32.f32 %v659
      %v723 = vcvt.s32.f32 %v660
      %v724 = vcvt.s32.f32 %v661
      %v725 = vcvt.s32.f32 %v662
      %v726 = vcvt.s32.f32 %v663
      %v727 = vcvt.s32.f32 %v664
      %v728 = vcvt.s32.f32 %v665
      %v729 = vcvt.s32.f32 %v666
      %v730 = vcvt.s32.f32 %v667
      %v731 = vcvt.s32.f32 %v668
      %v732 = vcvt.s32.f32 %v669
      %v733 = vcvt.s32.f32 %v670
      %v734 = vcvt.s32.f32 %v671
      %v735 = vcvt.s32.f32 %v672
      %v736 = vcvt.s32.f32 %v673
      %v737 = vcvt.s32.f32 %v674
      %v738 = vcvt.s32.f32 %v675
      %v739 = vcvt.s32.f32 %v676
      %v740 = vcvt.s32.f32 %v677
      %v741 = vcvt.s32.f32 %v678
      %v742 = vcvt.s32.f32 %v679
      %v743 = vcvt.s32.f32 %v680
      %v744 = vcvt.s32.f32 %v681
      %v745 = vcvt.s32.f32 %v682
      %v746 = vcvt.s32.f32 %v683
      %v747 = vcvt.s32.f32 %v684
      %v748 = vcvt.s32.f32 %v685
      %v749 = vcvt.s32.f32 %v686
      %v750 = vcvt.s32.f32 %v687
      %v751 = vcvt.s32.f32 %v688
      %v752 = vcvt.s32.f32 %v689
      %v753 = vcvt.s32.f32 %v690
      %v754 = vcvt.s32.f32 %v691
      %755 = vset.pattern.permute.xlu0 1
      %756 = vperm.xlu0 %755, %v312
      %v757 = vpop.permute.xlu0 %756
      %758 = vset.pattern.permute.xlu0 1
      %759 = vperm.xlu0 %758, %v313
      %v760 = vpop.permute.xlu0 %759
      %761 = vset.pattern.permute.xlu0 1
      %762 = vperm.xlu0 %761, %v314
      %v763 = vpop.permute.xlu0 %762
      %764 = vset.pattern.permute.xlu0 1
      %765 = vperm.xlu0 %764, %v315
      %v766 = vpop.permute.xlu0 %765
      %767 = vset.pattern.permute.xlu0 1
      %768 = vperm.xlu0 %767, %v316
      %v769 = vpop.permute.xlu0 %768
      %770 = vset.pattern.permute.xlu0 1
      %771 = vperm.xlu0 %770, %v317
      %v772 = vpop.permute.xlu0 %771
      %773 = vset.pattern.permute.xlu0 1
      %774 = vperm.xlu0 %773, %v318
      %v775 = vpop.permute.xlu0 %774
      %776 = vset.pattern.permute.xlu0 1
      %777 = vperm.xlu0 %776, %v319
      %v778 = vpop.permute.xlu0 %777
      %779 = vset.pattern.permute.xlu0 1
      %780 = vperm.xlu0 %779, %v320
      %v781 = vpop.permute.xlu0 %780
      %782 = vset.pattern.permute.xlu0 1
      %783 = vperm.xlu0 %782, %v321
      %v784 = vpop.permute.xlu0 %783
      %785 = vset.pattern.permute.xlu0 1
      %786 = vperm.xlu0 %785, %v322
      %v787 = vpop.permute.xlu0 %786
      %788 = vset.pattern.permute.xlu0 1
      %789 = vperm.xlu0 %788, %v323
      %v790 = vpop.permute.xlu0 %789
      %791 = vset.pattern.permute.xlu0 1
      %792 = vperm.xlu0 %791, %v324
      %v793 = vpop.permute.xlu0 %792
      %794 = vset.pattern.permute.xlu0 1
      %795 = vperm.xlu0 %794, %v325
      %v796 = vpop.permute.xlu0 %795
      %797 = vset.pattern.permute.xlu0 1
      %798 = vperm.xlu0 %797, %v326
      %v799 = vpop.permute.xlu0 %798
      %800 = vset.pattern.permute.xlu0 1
      %801 = vperm.xlu0 %800, %v327
      %v802 = vpop.permute.xlu0 %801
      %803 = vset.pattern.permute.xlu0 1
      %804 = vperm.xlu0 %803, %v328
      %v805 = vpop.permute.xlu0 %804
      %806 = vset.pattern.permute.xlu0 1
      %807 = vperm.xlu0 %806, %v329
      %v808 = vpop.permute.xlu0 %807
      %809 = vset.pattern.permute.xlu0 1
      %810 = vperm.xlu0 %809, %v330
      %v811 = vpop.permute.xlu0 %810
      %812 = vset.pattern.permute.xlu0 1
      %813 = vperm.xlu0 %812, %v331
      %v814 = vpop.permute.xlu0 %813
      %815 = vset.pattern.permute.xlu0 1
      %816 = vperm.xlu0 %815, %v332
      %v817 = vpop.permute.xlu0 %816
      %818 = vset.pattern.permute.xlu0 1
      %819 = vperm.xlu0 %818, %v333
      %v820 = vpop.permute.xlu0 %819
      %821 = vset.pattern.permute.xlu0 1
      %822 = vperm.xlu0 %821, %v334
      %v823 = vpop.permute.xlu0 %822
      %824 = vset.pattern.permute.xlu0 1
      %825 = vperm.xlu0 %824, %v335
      %v826 = vpop.permute.xlu0 %825
      %827 = vset.pattern.permute.xlu0 1
      %828 = vperm.xlu0 %827, %v336
      %v829 = vpop.permute.xlu0 %828
      %830 = vset.pattern.permute.xlu0 1
      %831 = vperm.xlu0 %830, %v337
      %v832 = vpop.permute.xlu0 %831
      %833 = vset.pattern.permute.xlu0 1
      %834 = vperm.xlu0 %833, %v338
      %v835 = vpop.permute.xlu0 %834
      %836 = vset.pattern.permute.xlu0 1
      %837 = vperm.xlu0 %836, %v339
      %v838 = vpop.permute.xlu0 %837
      %839 = vset.pattern.permute.xlu0 1
      %840 = vperm.xlu0 %839, %v340
      %v841 = vpop.permute.xlu0 %840
      %842 = vset.pattern.permute.xlu0 1
      %843 = vperm.xlu0 %842, %v341
      %v844 = vpop.permute.xlu0 %843
      %845 = vset.pattern.permute.xlu0 1
      %846 = vperm.xlu0 %845, %v342
      %v847 = vpop.permute.xlu0 %846
      %848 = vset.pattern.permute.xlu0 1
      %849 = vperm.xlu0 %848, %v343
      %v850 = vpop.permute.xlu0 %849
      %851 = vset.pattern.permute.xlu0 1
      %852 = vperm.xlu0 %851, %v344
      %v853 = vpop.permute.xlu0 %852
      %854 = vset.pattern.permute.xlu0 1
      %855 = vperm.xlu0 %854, %v345
      %v856 = vpop.permute.xlu0 %855
      %857 = vset.pattern.permute.xlu0 1
      %858 = vperm.xlu0 %857, %v346
      %v859 = vpop.permute.xlu0 %858
      %860 = vset.pattern.permute.xlu0 1
      %861 = vperm.xlu0 %860, %v347
      %v862 = vpop.permute.xlu0 %861
      %863 = vset.pattern.permute.xlu0 1
      %864 = vperm.xlu0 %863, %v348
      %v865 = vpop.permute.xlu0 %864
      %866 = vset.pattern.permute.xlu0 1
      %867 = vperm.xlu0 %866, %v349
      %v868 = vpop.permute.xlu0 %867
      %869 = vset.pattern.permute.xlu0 1
      %870 = vperm.xlu0 %869, %v350
      %v871 = vpop.permute.xlu0 %870
      %872 = vset.pattern.permute.xlu0 1
      %873 = vperm.xlu0 %872, %v351
      %v874 = vpop.permute.xlu0 %873
      %875 = vset.pattern.permute.xlu0 1
      %876 = vperm.xlu0 %875, %v352
      %v877 = vpop.permute.xlu0 %876
      %878 = vset.pattern.permute.xlu0 1
      %879 = vperm.xlu0 %878, %v353
      %v880 = vpop.permute.xlu0 %879
      %881 = vset.pattern.permute.xlu0 1
      %882 = vperm.xlu0 %881, %v354
      %v883 = vpop.permute.xlu0 %882
      %884 = vset.pattern.permute.xlu0 1
      %885 = vperm.xlu0 %884, %v355
      %v886 = vpop.permute.xlu0 %885
      %887 = vset.pattern.permute.xlu0 1
      %888 = vperm.xlu0 %887, %v356
      %v889 = vpop.permute.xlu0 %888
      %890 = vset.pattern.permute.xlu0 1
      %891 = vperm.xlu0 %890, %v357
      %v892 = vpop.permute.xlu0 %891
      %893 = vset.pattern.permute.xlu0 1
      %894 = vperm.xlu0 %893, %v358
      %v895 = vpop.permute.xlu0 %894
      %896 = vset.pattern.permute.xlu0 1
      %897 = vperm.xlu0 %896, %v359
      %v898 = vpop.permute.xlu0 %897
      %899 = vset.pattern.permute.xlu0 1
      %900 = vperm.xlu0 %899, %v360
      %v901 = vpop.permute.xlu0 %900
      %902 = vset.pattern.permute.xlu0 1
      %903 = vperm.xlu0 %902, %v361
      %v904 = vpop.permute.xlu0 %903
      %905 = vset.pattern.permute.xlu0 1
      %906 = vperm.xlu0 %905, %v362
      %v907 = vpop.permute.xlu0 %906
      %908 = vset.pattern.permute.xlu0 1
      %909 = vperm.xlu0 %908, %v363
      %v910 = vpop.permute.xlu0 %909
      %911 = vset.pattern.permute.xlu0 1
      %912 = vperm.xlu0 %911, %v364
      %v913 = vpop.permute.xlu0 %912
      %914 = vset.pattern.permute.xlu0 1
      %915 = vperm.xlu0 %914, %v365
      %v916 = vpop.permute.xlu0 %915
      %917 = vset.pattern.permute.xlu0 1
      %918 = vperm.xlu0 %917, %v366
      %v919 = vpop.permute.xlu0 %918
      %920 = vset.pattern.permute.xlu0 1
      %921 = vperm.xlu0 %920, %v367
      %v922 = vpop.permute.xlu0 %921
      %923 = vset.pattern.permute.xlu0 1
      %924 = vperm.xlu0 %923, %v368
      %v925 = vpop.permute.xlu0 %924
      %926 = vset.pattern.permute.xlu0 1
      %927 = vperm.xlu0 %926, %v369
      %v928 = vpop.permute.xlu0 %927
      %929 = vset.pattern.permute.xlu0 1
      %930 = vperm.xlu0 %929, %v370
      %v931 = vpop.permute.xlu0 %930
      %932 = vset.pattern.permute.xlu0 1
      %933 = vperm.xlu0 %932, %v371
      %v934 = vpop.permute.xlu0 %933
      %935 = vset.pattern.permute.xlu0 1
      %936 = vperm.xlu0 %935, %v372
      %v937 = vpop.permute.xlu0 %936
      %938 = vset.pattern.permute.xlu0 1
      %939 = vperm.xlu0 %938, %v373
      %v940 = vpop.permute.xlu0 %939
      %941 = vset.pattern.permute.xlu0 1
      %942 = vperm.xlu0 %941, %v374
      %v943 = vpop.permute.xlu0 %942
      %vm944 = vcmp.eq.s32.totalorder %v757, %v376
      %vm945 = vcmp.eq.s32.totalorder %v760, %v376
      %vm946 = vcmp.eq.s32.totalorder %v763, %v376
      %vm947 = vcmp.eq.s32.totalorder %v766, %v376
      %vm948 = vcmp.eq.s32.totalorder %v769, %v376
      %vm949 = vcmp.eq.s32.totalorder %v772, %v376
      %vm950 = vcmp.eq.s32.totalorder %v775, %v376
      %vm951 = vcmp.eq.s32.totalorder %v778, %v376
      %vm952 = vcmp.eq.s32.totalorder %v781, %v376
      %vm953 = vcmp.eq.s32.totalorder %v784, %v376
      %vm954 = vcmp.eq.s32.totalorder %v787, %v376
      %vm955 = vcmp.eq.s32.totalorder %v790, %v376
      %vm956 = vcmp.eq.s32.totalorder %v793, %v376
      %vm957 = vcmp.eq.s32.totalorder %v796, %v376
      %vm958 = vcmp.eq.s32.totalorder %v799, %v376
      %vm959 = vcmp.eq.s32.totalorder %v802, %v376
      %vm960 = vcmp.eq.s32.totalorder %v805, %v376
      %vm961 = vcmp.eq.s32.totalorder %v808, %v376
      %vm962 = vcmp.eq.s32.totalorder %v811, %v376
      %vm963 = vcmp.eq.s32.totalorder %v814, %v376
      %vm964 = vcmp.eq.s32.totalorder %v817, %v376
      %vm965 = vcmp.eq.s32.totalorder %v820, %v376
      %vm966 = vcmp.eq.s32.totalorder %v823, %v376
      %vm967 = vcmp.eq.s32.totalorder %v826, %v376
      %vm968 = vcmp.eq.s32.totalorder %v829, %v376
      %vm969 = vcmp.eq.s32.totalorder %v832, %v376
      %vm970 = vcmp.eq.s32.totalorder %v835, %v376
      %vm971 = vcmp.eq.s32.totalorder %v838, %v376
      %vm972 = vcmp.eq.s32.totalorder %v841, %v376
      %vm973 = vcmp.eq.s32.totalorder %v844, %v376
      %vm974 = vcmp.eq.s32.totalorder %v847, %v376
      %vm975 = vcmp.eq.s32.totalorder %v850, %v376
      %vm976 = vcmp.eq.s32.totalorder %v853, %v376
      %vm977 = vcmp.eq.s32.totalorder %v856, %v376
      %vm978 = vcmp.eq.s32.totalorder %v859, %v376
      %vm979 = vcmp.eq.s32.totalorder %v862, %v376
      %vm980 = vcmp.eq.s32.totalorder %v865, %v376
      %vm981 = vcmp.eq.s32.totalorder %v868, %v376
      %vm982 = vcmp.eq.s32.totalorder %v871, %v376
      %vm983 = vcmp.eq.s32.totalorder %v874, %v376
      %vm984 = vcmp.eq.s32.totalorder %v877, %v376
      %vm985 = vcmp.eq.s32.totalorder %v880, %v376
      %vm986 = vcmp.eq.s32.totalorder %v883, %v376
      %vm987 = vcmp.eq.s32.totalorder %v886, %v376
      %vm988 = vcmp.eq.s32.totalorder %v889, %v376
      %vm989 = vcmp.eq.s32.totalorder %v892, %v376
      %vm990 = vcmp.eq.s32.totalorder %v895, %v376
      %vm991 = vcmp.eq.s32.totalorder %v898, %v376
      %vm992 = vcmp.eq.s32.totalorder %v901, %v376
      %vm993 = vcmp.eq.s32.totalorder %v904, %v376
      %vm994 = vcmp.eq.s32.totalorder %v907, %v376
      %vm995 = vcmp.eq.s32.totalorder %v910, %v376
      %vm996 = vcmp.eq.s32.totalorder %v913, %v376
      %vm997 = vcmp.eq.s32.totalorder %v916, %v376
      %vm998 = vcmp.eq.s32.totalorder %v919, %v376
      %vm999 = vcmp.eq.s32.totalorder %v922, %v376
      %vm1000 = vcmp.eq.s32.totalorder %v925, %v376
      %vm1001 = vcmp.eq.s32.totalorder %v928, %v376
      %vm1002 = vcmp.eq.s32.totalorder %v931, %v376
      %vm1003 = vcmp.eq.s32.totalorder %v934, %v376
      %vm1004 = vcmp.eq.s32.totalorder %v937, %v376
      %vm1005 = vcmp.eq.s32.totalorder %v940, %v376
      %vm1006 = vcmp.eq.s32.totalorder %v943, %v376
      %v1007 = vsel %vm944, 1, 0
      %v1008 = vsel %vm945, 1, 0
      %v1009 = vsel %vm946, 1, 0
      %v1010 = vsel %vm947, 1, 0
      %v1011 = vsel %vm948, 1, 0
      %v1012 = vsel %vm949, 1, 0
      %v1013 = vsel %vm950, 1, 0
      %v1014 = vsel %vm951, 1, 0
      %v1015 = vsel %vm952, 1, 0
      %v1016 = vsel %vm953, 1, 0
      %v1017 = vsel %vm954, 1, 0
      %v1018 = vsel %vm955, 1, 0
      %v1019 = vsel %vm956, 1, 0
      %v1020 = vsel %vm957, 1, 0
      %v1021 = vsel %vm958, 1, 0
      %v1022 = vsel %vm959, 1, 0
      %v1023 = vsel %vm960, 1, 0
      %v1024 = vsel %vm961, 1, 0
      %v1025 = vsel %vm962, 1, 0
      %v1026 = vsel %vm963, 1, 0
      %v1027 = vsel %vm964, 1, 0
      %v1028 = vsel %vm965, 1, 0
      %v1029 = vsel %vm966, 1, 0
      %v1030 = vsel %vm967, 1, 0
      %v1031 = vsel %vm968, 1, 0
      %v1032 = vsel %vm969, 1, 0
      %v1033 = vsel %vm970, 1, 0
      %v1034 = vsel %vm971, 1, 0
      %v1035 = vsel %vm972, 1, 0
      %v1036 = vsel %vm973, 1, 0
      %v1037 = vsel %vm974, 1, 0
      %v1038 = vsel %vm975, 1, 0
      %v1039 = vsel %vm976, 1, 0
      %v1040 = vsel %vm977, 1, 0
      %v1041 = vsel %vm978, 1, 0
      %v1042 = vsel %vm979, 1, 0
      %v1043 = vsel %vm980, 1, 0
      %v1044 = vsel %vm981, 1, 0
      %v1045 = vsel %vm982, 1, 0
      %v1046 = vsel %vm983, 1, 0
      %v1047 = vsel %vm984, 1, 0
      %v1048 = vsel %vm985, 1, 0
      %v1049 = vsel %vm986, 1, 0
      %v1050 = vsel %vm987, 1, 0
      %v1051 = vsel %vm988, 1, 0
      %v1052 = vsel %vm989, 1, 0
      %v1053 = vsel %vm990, 1, 0
      %v1054 = vsel %vm991, 1, 0
      %v1055 = vsel %vm992, 1, 0
      %v1056 = vsel %vm993, 1, 0
      %v1057 = vsel %vm994, 1, 0
      %v1058 = vsel %vm995, 1, 0
      %v1059 = vsel %vm996, 1, 0
      %v1060 = vsel %vm997, 1, 0
      %v1061 = vsel %vm998, 1, 0
      %v1062 = vsel %vm999, 1, 0
      %v1063 = vsel %vm1000, 1, 0
      %v1064 = vsel %vm1001, 1, 0
      %v1065 = vsel %vm1002, 1, 0
      %v1066 = vsel %vm1003, 1, 0
      %v1067 = vsel %vm1004, 1, 0
      %v1068 = vsel %vm1005, 1, 0
      %v1069 = vsel %vm1006, 1, 0
      %v1070 = vcvt.s32.f32 %v1007
      %v1071 = vcvt.s32.f32 %v1008
      %v1072 = vcvt.s32.f32 %v1009
      %v1073 = vcvt.s32.f32 %v1010
      %v1074 = vcvt.s32.f32 %v1011
      %v1075 = vcvt.s32.f32 %v1012
      %v1076 = vcvt.s32.f32 %v1013
      %v1077 = vcvt.s32.f32 %v1014
      %v1078 = vcvt.s32.f32 %v1015
      %v1079 = vcvt.s32.f32 %v1016
      %v1080 = vcvt.s32.f32 %v1017
      %v1081 = vcvt.s32.f32 %v1018
      %v1082 = vcvt.s32.f32 %v1019
      %v1083 = vcvt.s32.f32 %v1020
      %v1084 = vcvt.s32.f32 %v1021
      %v1085 = vcvt.s32.f32 %v1022
      %v1086 = vcvt.s32.f32 %v1023
      %v1087 = vcvt.s32.f32 %v1024
      %v1088 = vcvt.s32.f32 %v1025
      %v1089 = vcvt.s32.f32 %v1026
      %v1090 = vcvt.s32.f32 %v1027
      %v1091 = vcvt.s32.f32 %v1028
      %v1092 = vcvt.s32.f32 %v1029
      %v1093 = vcvt.s32.f32 %v1030
      %v1094 = vcvt.s32.f32 %v1031
      %v1095 = vcvt.s32.f32 %v1032
      %v1096 = vcvt.s32.f32 %v1033
      %v1097 = vcvt.s32.f32 %v1034
      %v1098 = vcvt.s32.f32 %v1035
      %v1099 = vcvt.s32.f32 %v1036
      %v1100 = vcvt.s32.f32 %v1037
      %v1101 = vcvt.s32.f32 %v1038
      %v1102 = vcvt.s32.f32 %v1039
      %v1103 = vcvt.s32.f32 %v1040
      %v1104 = vcvt.s32.f32 %v1041
      %v1105 = vcvt.s32.f32 %v1042
      %v1106 = vcvt.s32.f32 %v1043
      %v1107 = vcvt.s32.f32 %v1044
      %v1108 = vcvt.s32.f32 %v1045
      %v1109 = vcvt.s32.f32 %v1046
      %v1110 = vcvt.s32.f32 %v1047
      %v1111 = vcvt.s32.f32 %v1048
      %v1112 = vcvt.s32.f32 %v1049
      %v1113 = vcvt.s32.f32 %v1050
      %v1114 = vcvt.s32.f32 %v1051
      %v1115 = vcvt.s32.f32 %v1052
      %v1116 = vcvt.s32.f32 %v1053
      %v1117 = vcvt.s32.f32 %v1054
      %v1118 = vcvt.s32.f32 %v1055
      %v1119 = vcvt.s32.f32 %v1056
      %v1120 = vcvt.s32.f32 %v1057
      %v1121 = vcvt.s32.f32 %v1058
      %v1122 = vcvt.s32.f32 %v1059
      %v1123 = vcvt.s32.f32 %v1060
      %v1124 = vcvt.s32.f32 %v1061
      %v1125 = vcvt.s32.f32 %v1062
      %v1126 = vcvt.s32.f32 %v1063
      %v1127 = vcvt.s32.f32 %v1064
      %v1128 = vcvt.s32.f32 %v1065
      %v1129 = vcvt.s32.f32 %v1066
      %v1130 = vcvt.s32.f32 %v1067
      %v1131 = vcvt.s32.f32 %v1068
      %v1132 = vcvt.s32.f32 %v1069
      %v1133 = vadd.f32 %v692, %v1070
      %v1134 = vadd.f32 %v693, %v1071
      %v1135 = vadd.f32 %v694, %v1072
      %v1136 = vadd.f32 %v695, %v1073
      %v1137 = vadd.f32 %v696, %v1074
      %v1138 = vadd.f32 %v697, %v1075
      %v1139 = vadd.f32 %v698, %v1076
      %v1140 = vadd.f32 %v699, %v1077
      %v1141 = vadd.f32 %v700, %v1078
      %v1142 = vadd.f32 %v701, %v1079
      %v1143 = vadd.f32 %v702, %v1080
      %v1144 = vadd.f32 %v703, %v1081
      %v1145 = vadd.f32 %v704, %v1082
      %v1146 = vadd.f32 %v705, %v1083
      %v1147 = vadd.f32 %v706, %v1084
      %v1148 = vadd.f32 %v707, %v1085
      %v1149 = vadd.f32 %v708, %v1086
      %v1150 = vadd.f32 %v709, %v1087
      %v1151 = vadd.f32 %v710, %v1088
      %v1152 = vadd.f32 %v711, %v1089
      %v1153 = vadd.f32 %v712, %v1090
      %v1154 = vadd.f32 %v713, %v1091
      %v1155 = vadd.f32 %v714, %v1092
      %v1156 = vadd.f32 %v715, %v1093
      %v1157 = vadd.f32 %v716, %v1094
      %v1158 = vadd.f32 %v717, %v1095
      %v1159 = vadd.f32 %v718, %v1096
      %v1160 = vadd.f32 %v719, %v1097
      %v1161 = vadd.f32 %v720, %v1098
      %v1162 = vadd.f32 %v721, %v1099
      %v1163 = vadd.f32 %v722, %v1100
      %v1164 = vadd.f32 %v723, %v1101
      %v1165 = vadd.f32 %v724, %v1102
      %v1166 = vadd.f32 %v725, %v1103
      %v1167 = vadd.f32 %v726, %v1104
      %v1168 = vadd.f32 %v727, %v1105
      %v1169 = vadd.f32 %v728, %v1106
      %v1170 = vadd.f32 %v729, %v1107
      %v1171 = vadd.f32 %v730, %v1108
      %v1172 = vadd.f32 %v731, %v1109
      %v1173 = vadd.f32 %v732, %v1110
      %v1174 = vadd.f32 %v733, %v1111
      %v1175 = vadd.f32 %v734, %v1112
      %v1176 = vadd.f32 %v735, %v1113
      %v1177 = vadd.f32 %v736, %v1114
      %v1178 = vadd.f32 %v737, %v1115
      %v1179 = vadd.f32 %v738, %v1116
      %v1180 = vadd.f32 %v739, %v1117
      %v1181 = vadd.f32 %v740, %v1118
      %v1182 = vadd.f32 %v741, %v1119
      %v1183 = vadd.f32 %v742, %v1120
      %v1184 = vadd.f32 %v743, %v1121
      %v1185 = vadd.f32 %v744, %v1122
      %v1186 = vadd.f32 %v745, %v1123
      %v1187 = vadd.f32 %v746, %v1124
      %v1188 = vadd.f32 %v747, %v1125
      %v1189 = vadd.f32 %v748, %v1126
      %v1190 = vadd.f32 %v749, %v1127
      %v1191 = vadd.f32 %v750, %v1128
      %v1192 = vadd.f32 %v751, %v1129
      %v1193 = vadd.f32 %v752, %v1130
      %v1194 = vadd.f32 %v753, %v1131
      %v1195 = vadd.f32 %v754, %v1132
      %1196 = vset.pattern.permute.xlu0 2
      %1197 = vperm.xlu0 %1196, %v312
      %v1198 = vpop.permute.xlu0 %1197
      %1199 = vset.pattern.permute.xlu0 2
      %1200 = vperm.xlu0 %1199, %v313
      %v1201 = vpop.permute.xlu0 %1200
      %1202 = vset.pattern.permute.xlu0 2
      %1203 = vperm.xlu0 %1202, %v314
      %v1204 = vpop.permute.xlu0 %1203
      %1205 = vset.pattern.permute.xlu0 2
      %1206 = vperm.xlu0 %1205, %v315
      %v1207 = vpop.permute.xlu0 %1206
      %1208 = vset.pattern.permute.xlu0 2
      %1209 = vperm.xlu0 %1208, %v316
      %v1210 = vpop.permute.xlu0 %1209
      %1211 = vset.pattern.permute.xlu0 2
      %1212 = vperm.xlu0 %1211, %v317
      %v1213 = vpop.permute.xlu0 %1212
      %1214 = vset.pattern.permute.xlu0 2
      %1215 = vperm.xlu0 %1214, %v318
      %v1216 = vpop.permute.xlu0 %1215
      %1217 = vset.pattern.permute.xlu0 2
      %1218 = vperm.xlu0 %1217, %v319
      %v1219 = vpop.permute.xlu0 %1218
      %1220 = vset.pattern.permute.xlu0 2
      %1221 = vperm.xlu0 %1220, %v320
      %v1222 = vpop.permute.xlu0 %1221
      %1223 = vset.pattern.permute.xlu0 2
      %1224 = vperm.xlu0 %1223, %v321
      %v1225 = vpop.permute.xlu0 %1224
      %1226 = vset.pattern.permute.xlu0 2
      %1227 = vperm.xlu0 %1226, %v322
      %v1228 = vpop.permute.xlu0 %1227
      %1229 = vset.pattern.permute.xlu0 2
      %1230 = vperm.xlu0 %1229, %v323
      %v1231 = vpop.permute.xlu0 %1230
      %1232 = vset.pattern.permute.xlu0 2
      %1233 = vperm.xlu0 %1232, %v324
      %v1234 = vpop.permute.xlu0 %1233
      %1235 = vset.pattern.permute.xlu0 2
      %1236 = vperm.xlu0 %1235, %v325
      %v1237 = vpop.permute.xlu0 %1236
      %1238 = vset.pattern.permute.xlu0 2
      %1239 = vperm.xlu0 %1238, %v326
      %v1240 = vpop.permute.xlu0 %1239
      %1241 = vset.pattern.permute.xlu0 2
      %1242 = vperm.xlu0 %1241, %v327
      %v1243 = vpop.permute.xlu0 %1242
      %1244 = vset.pattern.permute.xlu0 2
      %1245 = vperm.xlu0 %1244, %v328
      %v1246 = vpop.permute.xlu0 %1245
      %1247 = vset.pattern.permute.xlu0 2
      %1248 = vperm.xlu0 %1247, %v329
      %v1249 = vpop.permute.xlu0 %1248
      %1250 = vset.pattern.permute.xlu0 2
      %1251 = vperm.xlu0 %1250, %v330
      %v1252 = vpop.permute.xlu0 %1251
      %1253 = vset.pattern.permute.xlu0 2
      %1254 = vperm.xlu0 %1253, %v331
      %v1255 = vpop.permute.xlu0 %1254
      %1256 = vset.pattern.permute.xlu0 2
      %1257 = vperm.xlu0 %1256, %v332
      %v1258 = vpop.permute.xlu0 %1257
      %1259 = vset.pattern.permute.xlu0 2
      %1260 = vperm.xlu0 %1259, %v333
      %v1261 = vpop.permute.xlu0 %1260
      %1262 = vset.pattern.permute.xlu0 2
      %1263 = vperm.xlu0 %1262, %v334
      %v1264 = vpop.permute.xlu0 %1263
      %1265 = vset.pattern.permute.xlu0 2
      %1266 = vperm.xlu0 %1265, %v335
      %v1267 = vpop.permute.xlu0 %1266
      %1268 = vset.pattern.permute.xlu0 2
      %1269 = vperm.xlu0 %1268, %v336
      %v1270 = vpop.permute.xlu0 %1269
      %1271 = vset.pattern.permute.xlu0 2
      %1272 = vperm.xlu0 %1271, %v337
      %v1273 = vpop.permute.xlu0 %1272
      %1274 = vset.pattern.permute.xlu0 2
      %1275 = vperm.xlu0 %1274, %v338
      %v1276 = vpop.permute.xlu0 %1275
      %1277 = vset.pattern.permute.xlu0 2
      %1278 = vperm.xlu0 %1277, %v339
      %v1279 = vpop.permute.xlu0 %1278
      %1280 = vset.pattern.permute.xlu0 2
      %1281 = vperm.xlu0 %1280, %v340
      %v1282 = vpop.permute.xlu0 %1281
      %1283 = vset.pattern.permute.xlu0 2
      %1284 = vperm.xlu0 %1283, %v341
      %v1285 = vpop.permute.xlu0 %1284
      %1286 = vset.pattern.permute.xlu0 2
      %1287 = vperm.xlu0 %1286, %v342
      %v1288 = vpop.permute.xlu0 %1287
      %1289 = vset.pattern.permute.xlu0 2
      %1290 = vperm.xlu0 %1289, %v343
      %v1291 = vpop.permute.xlu0 %1290
      %1292 = vset.pattern.permute.xlu0 2
      %1293 = vperm.xlu0 %1292, %v344
      %v1294 = vpop.permute.xlu0 %1293
      %1295 = vset.pattern.permute.xlu0 2
      %1296 = vperm.xlu0 %1295, %v345
      %v1297 = vpop.permute.xlu0 %1296
      %1298 = vset.pattern.permute.xlu0 2
      %1299 = vperm.xlu0 %1298, %v346
      %v1300 = vpop.permute.xlu0 %1299
      %1301 = vset.pattern.permute.xlu0 2
      %1302 = vperm.xlu0 %1301, %v347
      %v1303 = vpop.permute.xlu0 %1302
      %1304 = vset.pattern.permute.xlu0 2
      %1305 = vperm.xlu0 %1304, %v348
      %v1306 = vpop.permute.xlu0 %1305
      %1307 = vset.pattern.permute.xlu0 2
      %1308 = vperm.xlu0 %1307, %v349
      %v1309 = vpop.permute.xlu0 %1308
      %1310 = vset.pattern.permute.xlu0 2
      %1311 = vperm.xlu0 %1310, %v350
      %v1312 = vpop.permute.xlu0 %1311
      %1313 = vset.pattern.permute.xlu0 2
      %1314 = vperm.xlu0 %1313, %v351
      %v1315 = vpop.permute.xlu0 %1314
      %1316 = vset.pattern.permute.xlu0 2
      %1317 = vperm.xlu0 %1316, %v352
      %v1318 = vpop.permute.xlu0 %1317
      %1319 = vset.pattern.permute.xlu0 2
      %1320 = vperm.xlu0 %1319, %v353
      %v1321 = vpop.permute.xlu0 %1320
      %1322 = vset.pattern.permute.xlu0 2
      %1323 = vperm.xlu0 %1322, %v354
      %v1324 = vpop.permute.xlu0 %1323
      %1325 = vset.pattern.permute.xlu0 2
      %1326 = vperm.xlu0 %1325, %v355
      %v1327 = vpop.permute.xlu0 %1326
      %1328 = vset.pattern.permute.xlu0 2
      %1329 = vperm.xlu0 %1328, %v356
      %v1330 = vpop.permute.xlu0 %1329
      %1331 = vset.pattern.permute.xlu0 2
      %1332 = vperm.xlu0 %1331, %v357
      %v1333 = vpop.permute.xlu0 %1332
      %1334 = vset.pattern.permute.xlu0 2
      %1335 = vperm.xlu0 %1334, %v358
      %v1336 = vpop.permute.xlu0 %1335
      %1337 = vset.pattern.permute.xlu0 2
      %1338 = vperm.xlu0 %1337, %v359
      %v1339 = vpop.permute.xlu0 %1338
      %1340 = vset.pattern.permute.xlu0 2
      %1341 = vperm.xlu0 %1340, %v360
      %v1342 = vpop.permute.xlu0 %1341
      %1343 = vset.pattern.permute.xlu0 2
      %1344 = vperm.xlu0 %1343, %v361
      %v1345 = vpop.permute.xlu0 %1344
      %1346 = vset.pattern.permute.xlu0 2
      %1347 = vperm.xlu0 %1346, %v362
      %v1348 = vpop.permute.xlu0 %1347
      %1349 = vset.pattern.permute.xlu0 2
      %1350 = vperm.xlu0 %1349, %v363
      %v1351 = vpop.permute.xlu0 %1350
      %1352 = vset.pattern.permute.xlu0 2
      %1353 = vperm.xlu0 %1352, %v364
      %v1354 = vpop.permute.xlu0 %1353
      %1355 = vset.pattern.permute.xlu0 2
      %1356 = vperm.xlu0 %1355, %v365
      %v1357 = vpop.permute.xlu0 %1356
      %1358 = vset.pattern.permute.xlu0 2
      %1359 = vperm.xlu0 %1358, %v366
      %v1360 = vpop.permute.xlu0 %1359
      %1361 = vset.pattern.permute.xlu0 2
      %1362 = vperm.xlu0 %1361, %v367
      %v1363 = vpop.permute.xlu0 %1362
      %1364 = vset.pattern.permute.xlu0 2
      %1365 = vperm.xlu0 %1364, %v368
      %v1366 = vpop.permute.xlu0 %1365
      %1367 = vset.pattern.permute.xlu0 2
      %1368 = vperm.xlu0 %1367, %v369
      %v1369 = vpop.permute.xlu0 %1368
      %1370 = vset.pattern.permute.xlu0 2
      %1371 = vperm.xlu0 %1370, %v370
      %v1372 = vpop.permute.xlu0 %1371
      %1373 = vset.pattern.permute.xlu0 2
      %1374 = vperm.xlu0 %1373, %v371
      %v1375 = vpop.permute.xlu0 %1374
      %1376 = vset.pattern.permute.xlu0 2
      %1377 = vperm.xlu0 %1376, %v372
      %v1378 = vpop.permute.xlu0 %1377
      %1379 = vset.pattern.permute.xlu0 2
      %1380 = vperm.xlu0 %1379, %v373
      %v1381 = vpop.permute.xlu0 %1380
      %1382 = vset.pattern.permute.xlu0 2
      %1383 = vperm.xlu0 %1382, %v374
      %v1384 = vpop.permute.xlu0 %1383
      %vm1385 = vcmp.eq.s32.totalorder %v1198, %v376
      %vm1386 = vcmp.eq.s32.totalorder %v1201, %v376
      %vm1387 = vcmp.eq.s32.totalorder %v1204, %v376
      %vm1388 = vcmp.eq.s32.totalorder %v1207, %v376
      %vm1389 = vcmp.eq.s32.totalorder %v1210, %v376
      %vm1390 = vcmp.eq.s32.totalorder %v1213, %v376
      %vm1391 = vcmp.eq.s32.totalorder %v1216, %v376
      %vm1392 = vcmp.eq.s32.totalorder %v1219, %v376
      %vm1393 = vcmp.eq.s32.totalorder %v1222, %v376
      %vm1394 = vcmp.eq.s32.totalorder %v1225, %v376
      %vm1395 = vcmp.eq.s32.totalorder %v1228, %v376
      %vm1396 = vcmp.eq.s32.totalorder %v1231, %v376
      %vm1397 = vcmp.eq.s32.totalorder %v1234, %v376
      %vm1398 = vcmp.eq.s32.totalorder %v1237, %v376
      %vm1399 = vcmp.eq.s32.totalorder %v1240, %v376
      %vm1400 = vcmp.eq.s32.totalorder %v1243, %v376
      %vm1401 = vcmp.eq.s32.totalorder %v1246, %v376
      %vm1402 = vcmp.eq.s32.totalorder %v1249, %v376
      %vm1403 = vcmp.eq.s32.totalorder %v1252, %v376
      %vm1404 = vcmp.eq.s32.totalorder %v1255, %v376
      %vm1405 = vcmp.eq.s32.totalorder %v1258, %v376
      %vm1406 = vcmp.eq.s32.totalorder %v1261, %v376
      %vm1407 = vcmp.eq.s32.totalorder %v1264, %v376
      %vm1408 = vcmp.eq.s32.totalorder %v1267, %v376
      %vm1409 = vcmp.eq.s32.totalorder %v1270, %v376
      %vm1410 = vcmp.eq.s32.totalorder %v1273, %v376
      %vm1411 = vcmp.eq.s32.totalorder %v1276, %v376
      %vm1412 = vcmp.eq.s32.totalorder %v1279, %v376
      %vm1413 = vcmp.eq.s32.totalorder %v1282, %v376
      %vm1414 = vcmp.eq.s32.totalorder %v1285, %v376
      %vm1415 = vcmp.eq.s32.totalorder %v1288, %v376
      %vm1416 = vcmp.eq.s32.totalorder %v1291, %v376
      %vm1417 = vcmp.eq.s32.totalorder %v1294, %v376
      %vm1418 = vcmp.eq.s32.totalorder %v1297, %v376
      %vm1419 = vcmp.eq.s32.totalorder %v1300, %v376
      %vm1420 = vcmp.eq.s32.totalorder %v1303, %v376
      %vm1421 = vcmp.eq.s32.totalorder %v1306, %v376
      %vm1422 = vcmp.eq.s32.totalorder %v1309, %v376
      %vm1423 = vcmp.eq.s32.totalorder %v1312, %v376
      %vm1424 = vcmp.eq.s32.totalorder %v1315, %v376
      %vm1425 = vcmp.eq.s32.totalorder %v1318, %v376
      %vm1426 = vcmp.eq.s32.totalorder %v1321, %v376
      %vm1427 = vcmp.eq.s32.totalorder %v1324, %v376
      %vm1428 = vcmp.eq.s32.totalorder %v1327, %v376
      %vm1429 = vcmp.eq.s32.totalorder %v1330, %v376
      %vm1430 = vcmp.eq.s32.totalorder %v1333, %v376
      %vm1431 = vcmp.eq.s32.totalorder %v1336, %v376
      %vm1432 = vcmp.eq.s32.totalorder %v1339, %v376
      %vm1433 = vcmp.eq.s32.totalorder %v1342, %v376
      %vm1434 = vcmp.eq.s32.totalorder %v1345, %v376
      %vm1435 = vcmp.eq.s32.totalorder %v1348, %v376
      %vm1436 = vcmp.eq.s32.totalorder %v1351, %v376
      %vm1437 = vcmp.eq.s32.totalorder %v1354, %v376
      %vm1438 = vcmp.eq.s32.totalorder %v1357, %v376
      %vm1439 = vcmp.eq.s32.totalorder %v1360, %v376
      %vm1440 = vcmp.eq.s32.totalorder %v1363, %v376
      %vm1441 = vcmp.eq.s32.totalorder %v1366, %v376
      %vm1442 = vcmp.eq.s32.totalorder %v1369, %v376
      %vm1443 = vcmp.eq.s32.totalorder %v1372, %v376
      %vm1444 = vcmp.eq.s32.totalorder %v1375, %v376
      %vm1445 = vcmp.eq.s32.totalorder %v1378, %v376
      %vm1446 = vcmp.eq.s32.totalorder %v1381, %v376
      %vm1447 = vcmp.eq.s32.totalorder %v1384, %v376
      %v1448 = vsel %vm1385, 1, 0
      %v1449 = vsel %vm1386, 1, 0
      %v1450 = vsel %vm1387, 1, 0
      %v1451 = vsel %vm1388, 1, 0
      %v1452 = vsel %vm1389, 1, 0
      %v1453 = vsel %vm1390, 1, 0
      %v1454 = vsel %vm1391, 1, 0
      %v1455 = vsel %vm1392, 1, 0
      %v1456 = vsel %vm1393, 1, 0
      %v1457 = vsel %vm1394, 1, 0
      %v1458 = vsel %vm1395, 1, 0
      %v1459 = vsel %vm1396, 1, 0
      %v1460 = vsel %vm1397, 1, 0
      %v1461 = vsel %vm1398, 1, 0
      %v1462 = vsel %vm1399, 1, 0
      %v1463 = vsel %vm1400, 1, 0
      %v1464 = vsel %vm1401, 1, 0
      %v1465 = vsel %vm1402, 1, 0
      %v1466 = vsel %vm1403, 1, 0
      %v1467 = vsel %vm1404, 1, 0
      %v1468 = vsel %vm1405, 1, 0
      %v1469 = vsel %vm1406, 1, 0
      %v1470 = vsel %vm1407, 1, 0
      %v1471 = vsel %vm1408, 1, 0
      %v1472 = vsel %vm1409, 1, 0
      %v1473 = vsel %vm1410, 1, 0
      %v1474 = vsel %vm1411, 1, 0
      %v1475 = vsel %vm1412, 1, 0
      %v1476 = vsel %vm1413, 1, 0
      %v1477 = vsel %vm1414, 1, 0
      %v1478 = vsel %vm1415, 1, 0
      %v1479 = vsel %vm1416, 1, 0
      %v1480 = vsel %vm1417, 1, 0
      %v1481 = vsel %vm1418, 1, 0
      %v1482 = vsel %vm1419, 1, 0
      %v1483 = vsel %vm1420, 1, 0
      %v1484 = vsel %vm1421, 1, 0
      %v1485 = vsel %vm1422, 1, 0
      %v1486 = vsel %vm1423, 1, 0
      %v1487 = vsel %vm1424, 1, 0
      %v1488 = vsel %vm1425, 1, 0
      %v1489 = vsel %vm1426, 1, 0
      %v1490 = vsel %vm1427, 1, 0
      %v1491 = vsel %vm1428, 1, 0
      %v1492 = vsel %vm1429, 1, 0
      %v1493 = vsel %vm1430, 1, 0
      %v1494 = vsel %vm1431, 1, 0
      %v1495 = vsel %vm1432, 1, 0
      %v1496 = vsel %vm1433, 1, 0
      %v1497 = vsel %vm1434, 1, 0
      %v1498 = vsel %vm1435, 1, 0
      %v1499 = vsel %vm1436, 1, 0
      %v1500 = vsel %vm1437, 1, 0
      %v1501 = vsel %vm1438, 1, 0
      %v1502 = vsel %vm1439, 1, 0
      %v1503 = vsel %vm1440, 1, 0
      %v1504 = vsel %vm1441, 1, 0
      %v1505 = vsel %vm1442, 1, 0
      %v1506 = vsel %vm1443, 1, 0
      %v1507 = vsel %vm1444, 1, 0
      %v1508 = vsel %vm1445, 1, 0
      %v1509 = vsel %vm1446, 1, 0
      %v1510 = vsel %vm1447, 1, 0
      %v1511 = vcvt.s32.f32 %v1448
      %v1512 = vcvt.s32.f32 %v1449
      %v1513 = vcvt.s32.f32 %v1450
      %v1514 = vcvt.s32.f32 %v1451
      %v1515 = vcvt.s32.f32 %v1452
      %v1516 = vcvt.s32.f32 %v1453
      %v1517 = vcvt.s32.f32 %v1454
      %v1518 = vcvt.s32.f32 %v1455
      %v1519 = vcvt.s32.f32 %v1456
      %v1520 = vcvt.s32.f32 %v1457
      %v1521 = vcvt.s32.f32 %v1458
      %v1522 = vcvt.s32.f32 %v1459
      %v1523 = vcvt.s32.f32 %v1460
      %v1524 = vcvt.s32.f32 %v1461
      %v1525 = vcvt.s32.f32 %v1462
      %v1526 = vcvt.s32.f32 %v1463
      %v1527 = vcvt.s32.f32 %v1464
      %v1528 = vcvt.s32.f32 %v1465
      %v1529 = vcvt.s32.f32 %v1466
      %v1530 = vcvt.s32.f32 %v1467
      %v1531 = vcvt.s32.f32 %v1468
      %v1532 = vcvt.s32.f32 %v1469
      %v1533 = vcvt.s32.f32 %v1470
      %v1534 = vcvt.s32.f32 %v1471
      %v1535 = vcvt.s32.f32 %v1472
      %v1536 = vcvt.s32.f32 %v1473
      %v1537 = vcvt.s32.f32 %v1474
      %v1538 = vcvt.s32.f32 %v1475
      %v1539 = vcvt.s32.f32 %v1476
      %v1540 = vcvt.s32.f32 %v1477
      %v1541 = vcvt.s32.f32 %v1478
      %v1542 = vcvt.s32.f32 %v1479
      %v1543 = vcvt.s32.f32 %v1480
      %v1544 = vcvt.s32.f32 %v1481
      %v1545 = vcvt.s32.f32 %v1482
      %v1546 = vcvt.s32.f32 %v1483
      %v1547 = vcvt.s32.f32 %v1484
      %v1548 = vcvt.s32.f32 %v1485
      %v1549 = vcvt.s32.f32 %v1486
      %v1550 = vcvt.s32.f32 %v1487
      %v1551 = vcvt.s32.f32 %v1488
      %v1552 = vcvt.s32.f32 %v1489
      %v1553 = vcvt.s32.f32 %v1490
      %v1554 = vcvt.s32.f32 %v1491
      %v1555 = vcvt.s32.f32 %v1492
      %v1556 = vcvt.s32.f32 %v1493
      %v1557 = vcvt.s32.f32 %v1494
      %v1558 = vcvt.s32.f32 %v1495
      %v1559 = vcvt.s32.f32 %v1496
      %v1560 = vcvt.s32.f32 %v1497
      %v1561 = vcvt.s32.f32 %v1498
      %v1562 = vcvt.s32.f32 %v1499
      %v1563 = vcvt.s32.f32 %v1500
      %v1564 = vcvt.s32.f32 %v1501
      %v1565 = vcvt.s32.f32 %v1502
      %v1566 = vcvt.s32.f32 %v1503
      %v1567 = vcvt.s32.f32 %v1504
      %v1568 = vcvt.s32.f32 %v1505
      %v1569 = vcvt.s32.f32 %v1506
      %v1570 = vcvt.s32.f32 %v1507
      %v1571 = vcvt.s32.f32 %v1508
      %v1572 = vcvt.s32.f32 %v1509
      %v1573 = vcvt.s32.f32 %v1510
      %v1574 = vadd.f32 %v1133, %v1511
      %v1575 = vadd.f32 %v1134, %v1512
      %v1576 = vadd.f32 %v1135, %v1513
      %v1577 = vadd.f32 %v1136, %v1514
      %v1578 = vadd.f32 %v1137, %v1515
      %v1579 = vadd.f32 %v1138, %v1516
      %v1580 = vadd.f32 %v1139, %v1517
      %v1581 = vadd.f32 %v1140, %v1518
      %v1582 = vadd.f32 %v1141, %v1519
      %v1583 = vadd.f32 %v1142, %v1520
      %v1584 = vadd.f32 %v1143, %v1521
      %v1585 = vadd.f32 %v1144, %v1522
      %v1586 = vadd.f32 %v1145, %v1523
      %v1587 = vadd.f32 %v1146, %v1524
      %v1588 = vadd.f32 %v1147, %v1525
      %v1589 = vadd.f32 %v1148, %v1526
      %v1590 = vadd.f32 %v1149, %v1527
      %v1591 = vadd.f32 %v1150, %v1528
      %v1592 = vadd.f32 %v1151, %v1529
      %v1593 = vadd.f32 %v1152, %v1530
      %v1594 = vadd.f32 %v1153, %v1531
      %v1595 = vadd.f32 %v1154, %v1532
      %v1596 = vadd.f32 %v1155, %v1533
      %v1597 = vadd.f32 %v1156, %v1534
      %v1598 = vadd.f32 %v1157, %v1535
      %v1599 = vadd.f32 %v1158, %v1536
      %v1600 = vadd.f32 %v1159, %v1537
      %v1601 = vadd.f32 %v1160, %v1538
      %v1602 = vadd.f32 %v1161, %v1539
      %v1603 = vadd.f32 %v1162, %v1540
      %v1604 = vadd.f32 %v1163, %v1541
      %v1605 = vadd.f32 %v1164, %v1542
      %v1606 = vadd.f32 %v1165, %v1543
      %v1607 = vadd.f32 %v1166, %v1544
      %v1608 = vadd.f32 %v1167, %v1545
      %v1609 = vadd.f32 %v1168, %v1546
      %v1610 = vadd.f32 %v1169, %v1547
      %v1611 = vadd.f32 %v1170, %v1548
      %v1612 = vadd.f32 %v1171, %v1549
      %v1613 = vadd.f32 %v1172, %v1550
      %v1614 = vadd.f32 %v1173, %v1551
      %v1615 = vadd.f32 %v1174, %v1552
      %v1616 = vadd.f32 %v1175, %v1553
      %v1617 = vadd.f32 %v1176, %v1554
      %v1618 = vadd.f32 %v1177, %v1555
      %v1619 = vadd.f32 %v1178, %v1556
      %v1620 = vadd.f32 %v1179, %v1557
      %v1621 = vadd.f32 %v1180, %v1558
      %v1622 = vadd.f32 %v1181, %v1559
      %v1623 = vadd.f32 %v1182, %v1560
      %v1624 = vadd.f32 %v1183, %v1561
      %v1625 = vadd.f32 %v1184, %v1562
      %v1626 = vadd.f32 %v1185, %v1563
      %v1627 = vadd.f32 %v1186, %v1564
      %v1628 = vadd.f32 %v1187, %v1565
      %v1629 = vadd.f32 %v1188, %v1566
      %v1630 = vadd.f32 %v1189, %v1567
      %v1631 = vadd.f32 %v1190, %v1568
      %v1632 = vadd.f32 %v1191, %v1569
      %v1633 = vadd.f32 %v1192, %v1570
      %v1634 = vadd.f32 %v1193, %v1571
      %v1635 = vadd.f32 %v1194, %v1572
      %v1636 = vadd.f32 %v1195, %v1573
      %1637 = vset.pattern.permute.xlu0 3
      %1638 = vperm.xlu0 %1637, %v312
      %v1639 = vpop.permute.xlu0 %1638
      %1640 = vset.pattern.permute.xlu0 3
      %1641 = vperm.xlu0 %1640, %v313
      %v1642 = vpop.permute.xlu0 %1641
      %1643 = vset.pattern.permute.xlu0 3
      %1644 = vperm.xlu0 %1643, %v314
      %v1645 = vpop.permute.xlu0 %1644
      %1646 = vset.pattern.permute.xlu0 3
      %1647 = vperm.xlu0 %1646, %v315
      %v1648 = vpop.permute.xlu0 %1647
      %1649 = vset.pattern.permute.xlu0 3
      %1650 = vperm.xlu0 %1649, %v316
      %v1651 = vpop.permute.xlu0 %1650
      %1652 = vset.pattern.permute.xlu0 3
      %1653 = vperm.xlu0 %1652, %v317
      %v1654 = vpop.permute.xlu0 %1653
      %1655 = vset.pattern.permute.xlu0 3
      %1656 = vperm.xlu0 %1655, %v318
      %v1657 = vpop.permute.xlu0 %1656
      %1658 = vset.pattern.permute.xlu0 3
      %1659 = vperm.xlu0 %1658, %v319
      %v1660 = vpop.permute.xlu0 %1659
      %1661 = vset.pattern.permute.xlu0 3
      %1662 = vperm.xlu0 %1661, %v320
      %v1663 = vpop.permute.xlu0 %1662
      %1664 = vset.pattern.permute.xlu0 3
      %1665 = vperm.xlu0 %1664, %v321
      %v1666 = vpop.permute.xlu0 %1665
      %1667 = vset.pattern.permute.xlu0 3
      %1668 = vperm.xlu0 %1667, %v322
      %v1669 = vpop.permute.xlu0 %1668
      %1670 = vset.pattern.permute.xlu0 3
      %1671 = vperm.xlu0 %1670, %v323
      %v1672 = vpop.permute.xlu0 %1671
      %1673 = vset.pattern.permute.xlu0 3
      %1674 = vperm.xlu0 %1673, %v324
      %v1675 = vpop.permute.xlu0 %1674
      %1676 = vset.pattern.permute.xlu0 3
      %1677 = vperm.xlu0 %1676, %v325
      %v1678 = vpop.permute.xlu0 %1677
      %1679 = vset.pattern.permute.xlu0 3
      %1680 = vperm.xlu0 %1679, %v326
      %v1681 = vpop.permute.xlu0 %1680
      %1682 = vset.pattern.permute.xlu0 3
      %1683 = vperm.xlu0 %1682, %v327
      %v1684 = vpop.permute.xlu0 %1683
      %1685 = vset.pattern.permute.xlu0 3
      %1686 = vperm.xlu0 %1685, %v328
      %v1687 = vpop.permute.xlu0 %1686
      %1688 = vset.pattern.permute.xlu0 3
      %1689 = vperm.xlu0 %1688, %v329
      %v1690 = vpop.permute.xlu0 %1689
      %1691 = vset.pattern.permute.xlu0 3
      %1692 = vperm.xlu0 %1691, %v330
      %v1693 = vpop.permute.xlu0 %1692
      %1694 = vset.pattern.permute.xlu0 3
      %1695 = vperm.xlu0 %1694, %v331
      %v1696 = vpop.permute.xlu0 %1695
      %1697 = vset.pattern.permute.xlu0 3
      %1698 = vperm.xlu0 %1697, %v332
      %v1699 = vpop.permute.xlu0 %1698
      %1700 = vset.pattern.permute.xlu0 3
      %1701 = vperm.xlu0 %1700, %v333
      %v1702 = vpop.permute.xlu0 %1701
      %1703 = vset.pattern.permute.xlu0 3
      %1704 = vperm.xlu0 %1703, %v334
      %v1705 = vpop.permute.xlu0 %1704
      %1706 = vset.pattern.permute.xlu0 3
      %1707 = vperm.xlu0 %1706, %v335
      %v1708 = vpop.permute.xlu0 %1707
      %1709 = vset.pattern.permute.xlu0 3
      %1710 = vperm.xlu0 %1709, %v336
      %v1711 = vpop.permute.xlu0 %1710
      %1712 = vset.pattern.permute.xlu0 3
      %1713 = vperm.xlu0 %1712, %v337
      %v1714 = vpop.permute.xlu0 %1713
      %1715 = vset.pattern.permute.xlu0 3
      %1716 = vperm.xlu0 %1715, %v338
      %v1717 = vpop.permute.xlu0 %1716
      %1718 = vset.pattern.permute.xlu0 3
      %1719 = vperm.xlu0 %1718, %v339
      %v1720 = vpop.permute.xlu0 %1719
      %1721 = vset.pattern.permute.xlu0 3
      %1722 = vperm.xlu0 %1721, %v340
      %v1723 = vpop.permute.xlu0 %1722
      %1724 = vset.pattern.permute.xlu0 3
      %1725 = vperm.xlu0 %1724, %v341
      %v1726 = vpop.permute.xlu0 %1725
      %1727 = vset.pattern.permute.xlu0 3
      %1728 = vperm.xlu0 %1727, %v342
      %v1729 = vpop.permute.xlu0 %1728
      %1730 = vset.pattern.permute.xlu0 3
      %1731 = vperm.xlu0 %1730, %v343
      %v1732 = vpop.permute.xlu0 %1731
      %1733 = vset.pattern.permute.xlu0 3
      %1734 = vperm.xlu0 %1733, %v344
      %v1735 = vpop.permute.xlu0 %1734
      %1736 = vset.pattern.permute.xlu0 3
      %1737 = vperm.xlu0 %1736, %v345
      %v1738 = vpop.permute.xlu0 %1737
      %1739 = vset.pattern.permute.xlu0 3
      %1740 = vperm.xlu0 %1739, %v346
      %v1741 = vpop.permute.xlu0 %1740
      %1742 = vset.pattern.permute.xlu0 3
      %1743 = vperm.xlu0 %1742, %v347
      %v1744 = vpop.permute.xlu0 %1743
      %1745 = vset.pattern.permute.xlu0 3
      %1746 = vperm.xlu0 %1745, %v348
      %v1747 = vpop.permute.xlu0 %1746
      %1748 = vset.pattern.permute.xlu0 3
      %1749 = vperm.xlu0 %1748, %v349
      %v1750 = vpop.permute.xlu0 %1749
      %1751 = vset.pattern.permute.xlu0 3
      %1752 = vperm.xlu0 %1751, %v350
      %v1753 = vpop.permute.xlu0 %1752
      %1754 = vset.pattern.permute.xlu0 3
      %1755 = vperm.xlu0 %1754, %v351
      %v1756 = vpop.permute.xlu0 %1755
      %1757 = vset.pattern.permute.xlu0 3
      %1758 = vperm.xlu0 %1757, %v352
      %v1759 = vpop.permute.xlu0 %1758
      %1760 = vset.pattern.permute.xlu0 3
      %1761 = vperm.xlu0 %1760, %v353
      %v1762 = vpop.permute.xlu0 %1761
      %1763 = vset.pattern.permute.xlu0 3
      %1764 = vperm.xlu0 %1763, %v354
      %v1765 = vpop.permute.xlu0 %1764
      %1766 = vset.pattern.permute.xlu0 3
      %1767 = vperm.xlu0 %1766, %v355
      %v1768 = vpop.permute.xlu0 %1767
      %1769 = vset.pattern.permute.xlu0 3
      %1770 = vperm.xlu0 %1769, %v356
      %v1771 = vpop.permute.xlu0 %1770
      %1772 = vset.pattern.permute.xlu0 3
      %1773 = vperm.xlu0 %1772, %v357
      %v1774 = vpop.permute.xlu0 %1773
      %1775 = vset.pattern.permute.xlu0 3
      %1776 = vperm.xlu0 %1775, %v358
      %v1777 = vpop.permute.xlu0 %1776
      %1778 = vset.pattern.permute.xlu0 3
      %1779 = vperm.xlu0 %1778, %v359
      %v1780 = vpop.permute.xlu0 %1779
      %1781 = vset.pattern.permute.xlu0 3
      %1782 = vperm.xlu0 %1781, %v360
      %v1783 = vpop.permute.xlu0 %1782
      %1784 = vset.pattern.permute.xlu0 3
      %1785 = vperm.xlu0 %1784, %v361
      %v1786 = vpop.permute.xlu0 %1785
      %1787 = vset.pattern.permute.xlu0 3
      %1788 = vperm.xlu0 %1787, %v362
      %v1789 = vpop.permute.xlu0 %1788
      %1790 = vset.pattern.permute.xlu0 3
      %1791 = vperm.xlu0 %1790, %v363
      %v1792 = vpop.permute.xlu0 %1791
      %1793 = vset.pattern.permute.xlu0 3
      %1794 = vperm.xlu0 %1793, %v364
      %v1795 = vpop.permute.xlu0 %1794
      %1796 = vset.pattern.permute.xlu0 3
      %1797 = vperm.xlu0 %1796, %v365
      %v1798 = vpop.permute.xlu0 %1797
      %1799 = vset.pattern.permute.xlu0 3
      %1800 = vperm.xlu0 %1799, %v366
      %v1801 = vpop.permute.xlu0 %1800
      %1802 = vset.pattern.permute.xlu0 3
      %1803 = vperm.xlu0 %1802, %v367
      %v1804 = vpop.permute.xlu0 %1803
      %1805 = vset.pattern.permute.xlu0 3
      %1806 = vperm.xlu0 %1805, %v368
      %v1807 = vpop.permute.xlu0 %1806
      %1808 = vset.pattern.permute.xlu0 3
      %1809 = vperm.xlu0 %1808, %v369
      %v1810 = vpop.permute.xlu0 %1809
      %1811 = vset.pattern.permute.xlu0 3
      %1812 = vperm.xlu0 %1811, %v370
      %v1813 = vpop.permute.xlu0 %1812
      %1814 = vset.pattern.permute.xlu0 3
      %1815 = vperm.xlu0 %1814, %v371
      %v1816 = vpop.permute.xlu0 %1815
      %1817 = vset.pattern.permute.xlu0 3
      %1818 = vperm.xlu0 %1817, %v372
      %v1819 = vpop.permute.xlu0 %1818
      %1820 = vset.pattern.permute.xlu0 3
      %1821 = vperm.xlu0 %1820, %v373
      %v1822 = vpop.permute.xlu0 %1821
      %1823 = vset.pattern.permute.xlu0 3
      %1824 = vperm.xlu0 %1823, %v374
      %v1825 = vpop.permute.xlu0 %1824
      %vm1826 = vcmp.eq.s32.totalorder %v1639, %v376
      %vm1827 = vcmp.eq.s32.totalorder %v1642, %v376
      %vm1828 = vcmp.eq.s32.totalorder %v1645, %v376
      %vm1829 = vcmp.eq.s32.totalorder %v1648, %v376
      %vm1830 = vcmp.eq.s32.totalorder %v1651, %v376
      %vm1831 = vcmp.eq.s32.totalorder %v1654, %v376
      %vm1832 = vcmp.eq.s32.totalorder %v1657, %v376
      %vm1833 = vcmp.eq.s32.totalorder %v1660, %v376
      %vm1834 = vcmp.eq.s32.totalorder %v1663, %v376
      %vm1835 = vcmp.eq.s32.totalorder %v1666, %v376
      %vm1836 = vcmp.eq.s32.totalorder %v1669, %v376
      %vm1837 = vcmp.eq.s32.totalorder %v1672, %v376
      %vm1838 = vcmp.eq.s32.totalorder %v1675, %v376
      %vm1839 = vcmp.eq.s32.totalorder %v1678, %v376
      %vm1840 = vcmp.eq.s32.totalorder %v1681, %v376
      %vm1841 = vcmp.eq.s32.totalorder %v1684, %v376
      %vm1842 = vcmp.eq.s32.totalorder %v1687, %v376
      %vm1843 = vcmp.eq.s32.totalorder %v1690, %v376
      %vm1844 = vcmp.eq.s32.totalorder %v1693, %v376
      %vm1845 = vcmp.eq.s32.totalorder %v1696, %v376
      %vm1846 = vcmp.eq.s32.totalorder %v1699, %v376
      %vm1847 = vcmp.eq.s32.totalorder %v1702, %v376
      %vm1848 = vcmp.eq.s32.totalorder %v1705, %v376
      %vm1849 = vcmp.eq.s32.totalorder %v1708, %v376
      %vm1850 = vcmp.eq.s32.totalorder %v1711, %v376
      %vm1851 = vcmp.eq.s32.totalorder %v1714, %v376
      %vm1852 = vcmp.eq.s32.totalorder %v1717, %v376
      %vm1853 = vcmp.eq.s32.totalorder %v1720, %v376
      %vm1854 = vcmp.eq.s32.totalorder %v1723, %v376
      %vm1855 = vcmp.eq.s32.totalorder %v1726, %v376
      %vm1856 = vcmp.eq.s32.totalorder %v1729, %v376
      %vm1857 = vcmp.eq.s32.totalorder %v1732, %v376
      %vm1858 = vcmp.eq.s32.totalorder %v1735, %v376
      %vm1859 = vcmp.eq.s32.totalorder %v1738, %v376
      %vm1860 = vcmp.eq.s32.totalorder %v1741, %v376
      %vm1861 = vcmp.eq.s32.totalorder %v1744, %v376
      %vm1862 = vcmp.eq.s32.totalorder %v1747, %v376
      %vm1863 = vcmp.eq.s32.totalorder %v1750, %v376
      %vm1864 = vcmp.eq.s32.totalorder %v1753, %v376
      %vm1865 = vcmp.eq.s32.totalorder %v1756, %v376
      %vm1866 = vcmp.eq.s32.totalorder %v1759, %v376
      %vm1867 = vcmp.eq.s32.totalorder %v1762, %v376
      %vm1868 = vcmp.eq.s32.totalorder %v1765, %v376
      %vm1869 = vcmp.eq.s32.totalorder %v1768, %v376
      %vm1870 = vcmp.eq.s32.totalorder %v1771, %v376
      %vm1871 = vcmp.eq.s32.totalorder %v1774, %v376
      %vm1872 = vcmp.eq.s32.totalorder %v1777, %v376
      %vm1873 = vcmp.eq.s32.totalorder %v1780, %v376
      %vm1874 = vcmp.eq.s32.totalorder %v1783, %v376
      %vm1875 = vcmp.eq.s32.totalorder %v1786, %v376
      %vm1876 = vcmp.eq.s32.totalorder %v1789, %v376
      %vm1877 = vcmp.eq.s32.totalorder %v1792, %v376
      %vm1878 = vcmp.eq.s32.totalorder %v1795, %v376
      %vm1879 = vcmp.eq.s32.totalorder %v1798, %v376
      %vm1880 = vcmp.eq.s32.totalorder %v1801, %v376
      %vm1881 = vcmp.eq.s32.totalorder %v1804, %v376
      %vm1882 = vcmp.eq.s32.totalorder %v1807, %v376
      %vm1883 = vcmp.eq.s32.totalorder %v1810, %v376
      %vm1884 = vcmp.eq.s32.totalorder %v1813, %v376
      %vm1885 = vcmp.eq.s32.totalorder %v1816, %v376
      %vm1886 = vcmp.eq.s32.totalorder %v1819, %v376
      %vm1887 = vcmp.eq.s32.totalorder %v1822, %v376
      %vm1888 = vcmp.eq.s32.totalorder %v1825, %v376
      %v1889 = vsel %vm1826, 1, 0
      %v1890 = vsel %vm1827, 1, 0
      %v1891 = vsel %vm1828, 1, 0
      %v1892 = vsel %vm1829, 1, 0
      %v1893 = vsel %vm1830, 1, 0
      %v1894 = vsel %vm1831, 1, 0
      %v1895 = vsel %vm1832, 1, 0
      %v1896 = vsel %vm1833, 1, 0
      %v1897 = vsel %vm1834, 1, 0
      %v1898 = vsel %vm1835, 1, 0
      %v1899 = vsel %vm1836, 1, 0
      %v1900 = vsel %vm1837, 1, 0
      %v1901 = vsel %vm1838, 1, 0
      %v1902 = vsel %vm1839, 1, 0
      %v1903 = vsel %vm1840, 1, 0
      %v1904 = vsel %vm1841, 1, 0
      %v1905 = vsel %vm1842, 1, 0
      %v1906 = vsel %vm1843, 1, 0
      %v1907 = vsel %vm1844, 1, 0
      %v1908 = vsel %vm1845, 1, 0
      %v1909 = vsel %vm1846, 1, 0
      %v1910 = vsel %vm1847, 1, 0
      %v1911 = vsel %vm1848, 1, 0
      %v1912 = vsel %vm1849, 1, 0
      %v1913 = vsel %vm1850, 1, 0
      %v1914 = vsel %vm1851, 1, 0
      %v1915 = vsel %vm1852, 1, 0
      %v1916 = vsel %vm1853, 1, 0
      %v1917 = vsel %vm1854, 1, 0
      %v1918 = vsel %vm1855, 1, 0
      %v1919 = vsel %vm1856, 1, 0
      %v1920 = vsel %vm1857, 1, 0
      %v1921 = vsel %vm1858, 1, 0
      %v1922 = vsel %vm1859, 1, 0
      %v1923 = vsel %vm1860, 1, 0
      %v1924 = vsel %vm1861, 1, 0
      %v1925 = vsel %vm1862, 1, 0
      %v1926 = vsel %vm1863, 1, 0
      %v1927 = vsel %vm1864, 1, 0
      %v1928 = vsel %vm1865, 1, 0
      %v1929 = vsel %vm1866, 1, 0
      %v1930 = vsel %vm1867, 1, 0
      %v1931 = vsel %vm1868, 1, 0
      %v1932 = vsel %vm1869, 1, 0
      %v1933 = vsel %vm1870, 1, 0
      %v1934 = vsel %vm1871, 1, 0
      %v1935 = vsel %vm1872, 1, 0
      %v1936 = vsel %vm1873, 1, 0
      %v1937 = vsel %vm1874, 1, 0
      %v1938 = vsel %vm1875, 1, 0
      %v1939 = vsel %vm1876, 1, 0
      %v1940 = vsel %vm1877, 1, 0
      %v1941 = vsel %vm1878, 1, 0
      %v1942 = vsel %vm1879, 1, 0
      %v1943 = vsel %vm1880, 1, 0
      %v1944 = vsel %vm1881, 1, 0
      %v1945 = vsel %vm1882, 1, 0
      %v1946 = vsel %vm1883, 1, 0
      %v1947 = vsel %vm1884, 1, 0
      %v1948 = vsel %vm1885, 1, 0
      %v1949 = vsel %vm1886, 1, 0
      %v1950 = vsel %vm1887, 1, 0
      %v1951 = vsel %vm1888, 1, 0
      %v1952 = vcvt.s32.f32 %v1889
      %v1953 = vcvt.s32.f32 %v1890
      %v1954 = vcvt.s32.f32 %v1891
      %v1955 = vcvt.s32.f32 %v1892
      %v1956 = vcvt.s32.f32 %v1893
      %v1957 = vcvt.s32.f32 %v1894
      %v1958 = vcvt.s32.f32 %v1895
      %v1959 = vcvt.s32.f32 %v1896
      %v1960 = vcvt.s32.f32 %v1897
      %v1961 = vcvt.s32.f32 %v1898
      %v1962 = vcvt.s32.f32 %v1899
      %v1963 = vcvt.s32.f32 %v1900
      %v1964 = vcvt.s32.f32 %v1901
      %v1965 = vcvt.s32.f32 %v1902
      %v1966 = vcvt.s32.f32 %v1903
      %v1967 = vcvt.s32.f32 %v1904
      %v1968 = vcvt.s32.f32 %v1905
      %v1969 = vcvt.s32.f32 %v1906
      %v1970 = vcvt.s32.f32 %v1907
      %v1971 = vcvt.s32.f32 %v1908
      %v1972 = vcvt.s32.f32 %v1909
      %v1973 = vcvt.s32.f32 %v1910
      %v1974 = vcvt.s32.f32 %v1911
      %v1975 = vcvt.s32.f32 %v1912
      %v1976 = vcvt.s32.f32 %v1913
      %v1977 = vcvt.s32.f32 %v1914
      %v1978 = vcvt.s32.f32 %v1915
      %v1979 = vcvt.s32.f32 %v1916
      %v1980 = vcvt.s32.f32 %v1917
      %v1981 = vcvt.s32.f32 %v1918
      %v1982 = vcvt.s32.f32 %v1919
      %v1983 = vcvt.s32.f32 %v1920
      %v1984 = vcvt.s32.f32 %v1921
      %v1985 = vcvt.s32.f32 %v1922
      %v1986 = vcvt.s32.f32 %v1923
      %v1987 = vcvt.s32.f32 %v1924
      %v1988 = vcvt.s32.f32 %v1925
      %v1989 = vcvt.s32.f32 %v1926
      %v1990 = vcvt.s32.f32 %v1927
      %v1991 = vcvt.s32.f32 %v1928
      %v1992 = vcvt.s32.f32 %v1929
      %v1993 = vcvt.s32.f32 %v1930
      %v1994 = vcvt.s32.f32 %v1931
      %v1995 = vcvt.s32.f32 %v1932
      %v1996 = vcvt.s32.f32 %v1933
      %v1997 = vcvt.s32.f32 %v1934
      %v1998 = vcvt.s32.f32 %v1935
      %v1999 = vcvt.s32.f32 %v1936
      %v2000 = vcvt.s32.f32 %v1937
      %v2001 = vcvt.s32.f32 %v1938
      %v2002 = vcvt.s32.f32 %v1939
      %v2003 = vcvt.s32.f32 %v1940
      %v2004 = vcvt.s32.f32 %v1941
      %v2005 = vcvt.s32.f32 %v1942
      %v2006 = vcvt.s32.f32 %v1943
      %v2007 = vcvt.s32.f32 %v1944
      %v2008 = vcvt.s32.f32 %v1945
      %v2009 = vcvt.s32.f32 %v1946
      %v2010 = vcvt.s32.f32 %v1947
      %v2011 = vcvt.s32.f32 %v1948
      %v2012 = vcvt.s32.f32 %v1949
      %v2013 = vcvt.s32.f32 %v1950
      %v2014 = vcvt.s32.f32 %v1951
      %v2015 = vadd.f32 %v1574, %v1952
      %v2016 = vadd.f32 %v1575, %v1953
      %v2017 = vadd.f32 %v1576, %v1954
      %v2018 = vadd.f32 %v1577, %v1955
      %v2019 = vadd.f32 %v1578, %v1956
      %v2020 = vadd.f32 %v1579, %v1957
      %v2021 = vadd.f32 %v1580, %v1958
      %v2022 = vadd.f32 %v1581, %v1959
      %v2023 = vadd.f32 %v1582, %v1960
      %v2024 = vadd.f32 %v1583, %v1961
      %v2025 = vadd.f32 %v1584, %v1962
      %v2026 = vadd.f32 %v1585, %v1963
      %v2027 = vadd.f32 %v1586, %v1964
      %v2028 = vadd.f32 %v1587, %v1965
      %v2029 = vadd.f32 %v1588, %v1966
      %v2030 = vadd.f32 %v1589, %v1967
      %v2031 = vadd.f32 %v1590, %v1968
      %v2032 = vadd.f32 %v1591, %v1969
      %v2033 = vadd.f32 %v1592, %v1970
      %v2034 = vadd.f32 %v1593, %v1971
      %v2035 = vadd.f32 %v1594, %v1972
      %v2036 = vadd.f32 %v1595, %v1973
      %v2037 = vadd.f32 %v1596, %v1974
      %v2038 = vadd.f32 %v1597, %v1975
      %v2039 = vadd.f32 %v1598, %v1976
      %v2040 = vadd.f32 %v1599, %v1977
      %v2041 = vadd.f32 %v1600, %v1978
      %v2042 = vadd.f32 %v1601, %v1979
      %v2043 = vadd.f32 %v1602, %v1980
      %v2044 = vadd.f32 %v1603, %v1981
      %v2045 = vadd.f32 %v1604, %v1982
      %v2046 = vadd.f32 %v1605, %v1983
      %v2047 = vadd.f32 %v1606, %v1984
      %v2048 = vadd.f32 %v1607, %v1985
      %v2049 = vadd.f32 %v1608, %v1986
      %v2050 = vadd.f32 %v1609, %v1987
      %v2051 = vadd.f32 %v1610, %v1988
      %v2052 = vadd.f32 %v1611, %v1989
      %v2053 = vadd.f32 %v1612, %v1990
      %v2054 = vadd.f32 %v1613, %v1991
      %v2055 = vadd.f32 %v1614, %v1992
      %v2056 = vadd.f32 %v1615, %v1993
      %v2057 = vadd.f32 %v1616, %v1994
      %v2058 = vadd.f32 %v1617, %v1995
      %v2059 = vadd.f32 %v1618, %v1996
      %v2060 = vadd.f32 %v1619, %v1997
      %v2061 = vadd.f32 %v1620, %v1998
      %v2062 = vadd.f32 %v1621, %v1999
      %v2063 = vadd.f32 %v1622, %v2000
      %v2064 = vadd.f32 %v1623, %v2001
      %v2065 = vadd.f32 %v1624, %v2002
      %v2066 = vadd.f32 %v1625, %v2003
      %v2067 = vadd.f32 %v1626, %v2004
      %v2068 = vadd.f32 %v1627, %v2005
      %v2069 = vadd.f32 %v1628, %v2006
      %v2070 = vadd.f32 %v1629, %v2007
      %v2071 = vadd.f32 %v1630, %v2008
      %v2072 = vadd.f32 %v1631, %v2009
      %v2073 = vadd.f32 %v1632, %v2010
      %v2074 = vadd.f32 %v1633, %v2011
      %v2075 = vadd.f32 %v1634, %v2012
      %v2076 = vadd.f32 %v1635, %v2013
      %v2077 = vadd.f32 %v1636, %v2014
      %v2078 = vpack.c.bf16 %v2016, %v2015
      %v2079 = vpack.c.bf16 %v2018, %v2017
      %v2080 = vpack.c.bf16 %v2020, %v2019
      %v2081 = vpack.c.bf16 %v2022, %v2021
      %v2082 = vpack.c.bf16 %v2024, %v2023
      %v2083 = vpack.c.bf16 %v2026, %v2025
      %v2084 = vpack.c.bf16 %v2028, %v2027
      %v2085 = vpack.c.bf16 %v2030, %v2029
      %v2086 = vpack.c.bf16 %v2032, %v2031
      %v2087 = vpack.c.bf16 %v2034, %v2033
      %v2088 = vpack.c.bf16 %v2036, %v2035
      %v2089 = vpack.c.bf16 %v2038, %v2037
      %v2090 = vpack.c.bf16 %v2040, %v2039
      %v2091 = vpack.c.bf16 %v2042, %v2041
      %v2092 = vpack.c.bf16 %v2044, %v2043
      %v2093 = vpack.c.bf16 %v2046, %v2045
      %v2094 = vpack.c.bf16 %v2048, %v2047
      %v2095 = vpack.c.bf16 %v2050, %v2049
      %v2096 = vpack.c.bf16 %v2052, %v2051
      %v2097 = vpack.c.bf16 %v2054, %v2053
      %v2098 = vpack.c.bf16 %v2056, %v2055
      %v2099 = vpack.c.bf16 %v2058, %v2057
      %v2100 = vpack.c.bf16 %v2060, %v2059
      %v2101 = vpack.c.bf16 %v2062, %v2061
      %v2102 = vpack.c.bf16 %v2064, %v2063
      %v2103 = vpack.c.bf16 %v2066, %v2065
      %v2104 = vpack.c.bf16 %v2068, %v2067
      %v2105 = vpack.c.bf16 %v2070, %v2069
      %v2106 = vpack.c.bf16 %v2072, %v2071
      %v2107 = vpack.c.bf16 %v2074, %v2073
      %v2108 = vpack.c.bf16 %v2076, %v2075
      %v2109 = vpack.c.bf16 %v2077, %v2077
      %v2110 = vld [vmem:[%s1] sm:$0xff]
      %v2111 = vld [vmem:[%s1 + $0x8] sm:$0xff]
      %v2112 = vld [vmem:[%s1 + $0x10] sm:$0xff]
      %v2113 = vld [vmem:[%s1 + $0x18] sm:$0xff]
      %v2114 = vld [vmem:[%s1 + $0x20] sm:$0xff]
      %v2115 = vld [vmem:[%s1 + $0x28] sm:$0xff]
      %v2116 = vld [vmem:[%s1 + $0x30] sm:$0xff]
      %v2117 = vld [vmem:[%s1 + $0x38] sm:$0xff]
      %v2118 = vld [vmem:[%s1 + $0x40] sm:$0xff]
      %v2119 = vld [vmem:[%s1 + $0x48] sm:$0xff]
      %v2120 = vld [vmem:[%s1 + $0x50] sm:$0xff]
      %v2121 = vld [vmem:[%s1 + $0x58] sm:$0xff]
      %v2122 = vld [vmem:[%s1 + $0x60] sm:$0xff]
      %v2123 = vld [vmem:[%s1 + $0x68] sm:$0xff]
      %v2124 = vld [vmem:[%s1 + $0x70] sm:$0xff]
      %v2125 = vld [vmem:[%s1 + $0x78] sm:$0xff]
      %v2142 = vunpack.c.l.b16 %v2110
      %v2143 = vunpack.c.h.b16 %v2110
      %v2144 = vunpack.c.l.b16 %v2111
      %v2145 = vunpack.c.h.b16 %v2111
      %v2146 = vunpack.c.l.b16 %v2112
      %v2147 = vunpack.c.h.b16 %v2112
      %v2148 = vunpack.c.l.b16 %v2113
      %v2149 = vunpack.c.h.b16 %v2113
      %v2150 = vunpack.c.l.b16 %v2114
      %v2151 = vunpack.c.h.b16 %v2114
      %v2152 = vunpack.c.l.b16 %v2115
      %v2153 = vunpack.c.h.b16 %v2115
      %v2154 = vunpack.c.l.b16 %v2116
      %v2155 = vunpack.c.h.b16 %v2116
      %v2156 = vunpack.c.l.b16 %v2117
      %v2157 = vunpack.c.h.b16 %v2117
      %v2158 = vunpack.c.l.b16 %v2118
      %v2159 = vunpack.c.h.b16 %v2118
      %v2160 = vunpack.c.l.b16 %v2119
      %v2161 = vunpack.c.h.b16 %v2119
      %v2162 = vunpack.c.l.b16 %v2120
      %v2163 = vunpack.c.h.b16 %v2120
      %v2164 = vunpack.c.l.b16 %v2121
      %v2165 = vunpack.c.h.b16 %v2121
      %v2166 = vunpack.c.l.b16 %v2122
      %v2167 = vunpack.c.h.b16 %v2122
      %v2168 = vunpack.c.l.b16 %v2123
      %v2169 = vunpack.c.h.b16 %v2123
      %v2170 = vunpack.c.l.b16 %v2124
      %v2171 = vunpack.c.h.b16 %v2124
      %v2172 = vunpack.c.l.b16 %v2125
      %v2173 = vunpack.c.h.b16 %v2125
      %v2174 = vpack.c.b16 %v2144, %v2142
      %v2175 = vpack.c.b16 %v2145, %v2143
      %v2176 = vpack.c.b16 %v2148, %v2146
      %v2177 = vpack.c.b16 %v2149, %v2147
      %v2178 = vpack.c.b16 %v2152, %v2150
      %v2179 = vpack.c.b16 %v2153, %v2151
      %v2180 = vpack.c.b16 %v2156, %v2154
      %v2181 = vpack.c.b16 %v2157, %v2155
      %v2182 = vpack.c.b16 %v2160, %v2158
      %v2183 = vpack.c.b16 %v2161, %v2159
      %v2184 = vpack.c.b16 %v2164, %v2162
      %v2185 = vpack.c.b16 %v2165, %v2163
      %v2186 = vpack.c.b16 %v2168, %v2166
      %v2187 = vpack.c.b16 %v2169, %v2167
      %v2188 = vpack.c.b16 %v2172, %v2170
      %v2189 = vpack.c.b16 %v2173, %v2171
      %2206 = vmatprep.subr.bf16.mxu0 %v2175
      %2207 = vmatpush1.bf16.msra.mxu0 %v2174
      %2208 = vmatprep.subr.bf16.mxu0 %v2177
      %2209 = vmatpush1.bf16.msra.mxu0 %v2176
      %2210 = vmatprep.subr.bf16.mxu0 %v2179
      %2211 = vmatpush1.bf16.msra.mxu0 %v2178
      %2212 = vmatprep.subr.bf16.mxu0 %v2181
      %2213 = vmatpush1.bf16.msra.mxu0 %v2180
      %2214 = vmatprep.subr.bf16.mxu0 %v2183
      %2215 = vmatpush1.bf16.msra.mxu0 %v2182
      %2216 = vmatprep.subr.bf16.mxu0 %v2185
      %2217 = vmatpush1.bf16.msra.mxu0 %v2184
      %2218 = vmatprep.subr.bf16.mxu0 %v2187
      %2219 = vmatpush1.bf16.msra.mxu0 %v2186
      %2220 = vmatprep.subr.bf16.mxu0 %v2189
      %2221 = vmatpush1.bf16.msra.mxu0 %v2188
      %2222 = vmatprep.subr.bf16.mxu0 0
      %2223 = vmatpush1.bf16.msra.mxu0 0
      %2224 = vmatprep.subr.bf16.mxu0 0
      %2225 = vmatpush1.bf16.msra.mxu0 0
      %2226 = vmatprep.subr.bf16.mxu0 0
      %2227 = vmatpush1.bf16.msra.mxu0 0
      %2228 = vmatprep.subr.bf16.mxu0 0
      %2229 = vmatpush1.bf16.msra.mxu0 0
      %2230 = vmatprep.subr.bf16.mxu0 0
      %2231 = vmatpush1.bf16.msra.mxu0 0
      %2232 = vmatprep.subr.bf16.mxu0 0
      %2233 = vmatpush1.bf16.msra.mxu0 0
      %2234 = vmatprep.subr.bf16.mxu0 0
      %2235 = vmatpush1.bf16.msra.mxu0 0
      %2236 = vmatprep.subr.bf16.mxu0 0
      %2237 = vmatpush1.bf16.msra.mxu0 0
      %2238 = vmatprep.mubr.bf16.mxu0 0
      %2239 = vmatmul.mubr.bf16.gmra.mrb[0].mxu0 %v2078
      %v2240 = vpop.f32.mrb[0].mxu0
      %v2241 = vadd.f32 0.0, %v2240
      %v2242 = vpop.f32.mrb[0].mxu0
      %v2243 = vadd.f32 0.0, %v2242
      %v2244 = vpop.f32.mrb[0].mxu0
      %v2245 = vadd.f32 0.0, %v2244
      %v2246 = vpop.f32.mrb[0].mxu0
      %v2247 = vadd.f32 0.0, %v2246
      %2248 = vmatprep.mubr.bf16.mxu0 0
      %2249 = vmatmul.mubr.bf16.gmra.mrb[0].mxu0 %v2079
      %v2250 = vpop.f32.mrb[0].mxu0
      %v2251 = vadd.f32 0.0, %v2250
      %v2252 = vpop.f32.mrb[0].mxu0
      %v2253 = vadd.f32 0.0, %v2252
      %v2254 = vpop.f32.mrb[0].mxu0
      %v2255 = vadd.f32 0.0, %v2254
      %v2256 = vpop.f32.mrb[0].mxu0
      %v2257 = vadd.f32 0.0, %v2256
      %2258 = vmatprep.mubr.bf16.mxu0 0
      %2259 = vmatmul.mubr.bf16.gmra.mrb[0].mxu0 %v2080
      %v2260 = vpop.f32.mrb[0].mxu0
      %v2261 = vadd.f32 0.0, %v2260
      %v2262 = vpop.f32.mrb[0].mxu0
      %v2263 = vadd.f32 0.0, %v2262
      %v2264 = vpop.f32.mrb[0].mxu0
      %v2265 = vadd.f32 0.0, %v2264
      %v2266 = vpop.f32.mrb[0].mxu0
      %v2267 = vadd.f32 0.0, %v2266
      %2268 = vmatprep.mubr.bf16.mxu0 0
      %2269 = vmatmul.mubr.bf16.gmra.mrb[0].mxu0 %v2081
      %v2270 = vpop.f32.mrb[0].mxu0
      %v2271 = vadd.f32 0.0, %v2270
      %v2272 = vpop.f32.mrb[0].mxu0
      %v2273 = vadd.f32 0.0, %v2272
      %v2274 = vpop.f32.mrb[0].mxu0
      %v2275 = vadd.f32 0.0, %v2274
      %v2276 = vpop.f32.mrb[0].mxu0
      %v2277 = vadd.f32 0.0, %v2276
      %2278 = vmatprep.mubr.bf16.mxu0 0
      %2279 = vmatmul.mubr.bf16.gmra.mrb[0].mxu0 %v2082
      %v2280 = vpop.f32.mrb[0].mxu0
      %v2281 = vadd.f32 0.0, %v2280
      %v2282 = vpop.f32.mrb[0].mxu0
      %v2283 = vadd.f32 0.0, %v2282
      %v2284 = vpop.f32.mrb[0].mxu0
      %v2285 = vadd.f32 0.0, %v2284
      %v2286 = vpop.f32.mrb[0].mxu0
      %v2287 = vadd.f32 0.0, %v2286
      %2288 = vmatprep.mubr.bf16.mxu0 0
      %2289 = vmatmul.mubr.bf16.gmra.mrb[0].mxu0 %v2083
      %v2290 = vpop.f32.mrb[0].mxu0
      %v2291 = vadd.f32 0.0, %v2290
      %v2292 = vpop.f32.mrb[0].mxu0
      %v2293 = vadd.f32 0.0, %v2292
      %v2294 = vpop.f32.mrb[0].mxu0
      %v2295 = vadd.f32 0.0, %v2294
      %v2296 = vpop.f32.mrb[0].mxu0
      %v2297 = vadd.f32 0.0, %v2296
      %2298 = vmatprep.mubr.bf16.mxu0 0
      %2299 = vmatmul.mubr.bf16.gmra.mrb[0].mxu0 %v2084
      %v2300 = vpop.f32.mrb[0].mxu0
      %v2301 = vadd.f32 0.0, %v2300
      %v2302 = vpop.f32.mrb[0].mxu0
      %v2303 = vadd.f32 0.0, %v2302
      %v2304 = vpop.f32.mrb[0].mxu0
      %v2305 = vadd.f32 0.0, %v2304
      %v2306 = vpop.f32.mrb[0].mxu0
      %v2307 = vadd.f32 0.0, %v2306
      %2308 = vmatprep.mubr.bf16.mxu0 0
      %2309 = vmatmul.mubr.bf16.gmra.mrb[0].mxu0 %v2085
      %v2310 = vpop.f32.mrb[0].mxu0
      %v2311 = vadd.f32 0.0, %v2310
      %v2312 = vpop.f32.mrb[0].mxu0
      %v2313 = vadd.f32 0.0, %v2312
      %v2314 = vpop.f32.mrb[0].mxu0
      %v2315 = vadd.f32 0.0, %v2314
      %v2316 = vpop.f32.mrb[0].mxu0
      %v2317 = vadd.f32 0.0, %v2316
      %2318 = vmatprep.mubr.bf16.mxu0 0
      %2319 = vmatmul.mubr.bf16.gmra.mrb[0].mxu0 %v2086
      %v2320 = vpop.f32.mrb[0].mxu0
      %v2321 = vadd.f32 0.0, %v2320
      %v2322 = vpop.f32.mrb[0].mxu0
      %v2323 = vadd.f32 0.0, %v2322
      %v2324 = vpop.f32.mrb[0].mxu0
      %v2325 = vadd.f32 0.0, %v2324
      %v2326 = vpop.f32.mrb[0].mxu0
      %v2327 = vadd.f32 0.0, %v2326
      %2328 = vmatprep.mubr.bf16.mxu0 0
      %2329 = vmatmul.mubr.bf16.gmra.mrb[0].mxu0 %v2087
      %v2330 = vpop.f32.mrb[0].mxu0
      %v2331 = vadd.f32 0.0, %v2330
      %v2332 = vpop.f32.mrb[0].mxu0
      %v2333 = vadd.f32 0.0, %v2332
      %v2334 = vpop.f32.mrb[0].mxu0
      %v2335 = vadd.f32 0.0, %v2334
      %v2336 = vpop.f32.mrb[0].mxu0
      %v2337 = vadd.f32 0.0, %v2336
      %2338 = vmatprep.mubr.bf16.mxu0 0
      %2339 = vmatmul.mubr.bf16.gmra.mrb[0].mxu0 %v2088
      %v2340 = vpop.f32.mrb[0].mxu0
      %v2341 = vadd.f32 0.0, %v2340
      %v2342 = vpop.f32.mrb[0].mxu0
      %v2343 = vadd.f32 0.0, %v2342
      %v2344 = vpop.f32.mrb[0].mxu0
      %v2345 = vadd.f32 0.0, %v2344
      %v2346 = vpop.f32.mrb[0].mxu0
      %v2347 = vadd.f32 0.0, %v2346
      %2348 = vmatprep.mubr.bf16.mxu0 0
      %2349 = vmatmul.mubr.bf16.gmra.mrb[0].mxu0 %v2089
      %v2350 = vpop.f32.mrb[0].mxu0
      %v2351 = vadd.f32 0.0, %v2350
      %v2352 = vpop.f32.mrb[0].mxu0
      %v2353 = vadd.f32 0.0, %v2352
      %v2354 = vpop.f32.mrb[0].mxu0
      %v2355 = vadd.f32 0.0, %v2354
      %v2356 = vpop.f32.mrb[0].mxu0
      %v2357 = vadd.f32 0.0, %v2356
      %2358 = vmatprep.mubr.bf16.mxu0 0
      %2359 = vmatmul.mubr.bf16.gmra.mrb[0].mxu0 %v2090
      %v2360 = vpop.f32.mrb[0].mxu0
      %v2361 = vadd.f32 0.0, %v2360
      %v2362 = vpop.f32.mrb[0].mxu0
      %v2363 = vadd.f32 0.0, %v2362
      %v2364 = vpop.f32.mrb[0].mxu0
      %v2365 = vadd.f32 0.0, %v2364
      %v2366 = vpop.f32.mrb[0].mxu0
      %v2367 = vadd.f32 0.0, %v2366
      %2368 = vmatprep.mubr.bf16.mxu0 0
      %2369 = vmatmul.mubr.bf16.gmra.mrb[0].mxu0 %v2091
      %v2370 = vpop.f32.mrb[0].mxu0
      %v2371 = vadd.f32 0.0, %v2370
      %v2372 = vpop.f32.mrb[0].mxu0
      %v2373 = vadd.f32 0.0, %v2372
      %v2374 = vpop.f32.mrb[0].mxu0
      %v2375 = vadd.f32 0.0, %v2374
      %v2376 = vpop.f32.mrb[0].mxu0
      %v2377 = vadd.f32 0.0, %v2376
      %2378 = vmatprep.mubr.bf16.mxu0 0
      %2379 = vmatmul.mubr.bf16.gmra.mrb[0].mxu0 %v2092
      %v2380 = vpop.f32.mrb[0].mxu0
      %v2381 = vadd.f32 0.0, %v2380
      %v2382 = vpop.f32.mrb[0].mxu0
      %v2383 = vadd.f32 0.0, %v2382
      %v2384 = vpop.f32.mrb[0].mxu0
      %v2385 = vadd.f32 0.0, %v2384
      %v2386 = vpop.f32.mrb[0].mxu0
      %v2387 = vadd.f32 0.0, %v2386
      %2388 = vmatprep.mubr.bf16.mxu0 0
      %2389 = vmatmul.mubr.bf16.gmra.mrb[0].mxu0 %v2093
      %v2390 = vpop.f32.mrb[0].mxu0
      %v2391 = vadd.f32 0.0, %v2390
      %v2392 = vpop.f32.mrb[0].mxu0
      %v2393 = vadd.f32 0.0, %v2392
      %v2394 = vpop.f32.mrb[0].mxu0
      %v2395 = vadd.f32 0.0, %v2394
      %v2396 = vpop.f32.mrb[0].mxu0
      %v2397 = vadd.f32 0.0, %v2396
      %2398 = vmatprep.mubr.bf16.mxu0 0
      %2399 = vmatmul.mubr.bf16.gmra.mrb[0].mxu0 %v2094
      %v2400 = vpop.f32.mrb[0].mxu0
      %v2401 = vadd.f32 0.0, %v2400
      %v2402 = vpop.f32.mrb[0].mxu0
      %v2403 = vadd.f32 0.0, %v2402
      %v2404 = vpop.f32.mrb[0].mxu0
      %v2405 = vadd.f32 0.0, %v2404
      %v2406 = vpop.f32.mrb[0].mxu0
      %v2407 = vadd.f32 0.0, %v2406
      %2408 = vmatprep.mubr.bf16.mxu0 0
      %2409 = vmatmul.mubr.bf16.gmra.mrb[0].mxu0 %v2095
      %v2410 = vpop.f32.mrb[0].mxu0
      %v2411 = vadd.f32 0.0, %v2410
      %v2412 = vpop.f32.mrb[0].mxu0
      %v2413 = vadd.f32 0.0, %v2412
      %v2414 = vpop.f32.mrb[0].mxu0
      %v2415 = vadd.f32 0.0, %v2414
      %v2416 = vpop.f32.mrb[0].mxu0
      %v2417 = vadd.f32 0.0, %v2416
      %2418 = vmatprep.mubr.bf16.mxu0 0
      %2419 = vmatmul.mubr.bf16.gmra.mrb[0].mxu0 %v2096
      %v2420 = vpop.f32.mrb[0].mxu0
      %v2421 = vadd.f32 0.0, %v2420
      %v2422 = vpop.f32.mrb[0].mxu0
      %v2423 = vadd.f32 0.0, %v2422
      %v2424 = vpop.f32.mrb[0].mxu0
      %v2425 = vadd.f32 0.0, %v2424
      %v2426 = vpop.f32.mrb[0].mxu0
      %v2427 = vadd.f32 0.0, %v2426
      %2428 = vmatprep.mubr.bf16.mxu0 0
      %2429 = vmatmul.mubr.bf16.gmra.mrb[0].mxu0 %v2097
      %v2430 = vpop.f32.mrb[0].mxu0
      %v2431 = vadd.f32 0.0, %v2430
      %v2432 = vpop.f32.mrb[0].mxu0
      %v2433 = vadd.f32 0.0, %v2432
      %v2434 = vpop.f32.mrb[0].mxu0
      %v2435 = vadd.f32 0.0, %v2434
      %v2436 = vpop.f32.mrb[0].mxu0
      %v2437 = vadd.f32 0.0, %v2436
      %2438 = vmatprep.mubr.bf16.mxu0 0
      %2439 = vmatmul.mubr.bf16.gmra.mrb[0].mxu0 %v2098
      %v2440 = vpop.f32.mrb[0].mxu0
      %v2441 = vadd.f32 0.0, %v2440
      %v2442 = vpop.f32.mrb[0].mxu0
      %v2443 = vadd.f32 0.0, %v2442
      %v2444 = vpop.f32.mrb[0].mxu0
      %v2445 = vadd.f32 0.0, %v2444
      %v2446 = vpop.f32.mrb[0].mxu0
      %v2447 = vadd.f32 0.0, %v2446
      %2448 = vmatprep.mubr.bf16.mxu0 0
      %2449 = vmatmul.mubr.bf16.gmra.mrb[0].mxu0 %v2099
      %v2450 = vpop.f32.mrb[0].mxu0
      %v2451 = vadd.f32 0.0, %v2450
      %v2452 = vpop.f32.mrb[0].mxu0
      %v2453 = vadd.f32 0.0, %v2452
      %v2454 = vpop.f32.mrb[0].mxu0
      %v2455 = vadd.f32 0.0, %v2454
      %v2456 = vpop.f32.mrb[0].mxu0
      %v2457 = vadd.f32 0.0, %v2456
      %2458 = vmatprep.mubr.bf16.mxu0 0
      %2459 = vmatmul.mubr.bf16.gmra.mrb[0].mxu0 %v2100
      %v2460 = vpop.f32.mrb[0].mxu0
      %v2461 = vadd.f32 0.0, %v2460
      %v2462 = vpop.f32.mrb[0].mxu0
      %v2463 = vadd.f32 0.0, %v2462
      %v2464 = vpop.f32.mrb[0].mxu0
      %v2465 = vadd.f32 0.0, %v2464
      %v2466 = vpop.f32.mrb[0].mxu0
      %v2467 = vadd.f32 0.0, %v2466
      %2468 = vmatprep.mubr.bf16.mxu0 0
      %2469 = vmatmul.mubr.bf16.gmra.mrb[0].mxu0 %v2101
      %v2470 = vpop.f32.mrb[0].mxu0
      %v2471 = vadd.f32 0.0, %v2470
      %v2472 = vpop.f32.mrb[0].mxu0
      %v2473 = vadd.f32 0.0, %v2472
      %v2474 = vpop.f32.mrb[0].mxu0
      %v2475 = vadd.f32 0.0, %v2474
      %v2476 = vpop.f32.mrb[0].mxu0
      %v2477 = vadd.f32 0.0, %v2476
      %2478 = vmatprep.mubr.bf16.mxu0 0
      %2479 = vmatmul.mubr.bf16.gmra.mrb[0].mxu0 %v2102
      %v2480 = vpop.f32.mrb[0].mxu0
      %v2481 = vadd.f32 0.0, %v2480
      %v2482 = vpop.f32.mrb[0].mxu0
      %v2483 = vadd.f32 0.0, %v2482
      %v2484 = vpop.f32.mrb[0].mxu0
      %v2485 = vadd.f32 0.0, %v2484
      %v2486 = vpop.f32.mrb[0].mxu0
      %v2487 = vadd.f32 0.0, %v2486
      %2488 = vmatprep.mubr.bf16.mxu0 0
      %2489 = vmatmul.mubr.bf16.gmra.mrb[0].mxu0 %v2103
      %v2490 = vpop.f32.mrb[0].mxu0
      %v2491 = vadd.f32 0.0, %v2490
      %v2492 = vpop.f32.mrb[0].mxu0
      %v2493 = vadd.f32 0.0, %v2492
      %v2494 = vpop.f32.mrb[0].mxu0
      %v2495 = vadd.f32 0.0, %v2494
      %v2496 = vpop.f32.mrb[0].mxu0
      %v2497 = vadd.f32 0.0, %v2496
      %2498 = vmatprep.mubr.bf16.mxu0 0
      %2499 = vmatmul.mubr.bf16.gmra.mrb[0].mxu0 %v2104
      %v2500 = vpop.f32.mrb[0].mxu0
      %v2501 = vadd.f32 0.0, %v2500
      %v2502 = vpop.f32.mrb[0].mxu0
      %v2503 = vadd.f32 0.0, %v2502
      %v2504 = vpop.f32.mrb[0].mxu0
      %v2505 = vadd.f32 0.0, %v2504
      %v2506 = vpop.f32.mrb[0].mxu0
      %v2507 = vadd.f32 0.0, %v2506
      %2508 = vmatprep.mubr.bf16.mxu0 0
      %2509 = vmatmul.mubr.bf16.gmra.mrb[0].mxu0 %v2105
      %v2510 = vpop.f32.mrb[0].mxu0
      %v2511 = vadd.f32 0.0, %v2510
      %v2512 = vpop.f32.mrb[0].mxu0
      %v2513 = vadd.f32 0.0, %v2512
      %v2514 = vpop.f32.mrb[0].mxu0
      %v2515 = vadd.f32 0.0, %v2514
      %v2516 = vpop.f32.mrb[0].mxu0
      %v2517 = vadd.f32 0.0, %v2516
      %2518 = vmatprep.mubr.bf16.mxu0 0
      %2519 = vmatmul.mubr.bf16.gmra.mrb[0].mxu0 %v2106
      %v2520 = vpop.f32.mrb[0].mxu0
      %v2521 = vadd.f32 0.0, %v2520
      %v2522 = vpop.f32.mrb[0].mxu0
      %v2523 = vadd.f32 0.0, %v2522
      %v2524 = vpop.f32.mrb[0].mxu0
      %v2525 = vadd.f32 0.0, %v2524
      %v2526 = vpop.f32.mrb[0].mxu0
      %v2527 = vadd.f32 0.0, %v2526
      %2528 = vmatprep.mubr.bf16.mxu0 0
      %2529 = vmatmul.mubr.bf16.gmra.mrb[0].mxu0 %v2107
      %v2530 = vpop.f32.mrb[0].mxu0
      %v2531 = vadd.f32 0.0, %v2530
      %v2532 = vpop.f32.mrb[0].mxu0
      %v2533 = vadd.f32 0.0, %v2532
      %v2534 = vpop.f32.mrb[0].mxu0
      %v2535 = vadd.f32 0.0, %v2534
      %v2536 = vpop.f32.mrb[0].mxu0
      %v2537 = vadd.f32 0.0, %v2536
      %2538 = vmatprep.mubr.bf16.mxu0 0
      %2539 = vmatmul.mubr.bf16.gmra.mrb[0].mxu0 %v2108
      %v2540 = vpop.f32.mrb[0].mxu0
      %v2541 = vadd.f32 0.0, %v2540
      %v2542 = vpop.f32.mrb[0].mxu0
      %v2543 = vadd.f32 0.0, %v2542
      %v2544 = vpop.f32.mrb[0].mxu0
      %v2545 = vadd.f32 0.0, %v2544
      %v2546 = vpop.f32.mrb[0].mxu0
      %v2547 = vadd.f32 0.0, %v2546
      %2548 = vmatprep.mubr.bf16.mxu0 0
      %2549 = vmatmul.mubr.bf16.gmra.mrb[0].mxu0 %v2109
      %v2550 = vpop.f32.mrb[0].mxu0
      %v2551 = vadd.f32 0.0, %v2550
      %v2552 = vpop.f32.mrb[0].mxu0
      %v2553 = vadd.f32 0.0, %v2552
      %v2554 = vpop.f32.mrb[0].mxu0
      %v2555 = vpop.f32.mrb[0].mxu0
      %2556 = vdwg.mxu0
      %2557 = vrot.lane.b32.xlu0 %v2241, 64
      %v2558 = vpop.permute.xlu0 %2557
      %2559 = vrot.lane.b32.xlu0 %v2245, 64
      %v2560 = vpop.permute.xlu0 %2559
      %2561 = vrot.lane.b32.xlu0 %v2251, 64
      %v2562 = vpop.permute.xlu0 %2561
      %2563 = vrot.lane.b32.xlu0 %v2255, 64
      %v2564 = vpop.permute.xlu0 %2563
      %2565 = vrot.lane.b32.xlu0 %v2261, 64
      %v2566 = vpop.permute.xlu0 %2565
      %2567 = vrot.lane.b32.xlu0 %v2265, 64
      %v2568 = vpop.permute.xlu0 %2567
      %2569 = vrot.lane.b32.xlu0 %v2271, 64
      %v2570 = vpop.permute.xlu0 %2569
      %2571 = vrot.lane.b32.xlu0 %v2275, 64
      %v2572 = vpop.permute.xlu0 %2571
      %2573 = vrot.lane.b32.xlu0 %v2281, 64
      %v2574 = vpop.permute.xlu0 %2573
      %2575 = vrot.lane.b32.xlu0 %v2285, 64
      %v2576 = vpop.permute.xlu0 %2575
      %2577 = vrot.lane.b32.xlu0 %v2291, 64
      %v2578 = vpop.permute.xlu0 %2577
      %2579 = vrot.lane.b32.xlu0 %v2295, 64
      %v2580 = vpop.permute.xlu0 %2579
      %2581 = vrot.lane.b32.xlu0 %v2301, 64
      %v2582 = vpop.permute.xlu0 %2581
      %2583 = vrot.lane.b32.xlu0 %v2305, 64
      %v2584 = vpop.permute.xlu0 %2583
      %2585 = vrot.lane.b32.xlu0 %v2311, 64
      %v2586 = vpop.permute.xlu0 %2585
      %2587 = vrot.lane.b32.xlu0 %v2315, 64
      %v2588 = vpop.permute.xlu0 %2587
      %2589 = vrot.lane.b32.xlu0 %v2321, 64
      %v2590 = vpop.permute.xlu0 %2589
      %2591 = vrot.lane.b32.xlu0 %v2325, 64
      %v2592 = vpop.permute.xlu0 %2591
      %2593 = vrot.lane.b32.xlu0 %v2331, 64
      %v2594 = vpop.permute.xlu0 %2593
      %2595 = vrot.lane.b32.xlu0 %v2335, 64
      %v2596 = vpop.permute.xlu0 %2595
      %2597 = vrot.lane.b32.xlu0 %v2341, 64
      %v2598 = vpop.permute.xlu0 %2597
      %2599 = vrot.lane.b32.xlu0 %v2345, 64
      %v2600 = vpop.permute.xlu0 %2599
      %2601 = vrot.lane.b32.xlu0 %v2351, 64
      %v2602 = vpop.permute.xlu0 %2601
      %2603 = vrot.lane.b32.xlu0 %v2355, 64
      %v2604 = vpop.permute.xlu0 %2603
      %2605 = vrot.lane.b32.xlu0 %v2361, 64
      %v2606 = vpop.permute.xlu0 %2605
      %2607 = vrot.lane.b32.xlu0 %v2365, 64
      %v2608 = vpop.permute.xlu0 %2607
      %2609 = vrot.lane.b32.xlu0 %v2371, 64
      %v2610 = vpop.permute.xlu0 %2609
      %2611 = vrot.lane.b32.xlu0 %v2375, 64
      %v2612 = vpop.permute.xlu0 %2611
      %2613 = vrot.lane.b32.xlu0 %v2381, 64
      %v2614 = vpop.permute.xlu0 %2613
      %2615 = vrot.lane.b32.xlu0 %v2385, 64
      %v2616 = vpop.permute.xlu0 %2615
      %2617 = vrot.lane.b32.xlu0 %v2391, 64
      %v2618 = vpop.permute.xlu0 %2617
      %2619 = vrot.lane.b32.xlu0 %v2395, 64
      %v2620 = vpop.permute.xlu0 %2619
      %2621 = vrot.lane.b32.xlu0 %v2401, 64
      %v2622 = vpop.permute.xlu0 %2621
      %2623 = vrot.lane.b32.xlu0 %v2405, 64
      %v2624 = vpop.permute.xlu0 %2623
      %2625 = vrot.lane.b32.xlu0 %v2411, 64
      %v2626 = vpop.permute.xlu0 %2625
      %2627 = vrot.lane.b32.xlu0 %v2415, 64
      %v2628 = vpop.permute.xlu0 %2627
      %2629 = vrot.lane.b32.xlu0 %v2421, 64
      %v2630 = vpop.permute.xlu0 %2629
      %2631 = vrot.lane.b32.xlu0 %v2425, 64
      %v2632 = vpop.permute.xlu0 %2631
      %2633 = vrot.lane.b32.xlu0 %v2431, 64
      %v2634 = vpop.permute.xlu0 %2633
      %2635 = vrot.lane.b32.xlu0 %v2435, 64
      %v2636 = vpop.permute.xlu0 %2635
      %2637 = vrot.lane.b32.xlu0 %v2441, 64
      %v2638 = vpop.permute.xlu0 %2637
      %2639 = vrot.lane.b32.xlu0 %v2445, 64
      %v2640 = vpop.permute.xlu0 %2639
      %2641 = vrot.lane.b32.xlu0 %v2451, 64
      %v2642 = vpop.permute.xlu0 %2641
      %2643 = vrot.lane.b32.xlu0 %v2455, 64
      %v2644 = vpop.permute.xlu0 %2643
      %2645 = vrot.lane.b32.xlu0 %v2461, 64
      %v2646 = vpop.permute.xlu0 %2645
      %2647 = vrot.lane.b32.xlu0 %v2465, 64
      %v2648 = vpop.permute.xlu0 %2647
      %2649 = vrot.lane.b32.xlu0 %v2471, 64
      %v2650 = vpop.permute.xlu0 %2649
      %2651 = vrot.lane.b32.xlu0 %v2475, 64
      %v2652 = vpop.permute.xlu0 %2651
      %2653 = vrot.lane.b32.xlu0 %v2481, 64
      %v2654 = vpop.permute.xlu0 %2653
      %2655 = vrot.lane.b32.xlu0 %v2485, 64
      %v2656 = vpop.permute.xlu0 %2655
      %2657 = vrot.lane.b32.xlu0 %v2491, 64
      %v2658 = vpop.permute.xlu0 %2657
      %2659 = vrot.lane.b32.xlu0 %v2495, 64
      %v2660 = vpop.permute.xlu0 %2659
      %2661 = vrot.lane.b32.xlu0 %v2501, 64
      %v2662 = vpop.permute.xlu0 %2661
      %2663 = vrot.lane.b32.xlu0 %v2505, 64
      %v2664 = vpop.permute.xlu0 %2663
      %2665 = vrot.lane.b32.xlu0 %v2511, 64
      %v2666 = vpop.permute.xlu0 %2665
      %2667 = vrot.lane.b32.xlu0 %v2515, 64
      %v2668 = vpop.permute.xlu0 %2667
      %2669 = vrot.lane.b32.xlu0 %v2521, 64
      %v2670 = vpop.permute.xlu0 %2669
      %2671 = vrot.lane.b32.xlu0 %v2525, 64
      %v2672 = vpop.permute.xlu0 %2671
      %2673 = vrot.lane.b32.xlu0 %v2531, 64
      %v2674 = vpop.permute.xlu0 %2673
      %2675 = vrot.lane.b32.xlu0 %v2535, 64
      %v2676 = vpop.permute.xlu0 %2675
      %2677 = vrot.lane.b32.xlu0 %v2541, 64
      %v2678 = vpop.permute.xlu0 %2677
      %2679 = vrot.lane.b32.xlu0 %v2545, 64
      %v2680 = vpop.permute.xlu0 %2679
      %2681 = vrot.lane.b32.xlu0 %v2551, 64
      %v2682 = vpop.permute.xlu0 %2681
      %v2683 = vmul.f32 %v2241, %v2558
      %v2684 = vmul.f32 %v2245, %v2560
      %v2685 = vmul.f32 %v2251, %v2562
      %v2686 = vmul.f32 %v2255, %v2564
      %v2687 = vmul.f32 %v2261, %v2566
      %v2688 = vmul.f32 %v2265, %v2568
      %v2689 = vmul.f32 %v2271, %v2570
      %v2690 = vmul.f32 %v2275, %v2572
      %v2691 = vmul.f32 %v2281, %v2574
      %v2692 = vmul.f32 %v2285, %v2576
      %v2693 = vmul.f32 %v2291, %v2578
      %v2694 = vmul.f32 %v2295, %v2580
      %v2695 = vmul.f32 %v2301, %v2582
      %v2696 = vmul.f32 %v2305, %v2584
      %v2697 = vmul.f32 %v2311, %v2586
      %v2698 = vmul.f32 %v2315, %v2588
      %v2699 = vmul.f32 %v2321, %v2590
      %v2700 = vmul.f32 %v2325, %v2592
      %v2701 = vmul.f32 %v2331, %v2594
      %v2702 = vmul.f32 %v2335, %v2596
      %v2703 = vmul.f32 %v2341, %v2598
      %v2704 = vmul.f32 %v2345, %v2600
      %v2705 = vmul.f32 %v2351, %v2602
      %v2706 = vmul.f32 %v2355, %v2604
      %v2707 = vmul.f32 %v2361, %v2606
      %v2708 = vmul.f32 %v2365, %v2608
      %v2709 = vmul.f32 %v2371, %v2610
      %v2710 = vmul.f32 %v2375, %v2612
      %v2711 = vmul.f32 %v2381, %v2614
      %v2712 = vmul.f32 %v2385, %v2616
      %v2713 = vmul.f32 %v2391, %v2618
      %v2714 = vmul.f32 %v2395, %v2620
      %v2715 = vmul.f32 %v2401, %v2622
      %v2716 = vmul.f32 %v2405, %v2624
      %v2717 = vmul.f32 %v2411, %v2626
      %v2718 = vmul.f32 %v2415, %v2628
      %v2719 = vmul.f32 %v2421, %v2630
      %v2720 = vmul.f32 %v2425, %v2632
      %v2721 = vmul.f32 %v2431, %v2634
      %v2722 = vmul.f32 %v2435, %v2636
      %v2723 = vmul.f32 %v2441, %v2638
      %v2724 = vmul.f32 %v2445, %v2640
      %v2725 = vmul.f32 %v2451, %v2642
      %v2726 = vmul.f32 %v2455, %v2644
      %v2727 = vmul.f32 %v2461, %v2646
      %v2728 = vmul.f32 %v2465, %v2648
      %v2729 = vmul.f32 %v2471, %v2650
      %v2730 = vmul.f32 %v2475, %v2652
      %v2731 = vmul.f32 %v2481, %v2654
      %v2732 = vmul.f32 %v2485, %v2656
      %v2733 = vmul.f32 %v2491, %v2658
      %v2734 = vmul.f32 %v2495, %v2660
      %v2735 = vmul.f32 %v2501, %v2662
      %v2736 = vmul.f32 %v2505, %v2664
      %v2737 = vmul.f32 %v2511, %v2666
      %v2738 = vmul.f32 %v2515, %v2668
      %v2739 = vmul.f32 %v2521, %v2670
      %v2740 = vmul.f32 %v2525, %v2672
      %v2741 = vmul.f32 %v2531, %v2674
      %v2742 = vmul.f32 %v2535, %v2676
      %v2743 = vmul.f32 %v2541, %v2678
      %v2744 = vmul.f32 %v2545, %v2680
      %v2745 = vmul.f32 %v2551, %v2682
      %v2746 = vpack.c.bf16 %v2684, %v2683
      %v2747 = vpack.c.bf16 %v2686, %v2685
      %v2748 = vpack.c.bf16 %v2688, %v2687
      %v2749 = vpack.c.bf16 %v2690, %v2689
      %v2750 = vpack.c.bf16 %v2692, %v2691
      %v2751 = vpack.c.bf16 %v2694, %v2693
      %v2752 = vpack.c.bf16 %v2696, %v2695
      %v2753 = vpack.c.bf16 %v2698, %v2697
      %v2754 = vpack.c.bf16 %v2700, %v2699
      %v2755 = vpack.c.bf16 %v2702, %v2701
      %v2756 = vpack.c.bf16 %v2704, %v2703
      %v2757 = vpack.c.bf16 %v2706, %v2705
      %v2758 = vpack.c.bf16 %v2708, %v2707
      %v2759 = vpack.c.bf16 %v2710, %v2709
      %v2760 = vpack.c.bf16 %v2712, %v2711
      %v2761 = vpack.c.bf16 %v2714, %v2713
      %v2762 = vpack.c.bf16 %v2716, %v2715
      %v2763 = vpack.c.bf16 %v2718, %v2717
      %v2764 = vpack.c.bf16 %v2720, %v2719
      %v2765 = vpack.c.bf16 %v2722, %v2721
      %v2766 = vpack.c.bf16 %v2724, %v2723
      %v2767 = vpack.c.bf16 %v2726, %v2725
      %v2768 = vpack.c.bf16 %v2728, %v2727
      %v2769 = vpack.c.bf16 %v2730, %v2729
      %v2770 = vpack.c.bf16 %v2732, %v2731
      %v2771 = vpack.c.bf16 %v2734, %v2733
      %v2772 = vpack.c.bf16 %v2736, %v2735
      %v2773 = vpack.c.bf16 %v2738, %v2737
      %v2774 = vpack.c.bf16 %v2740, %v2739
      %v2775 = vpack.c.bf16 %v2742, %v2741
      %v2776 = vpack.c.bf16 %v2744, %v2743
      %v2777 = vpack.c.bf16 %v2745, %v2745
      %v2778 = vld [vmem:[%s2] sm:$0xf]
      %v2779 = vld [vmem:[%s2 + $0x4] sm:$0xf]
      %v2780 = vld [vmem:[%s2 + $0x8] sm:$0xf]
      %v2781 = vld [vmem:[%s2 + $0xc] sm:$0xf]
      %v2782 = vld [vmem:[%s2 + $0x10] sm:$0xf]
      %v2783 = vld [vmem:[%s2 + $0x14] sm:$0xf]
      %v2784 = vld [vmem:[%s2 + $0x18] sm:$0xf]
      %v2785 = vld [vmem:[%s2 + $0x1c] sm:$0xf]
      %v2786 = vld [vmem:[%s2 + $0x20] sm:$0xf]
      %v2787 = vld [vmem:[%s2 + $0x24] sm:$0xf]
      %v2788 = vld [vmem:[%s2 + $0x28] sm:$0xf]
      %v2789 = vld [vmem:[%s2 + $0x2c] sm:$0xf]
      %v2790 = vld [vmem:[%s2 + $0x30] sm:$0xf]
      %v2791 = vld [vmem:[%s2 + $0x34] sm:$0xf]
      %v2792 = vld [vmem:[%s2 + $0x38] sm:$0xf]
      %v2793 = vld [vmem:[%s2 + $0x3c] sm:$0xf]
      %v2810 = vunpack.c.l.b16 %v2778
      %v2811 = vunpack.c.l.b16 %v2779
      %v2812 = vunpack.c.l.b16 %v2780
      %v2813 = vunpack.c.l.b16 %v2781
      %v2814 = vunpack.c.l.b16 %v2782
      %v2815 = vunpack.c.l.b16 %v2783
      %v2816 = vunpack.c.l.b16 %v2784
      %v2817 = vunpack.c.l.b16 %v2785
      %v2818 = vunpack.c.l.b16 %v2786
      %v2819 = vunpack.c.l.b16 %v2787
      %v2820 = vunpack.c.l.b16 %v2788
      %v2821 = vunpack.c.l.b16 %v2789
      %v2822 = vunpack.c.l.b16 %v2790
      %v2823 = vunpack.c.l.b16 %v2791
      %v2824 = vunpack.c.l.b16 %v2792
      %v2825 = vunpack.c.l.b16 %v2793
      %v2826 = vpack.c.b16 %v2811, %v2810
      %v2827 = vpack.c.b16 %v2813, %v2812
      %v2828 = vpack.c.b16 %v2815, %v2814
      %v2829 = vpack.c.b16 %v2817, %v2816
      %v2830 = vpack.c.b16 %v2819, %v2818
      %v2831 = vpack.c.b16 %v2821, %v2820
      %v2832 = vpack.c.b16 %v2823, %v2822
      %v2833 = vpack.c.b16 %v2825, %v2824
      %2842 = vmatprep.subr.bf16.mxu0 0
      %2843 = vmatpush1.bf16.msra.mxu0 %v2826
      %2844 = vmatprep.subr.bf16.mxu0 0
      %2845 = vmatpush1.bf16.msra.mxu0 %v2827
      %2846 = vmatprep.subr.bf16.mxu0 0
      %2847 = vmatpush1.bf16.msra.mxu0 %v2828
      %2848 = vmatprep.subr.bf16.mxu0 0
      %2849 = vmatpush1.bf16.msra.mxu0 %v2829
      %2850 = vmatprep.subr.bf16.mxu0 0
      %2851 = vmatpush1.bf16.msra.mxu0 %v2830
      %2852 = vmatprep.subr.bf16.mxu0 0
      %2853 = vmatpush1.bf16.msra.mxu0 %v2831
      %2854 = vmatprep.subr.bf16.mxu0 0
      %2855 = vmatpush1.bf16.msra.mxu0 %v2832
      %2856 = vmatprep.subr.bf16.mxu0 0
      %2857 = vmatpush1.bf16.msra.mxu0 %v2833
      %2858 = vmatprep.subr.bf16.mxu0 0
      %2859 = vmatpush1.bf16.msra.mxu0 0
      %2860 = vmatprep.subr.bf16.mxu0 0
      %2861 = vmatpush1.bf16.msra.mxu0 0
      %2862 = vmatprep.subr.bf16.mxu0 0
      %2863 = vmatpush1.bf16.msra.mxu0 0
      %2864 = vmatprep.subr.bf16.mxu0 0
      %2865 = vmatpush1.bf16.msra.mxu0 0
      %2866 = vmatprep.subr.bf16.mxu0 0
      %2867 = vmatpush1.bf16.msra.mxu0 0
      %2868 = vmatprep.subr.bf16.mxu0 0
      %2869 = vmatpush1.bf16.msra.mxu0 0
      %2870 = vmatprep.subr.bf16.mxu0 0
      %2871 = vmatpush1.bf16.msra.mxu0 0
      %2872 = vmatprep.subr.bf16.mxu0 0
      %2873 = vmatpush1.bf16.msra.mxu0 0
      %2874 = vmatprep.mubr.bf16.mxu0 0
      %2875 = vmatmul.mubr.bf16.gmra.mrb[0].mxu0 %v2746
      %v2876 = vpop.f32.mrb[0].mxu0
      %v2877 = vadd.f32 %v2243, %v2876
      %v2878 = vpop.f32.mrb[0].mxu0
      %v2879 = vpop.f32.mrb[0].mxu0
      %v2880 = vadd.f32 %v2247, %v2879
      %v2881 = vpop.f32.mrb[0].mxu0
      %2882 = vmatprep.mubr.bf16.mxu0 0
      %2883 = vmatmul.mubr.bf16.gmra.mrb[0].mxu0 %v2747
      %v2884 = vpop.f32.mrb[0].mxu0
      %v2885 = vadd.f32 %v2253, %v2884
      %v2886 = vpop.f32.mrb[0].mxu0
      %v2887 = vpop.f32.mrb[0].mxu0
      %v2888 = vadd.f32 %v2257, %v2887
      %v2889 = vpop.f32.mrb[0].mxu0
      %2890 = vmatprep.mubr.bf16.mxu0 0
      %2891 = vmatmul.mubr.bf16.gmra.mrb[0].mxu0 %v2748
      %v2892 = vpop.f32.mrb[0].mxu0
      %v2893 = vadd.f32 %v2263, %v2892
      %v2894 = vpop.f32.mrb[0].mxu0
      %v2895 = vpop.f32.mrb[0].mxu0
      %v2896 = vadd.f32 %v2267, %v2895
      %v2897 = vpop.f32.mrb[0].mxu0
      %2898 = vmatprep.mubr.bf16.mxu0 0
      %2899 = vmatmul.mubr.bf16.gmra.mrb[0].mxu0 %v2749
      %v2900 = vpop.f32.mrb[0].mxu0
      %v2901 = vadd.f32 %v2273, %v2900
      %v2902 = vpop.f32.mrb[0].mxu0
      %v2903 = vpop.f32.mrb[0].mxu0
      %v2904 = vadd.f32 %v2277, %v2903
      %v2905 = vpop.f32.mrb[0].mxu0
      %2906 = vmatprep.mubr.bf16.mxu0 0
      %2907 = vmatmul.mubr.bf16.gmra.mrb[0].mxu0 %v2750
      %v2908 = vpop.f32.mrb[0].mxu0
      %v2909 = vadd.f32 %v2283, %v2908
      %v2910 = vpop.f32.mrb[0].mxu0
      %v2911 = vpop.f32.mrb[0].mxu0
      %v2912 = vadd.f32 %v2287, %v2911
      %v2913 = vpop.f32.mrb[0].mxu0
      %2914 = vmatprep.mubr.bf16.mxu0 0
      %2915 = vmatmul.mubr.bf16.gmra.mrb[0].mxu0 %v2751
      %v2916 = vpop.f32.mrb[0].mxu0
      %v2917 = vadd.f32 %v2293, %v2916
      %v2918 = vpop.f32.mrb[0].mxu0
      %v2919 = vpop.f32.mrb[0].mxu0
      %v2920 = vadd.f32 %v2297, %v2919
      %v2921 = vpop.f32.mrb[0].mxu0
      %2922 = vmatprep.mubr.bf16.mxu0 0
      %2923 = vmatmul.mubr.bf16.gmra.mrb[0].mxu0 %v2752
      %v2924 = vpop.f32.mrb[0].mxu0
      %v2925 = vadd.f32 %v2303, %v2924
      %v2926 = vpop.f32.mrb[0].mxu0
      %v2927 = vpop.f32.mrb[0].mxu0
      %v2928 = vadd.f32 %v2307, %v2927
      %v2929 = vpop.f32.mrb[0].mxu0
      %2930 = vmatprep.mubr.bf16.mxu0 0
      %2931 = vmatmul.mubr.bf16.gmra.mrb[0].mxu0 %v2753
      %v2932 = vpop.f32.mrb[0].mxu0
      %v2933 = vadd.f32 %v2313, %v2932
      %v2934 = vpop.f32.mrb[0].mxu0
      %v2935 = vpop.f32.mrb[0].mxu0
      %v2936 = vadd.f32 %v2317, %v2935
      %v2937 = vpop.f32.mrb[0].mxu0
      %2938 = vmatprep.mubr.bf16.mxu0 0
      %2939 = vmatmul.mubr.bf16.gmra.mrb[0].mxu0 %v2754
      %v2940 = vpop.f32.mrb[0].mxu0
      %v2941 = vadd.f32 %v2323, %v2940
      %v2942 = vpop.f32.mrb[0].mxu0
      %v2943 = vpop.f32.mrb[0].mxu0
      %v2944 = vadd.f32 %v2327, %v2943
      %v2945 = vpop.f32.mrb[0].mxu0
      %2946 = vmatprep.mubr.bf16.mxu0 0
      %2947 = vmatmul.mubr.bf16.gmra.mrb[0].mxu0 %v2755
      %v2948 = vpop.f32.mrb[0].mxu0
      %v2949 = vadd.f32 %v2333, %v2948
      %v2950 = vpop.f32.mrb[0].mxu0
      %v2951 = vpop.f32.mrb[0].mxu0
      %v2952 = vadd.f32 %v2337, %v2951
      %v2953 = vpop.f32.mrb[0].mxu0
      %2954 = vmatprep.mubr.bf16.mxu0 0
      %2955 = vmatmul.mubr.bf16.gmra.mrb[0].mxu0 %v2756
      %v2956 = vpop.f32.mrb[0].mxu0
      %v2957 = vadd.f32 %v2343, %v2956
      %v2958 = vpop.f32.mrb[0].mxu0
      %v2959 = vpop.f32.mrb[0].mxu0
      %v2960 = vadd.f32 %v2347, %v2959
      %v2961 = vpop.f32.mrb[0].mxu0
      %2962 = vmatprep.mubr.bf16.mxu0 0
      %2963 = vmatmul.mubr.bf16.gmra.mrb[0].mxu0 %v2757
      %v2964 = vpop.f32.mrb[0].mxu0
      %v2965 = vadd.f32 %v2353, %v2964
      %v2966 = vpop.f32.mrb[0].mxu0
      %v2967 = vpop.f32.mrb[0].mxu0
      %v2968 = vadd.f32 %v2357, %v2967
      %v2969 = vpop.f32.mrb[0].mxu0
      %2970 = vmatprep.mubr.bf16.mxu0 0
      %2971 = vmatmul.mubr.bf16.gmra.mrb[0].mxu0 %v2758
      %v2972 = vpop.f32.mrb[0].mxu0
      %v2973 = vadd.f32 %v2363, %v2972
      %v2974 = vpop.f32.mrb[0].mxu0
      %v2975 = vpop.f32.mrb[0].mxu0
      %v2976 = vadd.f32 %v2367, %v2975
      %v2977 = vpop.f32.mrb[0].mxu0
      %2978 = vmatprep.mubr.bf16.mxu0 0
      %2979 = vmatmul.mubr.bf16.gmra.mrb[0].mxu0 %v2759
      %v2980 = vpop.f32.mrb[0].mxu0
      %v2981 = vadd.f32 %v2373, %v2980
      %v2982 = vpop.f32.mrb[0].mxu0
      %v2983 = vpop.f32.mrb[0].mxu0
      %v2984 = vadd.f32 %v2377, %v2983
      %v2985 = vpop.f32.mrb[0].mxu0
      %2986 = vmatprep.mubr.bf16.mxu0 0
      %2987 = vmatmul.mubr.bf16.gmra.mrb[0].mxu0 %v2760
      %v2988 = vpop.f32.mrb[0].mxu0
      %v2989 = vadd.f32 %v2383, %v2988
      %v2990 = vpop.f32.mrb[0].mxu0
      %v2991 = vpop.f32.mrb[0].mxu0
      %v2992 = vadd.f32 %v2387, %v2991
      %v2993 = vpop.f32.mrb[0].mxu0
      %2994 = vmatprep.mubr.bf16.mxu0 0
      %2995 = vmatmul.mubr.bf16.gmra.mrb[0].mxu0 %v2761
      %v2996 = vpop.f32.mrb[0].mxu0
      %v2997 = vadd.f32 %v2393, %v2996
      %v2998 = vpop.f32.mrb[0].mxu0
      %v2999 = vpop.f32.mrb[0].mxu0
      %v3000 = vadd.f32 %v2397, %v2999
      %v3001 = vpop.f32.mrb[0].mxu0
      %3002 = vmatprep.mubr.bf16.mxu0 0
      %3003 = vmatmul.mubr.bf16.gmra.mrb[0].mxu0 %v2762
      %v3004 = vpop.f32.mrb[0].mxu0
      %v3005 = vadd.f32 %v2403, %v3004
      %v3006 = vpop.f32.mrb[0].mxu0
      %v3007 = vpop.f32.mrb[0].mxu0
      %v3008 = vadd.f32 %v2407, %v3007
      %v3009 = vpop.f32.mrb[0].mxu0
      %3010 = vmatprep.mubr.bf16.mxu0 0
      %3011 = vmatmul.mubr.bf16.gmra.mrb[0].mxu0 %v2763
      %v3012 = vpop.f32.mrb[0].mxu0
      %v3013 = vadd.f32 %v2413, %v3012
      %v3014 = vpop.f32.mrb[0].mxu0
      %v3015 = vpop.f32.mrb[0].mxu0
      %v3016 = vadd.f32 %v2417, %v3015
      %v3017 = vpop.f32.mrb[0].mxu0
      %3018 = vmatprep.mubr.bf16.mxu0 0
      %3019 = vmatmul.mubr.bf16.gmra.mrb[0].mxu0 %v2764
      %v3020 = vpop.f32.mrb[0].mxu0
      %v3021 = vadd.f32 %v2423, %v3020
      %v3022 = vpop.f32.mrb[0].mxu0
      %v3023 = vpop.f32.mrb[0].mxu0
      %v3024 = vadd.f32 %v2427, %v3023
      %v3025 = vpop.f32.mrb[0].mxu0
      %3026 = vmatprep.mubr.bf16.mxu0 0
      %3027 = vmatmul.mubr.bf16.gmra.mrb[0].mxu0 %v2765
      %v3028 = vpop.f32.mrb[0].mxu0
      %v3029 = vadd.f32 %v2433, %v3028
      %v3030 = vpop.f32.mrb[0].mxu0
      %v3031 = vpop.f32.mrb[0].mxu0
      %v3032 = vadd.f32 %v2437, %v3031
      %v3033 = vpop.f32.mrb[0].mxu0
      %3034 = vmatprep.mubr.bf16.mxu0 0
      %3035 = vmatmul.mubr.bf16.gmra.mrb[0].mxu0 %v2766
      %v3036 = vpop.f32.mrb[0].mxu0
      %v3037 = vadd.f32 %v2443, %v3036
      %v3038 = vpop.f32.mrb[0].mxu0
      %v3039 = vpop.f32.mrb[0].mxu0
      %v3040 = vadd.f32 %v2447, %v3039
      %v3041 = vpop.f32.mrb[0].mxu0
      %3042 = vmatprep.mubr.bf16.mxu0 0
      %3043 = vmatmul.mubr.bf16.gmra.mrb[0].mxu0 %v2767
      %v3044 = vpop.f32.mrb[0].mxu0
      %v3045 = vadd.f32 %v2453, %v3044
      %v3046 = vpop.f32.mrb[0].mxu0
      %v3047 = vpop.f32.mrb[0].mxu0
      %v3048 = vadd.f32 %v2457, %v3047
      %v3049 = vpop.f32.mrb[0].mxu0
      %3050 = vmatprep.mubr.bf16.mxu0 0
      %3051 = vmatmul.mubr.bf16.gmra.mrb[0].mxu0 %v2768
      %v3052 = vpop.f32.mrb[0].mxu0
      %v3053 = vadd.f32 %v2463, %v3052
      %v3054 = vpop.f32.mrb[0].mxu0
      %v3055 = vpop.f32.mrb[0].mxu0
      %v3056 = vadd.f32 %v2467, %v3055
      %v3057 = vpop.f32.mrb[0].mxu0
      %3058 = vmatprep.mubr.bf16.mxu0 0
      %3059 = vmatmul.mubr.bf16.gmra.mrb[0].mxu0 %v2769
      %v3060 = vpop.f32.mrb[0].mxu0
      %v3061 = vadd.f32 %v2473, %v3060
      %v3062 = vpop.f32.mrb[0].mxu0
      %v3063 = vpop.f32.mrb[0].mxu0
      %v3064 = vadd.f32 %v2477, %v3063
      %v3065 = vpop.f32.mrb[0].mxu0
      %3066 = vmatprep.mubr.bf16.mxu0 0
      %3067 = vmatmul.mubr.bf16.gmra.mrb[0].mxu0 %v2770
      %v3068 = vpop.f32.mrb[0].mxu0
      %v3069 = vadd.f32 %v2483, %v3068
      %v3070 = vpop.f32.mrb[0].mxu0
      %v3071 = vpop.f32.mrb[0].mxu0
      %v3072 = vadd.f32 %v2487, %v3071
      %v3073 = vpop.f32.mrb[0].mxu0
      %3074 = vmatprep.mubr.bf16.mxu0 0
      %3075 = vmatmul.mubr.bf16.gmra.mrb[0].mxu0 %v2771
      %v3076 = vpop.f32.mrb[0].mxu0
      %v3077 = vadd.f32 %v2493, %v3076
      %v3078 = vpop.f32.mrb[0].mxu0
      %v3079 = vpop.f32.mrb[0].mxu0
      %v3080 = vadd.f32 %v2497, %v3079
      %v3081 = vpop.f32.mrb[0].mxu0
      %3082 = vmatprep.mubr.bf16.mxu0 0
      %3083 = vmatmul.mubr.bf16.gmra.mrb[0].mxu0 %v2772
      %v3084 = vpop.f32.mrb[0].mxu0
      %v3085 = vadd.f32 %v2503, %v3084
      %v3086 = vpop.f32.mrb[0].mxu0
      %v3087 = vpop.f32.mrb[0].mxu0
      %v3088 = vadd.f32 %v2507, %v3087
      %v3089 = vpop.f32.mrb[0].mxu0
      %3090 = vmatprep.mubr.bf16.mxu0 0
      %3091 = vmatmul.mubr.bf16.gmra.mrb[0].mxu0 %v2773
      %v3092 = vpop.f32.mrb[0].mxu0
      %v3093 = vadd.f32 %v2513, %v3092
      %v3094 = vpop.f32.mrb[0].mxu0
      %v3095 = vpop.f32.mrb[0].mxu0
      %v3096 = vadd.f32 %v2517, %v3095
      %v3097 = vpop.f32.mrb[0].mxu0
      %3098 = vmatprep.mubr.bf16.mxu0 0
      %3099 = vmatmul.mubr.bf16.gmra.mrb[0].mxu0 %v2774
      %v3100 = vpop.f32.mrb[0].mxu0
      %v3101 = vadd.f32 %v2523, %v3100
      %v3102 = vpop.f32.mrb[0].mxu0
      %v3103 = vpop.f32.mrb[0].mxu0
      %v3104 = vadd.f32 %v2527, %v3103
      %v3105 = vpop.f32.mrb[0].mxu0
      %3106 = vmatprep.mubr.bf16.mxu0 0
      %3107 = vmatmul.mubr.bf16.gmra.mrb[0].mxu0 %v2775
      %v3108 = vpop.f32.mrb[0].mxu0
      %v3109 = vadd.f32 %v2533, %v3108
      %v3110 = vpop.f32.mrb[0].mxu0
      %v3111 = vpop.f32.mrb[0].mxu0
      %v3112 = vadd.f32 %v2537, %v3111
      %v3113 = vpop.f32.mrb[0].mxu0
      %3114 = vmatprep.mubr.bf16.mxu0 0
      %3115 = vmatmul.mubr.bf16.gmra.mrb[0].mxu0 %v2776
      %v3116 = vpop.f32.mrb[0].mxu0
      %v3117 = vadd.f32 %v2543, %v3116
      %v3118 = vpop.f32.mrb[0].mxu0
      %v3119 = vpop.f32.mrb[0].mxu0
      %v3120 = vadd.f32 %v2547, %v3119
      %v3121 = vpop.f32.mrb[0].mxu0
      %3122 = vmatprep.mubr.bf16.mxu0 0
      %3123 = vmatmul.mubr.bf16.gmra.mrb[0].mxu0 %v2777
      %v3124 = vpop.f32.mrb[0].mxu0
      %v3125 = vadd.f32 %v2553, %v3124
      %v3126 = vpop.f32.mrb[0].mxu0
      %v3127 = vpop.f32.mrb[0].mxu0
      %v3128 = vpop.f32.mrb[0].mxu0
      %3129 = vdwg.mxu0
      %v3130 = vld [vmem:[%s3] sm:$0x1]
      %v3132 = vlaneseq
      %v3133 = vshrl.u32 %v3132, 7
      %v3134 = vsub.s32 0, %v3133
      %v3135 = vrot.slane %v3130, %v3134
      %v3137 = vadd.f32 %v2877, %v3135
      %v3138 = vadd.f32 %v2880, %v3135
      %v3139 = vadd.f32 %v2885, %v3135
      %v3140 = vadd.f32 %v2888, %v3135
      %v3141 = vadd.f32 %v2893, %v3135
      %v3142 = vadd.f32 %v2896, %v3135
      %v3143 = vadd.f32 %v2901, %v3135
      %v3144 = vadd.f32 %v2904, %v3135
      %v3145 = vadd.f32 %v2909, %v3135
      %v3146 = vadd.f32 %v2912, %v3135
      %v3147 = vadd.f32 %v2917, %v3135
      %v3148 = vadd.f32 %v2920, %v3135
      %v3149 = vadd.f32 %v2925, %v3135
      %v3150 = vadd.f32 %v2928, %v3135
      %v3151 = vadd.f32 %v2933, %v3135
      %v3152 = vadd.f32 %v2936, %v3135
      %v3153 = vadd.f32 %v2941, %v3135
      %v3154 = vadd.f32 %v2944, %v3135
      %v3155 = vadd.f32 %v2949, %v3135
      %v3156 = vadd.f32 %v2952, %v3135
      %v3157 = vadd.f32 %v2957, %v3135
      %v3158 = vadd.f32 %v2960, %v3135
      %v3159 = vadd.f32 %v2965, %v3135
      %v3160 = vadd.f32 %v2968, %v3135
      %v3161 = vadd.f32 %v2973, %v3135
      %v3162 = vadd.f32 %v2976, %v3135
      %v3163 = vadd.f32 %v2981, %v3135
      %v3164 = vadd.f32 %v2984, %v3135
      %v3165 = vadd.f32 %v2989, %v3135
      %v3166 = vadd.f32 %v2992, %v3135
      %v3167 = vadd.f32 %v2997, %v3135
      %v3168 = vadd.f32 %v3000, %v3135
      %v3169 = vadd.f32 %v3005, %v3135
      %v3170 = vadd.f32 %v3008, %v3135
      %v3171 = vadd.f32 %v3013, %v3135
      %v3172 = vadd.f32 %v3016, %v3135
      %v3173 = vadd.f32 %v3021, %v3135
      %v3174 = vadd.f32 %v3024, %v3135
      %v3175 = vadd.f32 %v3029, %v3135
      %v3176 = vadd.f32 %v3032, %v3135
      %v3177 = vadd.f32 %v3037, %v3135
      %v3178 = vadd.f32 %v3040, %v3135
      %v3179 = vadd.f32 %v3045, %v3135
      %v3180 = vadd.f32 %v3048, %v3135
      %v3181 = vadd.f32 %v3053, %v3135
      %v3182 = vadd.f32 %v3056, %v3135
      %v3183 = vadd.f32 %v3061, %v3135
      %v3184 = vadd.f32 %v3064, %v3135
      %v3185 = vadd.f32 %v3069, %v3135
      %v3186 = vadd.f32 %v3072, %v3135
      %v3187 = vadd.f32 %v3077, %v3135
      %v3188 = vadd.f32 %v3080, %v3135
      %v3189 = vadd.f32 %v3085, %v3135
      %v3190 = vadd.f32 %v3088, %v3135
      %v3191 = vadd.f32 %v3093, %v3135
      %v3192 = vadd.f32 %v3096, %v3135
      %v3193 = vadd.f32 %v3101, %v3135
      %v3194 = vadd.f32 %v3104, %v3135
      %v3195 = vadd.f32 %v3109, %v3135
      %v3196 = vadd.f32 %v3112, %v3135
      %v3197 = vadd.f32 %v3117, %v3135
      %v3198 = vadd.f32 %v3120, %v3135
      %v3199 = vadd.f32 %v3125, %v3135
      %v3200 = vmax.f32 %v3137, 0.0
      %v3201 = vmax.f32 %v3138, 0.0
      %v3202 = vmax.f32 %v3139, 0.0
      %v3203 = vmax.f32 %v3140, 0.0
      %v3204 = vmax.f32 %v3141, 0.0
      %v3205 = vmax.f32 %v3142, 0.0
      %v3206 = vmax.f32 %v3143, 0.0
      %v3207 = vmax.f32 %v3144, 0.0
      %v3208 = vmax.f32 %v3145, 0.0
      %v3209 = vmax.f32 %v3146, 0.0
      %v3210 = vmax.f32 %v3147, 0.0
      %v3211 = vmax.f32 %v3148, 0.0
      %v3212 = vmax.f32 %v3149, 0.0
      %v3213 = vmax.f32 %v3150, 0.0
      %v3214 = vmax.f32 %v3151, 0.0
      %v3215 = vmax.f32 %v3152, 0.0
      %v3216 = vmax.f32 %v3153, 0.0
      %v3217 = vmax.f32 %v3154, 0.0
      %v3218 = vmax.f32 %v3155, 0.0
      %v3219 = vmax.f32 %v3156, 0.0
      %v3220 = vmax.f32 %v3157, 0.0
      %v3221 = vmax.f32 %v3158, 0.0
      %v3222 = vmax.f32 %v3159, 0.0
      %v3223 = vmax.f32 %v3160, 0.0
      %v3224 = vmax.f32 %v3161, 0.0
      %v3225 = vmax.f32 %v3162, 0.0
      %v3226 = vmax.f32 %v3163, 0.0
      %v3227 = vmax.f32 %v3164, 0.0
      %v3228 = vmax.f32 %v3165, 0.0
      %v3229 = vmax.f32 %v3166, 0.0
      %v3230 = vmax.f32 %v3167, 0.0
      %v3231 = vmax.f32 %v3168, 0.0
      %v3232 = vmax.f32 %v3169, 0.0
      %v3233 = vmax.f32 %v3170, 0.0
      %v3234 = vmax.f32 %v3171, 0.0
      %v3235 = vmax.f32 %v3172, 0.0
      %v3236 = vmax.f32 %v3173, 0.0
      %v3237 = vmax.f32 %v3174, 0.0
      %v3238 = vmax.f32 %v3175, 0.0
      %v3239 = vmax.f32 %v3176, 0.0
      %v3240 = vmax.f32 %v3177, 0.0
      %v3241 = vmax.f32 %v3178, 0.0
      %v3242 = vmax.f32 %v3179, 0.0
      %v3243 = vmax.f32 %v3180, 0.0
      %v3244 = vmax.f32 %v3181, 0.0
      %v3245 = vmax.f32 %v3182, 0.0
      %v3246 = vmax.f32 %v3183, 0.0
      %v3247 = vmax.f32 %v3184, 0.0
      %v3248 = vmax.f32 %v3185, 0.0
      %v3249 = vmax.f32 %v3186, 0.0
      %v3250 = vmax.f32 %v3187, 0.0
      %v3251 = vmax.f32 %v3188, 0.0
      %v3252 = vmax.f32 %v3189, 0.0
      %v3253 = vmax.f32 %v3190, 0.0
      %v3254 = vmax.f32 %v3191, 0.0
      %v3255 = vmax.f32 %v3192, 0.0
      %v3256 = vmax.f32 %v3193, 0.0
      %v3257 = vmax.f32 %v3194, 0.0
      %v3258 = vmax.f32 %v3195, 0.0
      %v3259 = vmax.f32 %v3196, 0.0
      %v3260 = vmax.f32 %v3197, 0.0
      %v3261 = vmax.f32 %v3198, 0.0
      %v3262 = vmax.f32 %v3199, 0.0
      %v3263 = vpack.c.bf16 %v3201, %v3200
      %v3264 = vpack.c.bf16 %v3203, %v3202
      %v3265 = vpack.c.bf16 %v3205, %v3204
      %v3266 = vpack.c.bf16 %v3207, %v3206
      %v3267 = vpack.c.bf16 %v3209, %v3208
      %v3268 = vpack.c.bf16 %v3211, %v3210
      %v3269 = vpack.c.bf16 %v3213, %v3212
      %v3270 = vpack.c.bf16 %v3215, %v3214
      %v3271 = vpack.c.bf16 %v3217, %v3216
      %v3272 = vpack.c.bf16 %v3219, %v3218
      %v3273 = vpack.c.bf16 %v3221, %v3220
      %v3274 = vpack.c.bf16 %v3223, %v3222
      %v3275 = vpack.c.bf16 %v3225, %v3224
      %v3276 = vpack.c.bf16 %v3227, %v3226
      %v3277 = vpack.c.bf16 %v3229, %v3228
      %v3278 = vpack.c.bf16 %v3231, %v3230
      %v3279 = vpack.c.bf16 %v3233, %v3232
      %v3280 = vpack.c.bf16 %v3235, %v3234
      %v3281 = vpack.c.bf16 %v3237, %v3236
      %v3282 = vpack.c.bf16 %v3239, %v3238
      %v3283 = vpack.c.bf16 %v3241, %v3240
      %v3284 = vpack.c.bf16 %v3243, %v3242
      %v3285 = vpack.c.bf16 %v3245, %v3244
      %v3286 = vpack.c.bf16 %v3247, %v3246
      %v3287 = vpack.c.bf16 %v3249, %v3248
      %v3288 = vpack.c.bf16 %v3251, %v3250
      %v3289 = vpack.c.bf16 %v3253, %v3252
      %v3290 = vpack.c.bf16 %v3255, %v3254
      %v3291 = vpack.c.bf16 %v3257, %v3256
      %v3292 = vpack.c.bf16 %v3259, %v3258
      %v3293 = vpack.c.bf16 %v3261, %v3260
      %v3294 = vpack.c.bf16 %v3262, %v3262
      %v3295 = vld [vmem:[%s4] sm:$0xf]
      %v3296 = vld [vmem:[%s4 + $0x4] sm:$0xf]
      %v3297 = vld [vmem:[%s4 + $0x8] sm:$0xf]
      %v3298 = vld [vmem:[%s4 + $0xc] sm:$0xf]
      %v3299 = vld [vmem:[%s4 + $0x10] sm:$0xf]
      %v3300 = vld [vmem:[%s4 + $0x14] sm:$0xf]
      %v3301 = vld [vmem:[%s4 + $0x18] sm:$0xf]
      %v3302 = vld [vmem:[%s4 + $0x1c] sm:$0xf]
      %v3303 = vld [vmem:[%s4 + $0x20] sm:$0xf]
      %v3304 = vld [vmem:[%s4 + $0x24] sm:$0xf]
      %v3305 = vld [vmem:[%s4 + $0x28] sm:$0xf]
      %v3306 = vld [vmem:[%s4 + $0x2c] sm:$0xf]
      %v3307 = vld [vmem:[%s4 + $0x30] sm:$0xf]
      %v3308 = vld [vmem:[%s4 + $0x34] sm:$0xf]
      %v3309 = vld [vmem:[%s4 + $0x38] sm:$0xf]
      %v3310 = vld [vmem:[%s4 + $0x3c] sm:$0xf]
      %v3311 = vld [vmem:[%s5] sm:$0x1]
      %v3313 = vlaneseq
      %v3314 = vshrl.u32 %v3313, 7
      %v3315 = vsub.s32 0, %v3314
      %v3316 = vrot.slane %v3311, %v3315
      %v3334 = vunpack.c.l.b16 %v3295
      %v3335 = vunpack.c.l.b16 %v3296
      %v3336 = vunpack.c.l.b16 %v3297
      %v3337 = vunpack.c.l.b16 %v3298
      %v3338 = vunpack.c.l.b16 %v3299
      %v3339 = vunpack.c.l.b16 %v3300
      %v3340 = vunpack.c.l.b16 %v3301
      %v3341 = vunpack.c.l.b16 %v3302
      %v3342 = vunpack.c.l.b16 %v3303
      %v3343 = vunpack.c.l.b16 %v3304
      %v3344 = vunpack.c.l.b16 %v3305
      %v3345 = vunpack.c.l.b16 %v3306
      %v3346 = vunpack.c.l.b16 %v3307
      %v3347 = vunpack.c.l.b16 %v3308
      %v3348 = vunpack.c.l.b16 %v3309
      %v3349 = vunpack.c.l.b16 %v3310
      %v3350 = vpack.c.b16 %v3335, %v3334
      %v3351 = vpack.c.b16 %v3337, %v3336
      %v3352 = vpack.c.b16 %v3339, %v3338
      %v3353 = vpack.c.b16 %v3341, %v3340
      %v3354 = vpack.c.b16 %v3343, %v3342
      %v3355 = vpack.c.b16 %v3345, %v3344
      %v3356 = vpack.c.b16 %v3347, %v3346
      %v3357 = vpack.c.b16 %v3349, %v3348
      %3366 = vmatprep.subr.bf16.mxu0 0
      %3367 = vmatpush1.bf16.msra.mxu0 %v3350
      %3368 = vmatprep.subr.bf16.mxu0 0
      %3369 = vmatpush1.bf16.msra.mxu0 %v3351
      %3370 = vmatprep.subr.bf16.mxu0 0
      %3371 = vmatpush1.bf16.msra.mxu0 %v3352
      %3372 = vmatprep.subr.bf16.mxu0 0
      %3373 = vmatpush1.bf16.msra.mxu0 %v3353
      %3374 = vmatprep.subr.bf16.mxu0 0
      %3375 = vmatpush1.bf16.msra.mxu0 %v3354
      %3376 = vmatprep.subr.bf16.mxu0 0
      %3377 = vmatpush1.bf16.msra.mxu0 %v3355
      %3378 = vmatprep.subr.bf16.mxu0 0
      %3379 = vmatpush1.bf16.msra.mxu0 %v3356
      %3380 = vmatprep.subr.bf16.mxu0 0
      %3381 = vmatpush1.bf16.msra.mxu0 %v3357
      %3382 = vmatprep.subr.bf16.mxu0 0
      %3383 = vmatpush1.bf16.msra.mxu0 0
      %3384 = vmatprep.subr.bf16.mxu0 0
      %3385 = vmatpush1.bf16.msra.mxu0 0
      %3386 = vmatprep.subr.bf16.mxu0 0
      %3387 = vmatpush1.bf16.msra.mxu0 0
      %3388 = vmatprep.subr.bf16.mxu0 0
      %3389 = vmatpush1.bf16.msra.mxu0 0
      %3390 = vmatprep.subr.bf16.mxu0 0
      %3391 = vmatpush1.bf16.msra.mxu0 0
      %3392 = vmatprep.subr.bf16.mxu0 0
      %3393 = vmatpush1.bf16.msra.mxu0 0
      %3394 = vmatprep.subr.bf16.mxu0 0
      %3395 = vmatpush1.bf16.msra.mxu0 0
      %3396 = vmatprep.subr.bf16.mxu0 0
      %3397 = vmatpush1.bf16.msra.mxu0 0
      %3398 = vmatprep.mubr.bf16.mxu0 0
      %3399 = vmatmul.mubr.bf16.gmra.mrb[0].mxu0 %v3263
      %v3400 = vpop.f32.mrb[0].mxu0
      %v3401 = vadd.f32 %v3316, %v3400
      %v3402 = vpop.f32.mrb[0].mxu0
      %v3403 = vpop.f32.mrb[0].mxu0
      %v3404 = vadd.f32 %v3316, %v3403
      %v3405 = vpop.f32.mrb[0].mxu0
      %3406 = vmatprep.mubr.bf16.mxu0 0
      %3407 = vmatmul.mubr.bf16.gmra.mrb[0].mxu0 %v3264
      %v3408 = vpop.f32.mrb[0].mxu0
      %v3409 = vadd.f32 %v3316, %v3408
      %v3410 = vpop.f32.mrb[0].mxu0
      %v3411 = vpop.f32.mrb[0].mxu0
      %v3412 = vadd.f32 %v3316, %v3411
      %v3413 = vpop.f32.mrb[0].mxu0
      %3414 = vmatprep.mubr.bf16.mxu0 0
      %3415 = vmatmul.mubr.bf16.gmra.mrb[0].mxu0 %v3265
      %v3416 = vpop.f32.mrb[0].mxu0
      %v3417 = vadd.f32 %v3316, %v3416
      %v3418 = vpop.f32.mrb[0].mxu0
      %v3419 = vpop.f32.mrb[0].mxu0
      %v3420 = vadd.f32 %v3316, %v3419
      %v3421 = vpop.f32.mrb[0].mxu0
      %3422 = vmatprep.mubr.bf16.mxu0 0
      %3423 = vmatmul.mubr.bf16.gmra.mrb[0].mxu0 %v3266
      %v3424 = vpop.f32.mrb[0].mxu0
      %v3425 = vadd.f32 %v3316, %v3424
      %v3426 = vpop.f32.mrb[0].mxu0
      %v3427 = vpop.f32.mrb[0].mxu0
      %v3428 = vadd.f32 %v3316, %v3427
      %v3429 = vpop.f32.mrb[0].mxu0
      %3430 = vmatprep.mubr.bf16.mxu0 0
      %3431 = vmatmul.mubr.bf16.gmra.mrb[0].mxu0 %v3267
      %v3432 = vpop.f32.mrb[0].mxu0
      %v3433 = vadd.f32 %v3316, %v3432
      %v3434 = vpop.f32.mrb[0].mxu0
      %v3435 = vpop.f32.mrb[0].mxu0
      %v3436 = vadd.f32 %v3316, %v3435
      %v3437 = vpop.f32.mrb[0].mxu0
      %3438 = vmatprep.mubr.bf16.mxu0 0
      %3439 = vmatmul.mubr.bf16.gmra.mrb[0].mxu0 %v3268
      %v3440 = vpop.f32.mrb[0].mxu0
      %v3441 = vadd.f32 %v3316, %v3440
      %v3442 = vpop.f32.mrb[0].mxu0
      %v3443 = vpop.f32.mrb[0].mxu0
      %v3444 = vadd.f32 %v3316, %v3443
      %v3445 = vpop.f32.mrb[0].mxu0
      %3446 = vmatprep.mubr.bf16.mxu0 0
      %3447 = vmatmul.mubr.bf16.gmra.mrb[0].mxu0 %v3269
      %v3448 = vpop.f32.mrb[0].mxu0
      %v3449 = vadd.f32 %v3316, %v3448
      %v3450 = vpop.f32.mrb[0].mxu0
      %v3451 = vpop.f32.mrb[0].mxu0
      %v3452 = vadd.f32 %v3316, %v3451
      %v3453 = vpop.f32.mrb[0].mxu0
      %3454 = vmatprep.mubr.bf16.mxu0 0
      %3455 = vmatmul.mubr.bf16.gmra.mrb[0].mxu0 %v3270
      %v3456 = vpop.f32.mrb[0].mxu0
      %v3457 = vadd.f32 %v3316, %v3456
      %v3458 = vpop.f32.mrb[0].mxu0
      %v3459 = vpop.f32.mrb[0].mxu0
      %v3460 = vadd.f32 %v3316, %v3459
      %v3461 = vpop.f32.mrb[0].mxu0
      %3462 = vmatprep.mubr.bf16.mxu0 0
      %3463 = vmatmul.mubr.bf16.gmra.mrb[0].mxu0 %v3271
      %v3464 = vpop.f32.mrb[0].mxu0
      %v3465 = vadd.f32 %v3316, %v3464
      %v3466 = vpop.f32.mrb[0].mxu0
      %v3467 = vpop.f32.mrb[0].mxu0
      %v3468 = vadd.f32 %v3316, %v3467
      %v3469 = vpop.f32.mrb[0].mxu0
      %3470 = vmatprep.mubr.bf16.mxu0 0
      %3471 = vmatmul.mubr.bf16.gmra.mrb[0].mxu0 %v3272
      %v3472 = vpop.f32.mrb[0].mxu0
      %v3473 = vadd.f32 %v3316, %v3472
      %v3474 = vpop.f32.mrb[0].mxu0
      %v3475 = vpop.f32.mrb[0].mxu0
      %v3476 = vadd.f32 %v3316, %v3475
      %v3477 = vpop.f32.mrb[0].mxu0
      %3478 = vmatprep.mubr.bf16.mxu0 0
      %3479 = vmatmul.mubr.bf16.gmra.mrb[0].mxu0 %v3273
      %v3480 = vpop.f32.mrb[0].mxu0
      %v3481 = vadd.f32 %v3316, %v3480
      %v3482 = vpop.f32.mrb[0].mxu0
      %v3483 = vpop.f32.mrb[0].mxu0
      %v3484 = vadd.f32 %v3316, %v3483
      %v3485 = vpop.f32.mrb[0].mxu0
      %3486 = vmatprep.mubr.bf16.mxu0 0
      %3487 = vmatmul.mubr.bf16.gmra.mrb[0].mxu0 %v3274
      %v3488 = vpop.f32.mrb[0].mxu0
      %v3489 = vadd.f32 %v3316, %v3488
      %v3490 = vpop.f32.mrb[0].mxu0
      %v3491 = vpop.f32.mrb[0].mxu0
      %v3492 = vadd.f32 %v3316, %v3491
      %v3493 = vpop.f32.mrb[0].mxu0
      %3494 = vmatprep.mubr.bf16.mxu0 0
      %3495 = vmatmul.mubr.bf16.gmra.mrb[0].mxu0 %v3275
      %v3496 = vpop.f32.mrb[0].mxu0
      %v3497 = vadd.f32 %v3316, %v3496
      %v3498 = vpop.f32.mrb[0].mxu0
      %v3499 = vpop.f32.mrb[0].mxu0
      %v3500 = vadd.f32 %v3316, %v3499
      %v3501 = vpop.f32.mrb[0].mxu0
      %3502 = vmatprep.mubr.bf16.mxu0 0
      %3503 = vmatmul.mubr.bf16.gmra.mrb[0].mxu0 %v3276
      %v3504 = vpop.f32.mrb[0].mxu0
      %v3505 = vadd.f32 %v3316, %v3504
      %v3506 = vpop.f32.mrb[0].mxu0
      %v3507 = vpop.f32.mrb[0].mxu0
      %v3508 = vadd.f32 %v3316, %v3507
      %v3509 = vpop.f32.mrb[0].mxu0
      %3510 = vmatprep.mubr.bf16.mxu0 0
      %3511 = vmatmul.mubr.bf16.gmra.mrb[0].mxu0 %v3277
      %v3512 = vpop.f32.mrb[0].mxu0
      %v3513 = vadd.f32 %v3316, %v3512
      %v3514 = vpop.f32.mrb[0].mxu0
      %v3515 = vpop.f32.mrb[0].mxu0
      %v3516 = vadd.f32 %v3316, %v3515
      %v3517 = vpop.f32.mrb[0].mxu0
      %3518 = vmatprep.mubr.bf16.mxu0 0
      %3519 = vmatmul.mubr.bf16.gmra.mrb[0].mxu0 %v3278
      %v3520 = vpop.f32.mrb[0].mxu0
      %v3521 = vadd.f32 %v3316, %v3520
      %v3522 = vpop.f32.mrb[0].mxu0
      %v3523 = vpop.f32.mrb[0].mxu0
      %v3524 = vadd.f32 %v3316, %v3523
      %v3525 = vpop.f32.mrb[0].mxu0
      %3526 = vmatprep.mubr.bf16.mxu0 0
      %3527 = vmatmul.mubr.bf16.gmra.mrb[0].mxu0 %v3279
      %v3528 = vpop.f32.mrb[0].mxu0
      %v3529 = vadd.f32 %v3316, %v3528
      %v3530 = vpop.f32.mrb[0].mxu0
      %v3531 = vpop.f32.mrb[0].mxu0
      %v3532 = vadd.f32 %v3316, %v3531
      %v3533 = vpop.f32.mrb[0].mxu0
      %3534 = vmatprep.mubr.bf16.mxu0 0
      %3535 = vmatmul.mubr.bf16.gmra.mrb[0].mxu0 %v3280
      %v3536 = vpop.f32.mrb[0].mxu0
      %v3537 = vadd.f32 %v3316, %v3536
      %v3538 = vpop.f32.mrb[0].mxu0
      %v3539 = vpop.f32.mrb[0].mxu0
      %v3540 = vadd.f32 %v3316, %v3539
      %v3541 = vpop.f32.mrb[0].mxu0
      %3542 = vmatprep.mubr.bf16.mxu0 0
      %3543 = vmatmul.mubr.bf16.gmra.mrb[0].mxu0 %v3281
      %v3544 = vpop.f32.mrb[0].mxu0
      %v3545 = vadd.f32 %v3316, %v3544
      %v3546 = vpop.f32.mrb[0].mxu0
      %v3547 = vpop.f32.mrb[0].mxu0
      %v3548 = vadd.f32 %v3316, %v3547
      %v3549 = vpop.f32.mrb[0].mxu0
      %3550 = vmatprep.mubr.bf16.mxu0 0
      %3551 = vmatmul.mubr.bf16.gmra.mrb[0].mxu0 %v3282
      %v3552 = vpop.f32.mrb[0].mxu0
      %v3553 = vadd.f32 %v3316, %v3552
      %v3554 = vpop.f32.mrb[0].mxu0
      %v3555 = vpop.f32.mrb[0].mxu0
      %v3556 = vadd.f32 %v3316, %v3555
      %v3557 = vpop.f32.mrb[0].mxu0
      %3558 = vmatprep.mubr.bf16.mxu0 0
      %3559 = vmatmul.mubr.bf16.gmra.mrb[0].mxu0 %v3283
      %v3560 = vpop.f32.mrb[0].mxu0
      %v3561 = vadd.f32 %v3316, %v3560
      %v3562 = vpop.f32.mrb[0].mxu0
      %v3563 = vpop.f32.mrb[0].mxu0
      %v3564 = vadd.f32 %v3316, %v3563
      %v3565 = vpop.f32.mrb[0].mxu0
      %3566 = vmatprep.mubr.bf16.mxu0 0
      %3567 = vmatmul.mubr.bf16.gmra.mrb[0].mxu0 %v3284
      %v3568 = vpop.f32.mrb[0].mxu0
      %v3569 = vadd.f32 %v3316, %v3568
      %v3570 = vpop.f32.mrb[0].mxu0
      %v3571 = vpop.f32.mrb[0].mxu0
      %v3572 = vadd.f32 %v3316, %v3571
      %v3573 = vpop.f32.mrb[0].mxu0
      %3574 = vmatprep.mubr.bf16.mxu0 0
      %3575 = vmatmul.mubr.bf16.gmra.mrb[0].mxu0 %v3285
      %v3576 = vpop.f32.mrb[0].mxu0
      %v3577 = vadd.f32 %v3316, %v3576
      %v3578 = vpop.f32.mrb[0].mxu0
      %v3579 = vpop.f32.mrb[0].mxu0
      %v3580 = vadd.f32 %v3316, %v3579
      %v3581 = vpop.f32.mrb[0].mxu0
      %3582 = vmatprep.mubr.bf16.mxu0 0
      %3583 = vmatmul.mubr.bf16.gmra.mrb[0].mxu0 %v3286
      %v3584 = vpop.f32.mrb[0].mxu0
      %v3585 = vadd.f32 %v3316, %v3584
      %v3586 = vpop.f32.mrb[0].mxu0
      %v3587 = vpop.f32.mrb[0].mxu0
      %v3588 = vadd.f32 %v3316, %v3587
      %v3589 = vpop.f32.mrb[0].mxu0
      %3590 = vmatprep.mubr.bf16.mxu0 0
      %3591 = vmatmul.mubr.bf16.gmra.mrb[0].mxu0 %v3287
      %v3592 = vpop.f32.mrb[0].mxu0
      %v3593 = vadd.f32 %v3316, %v3592
      %v3594 = vpop.f32.mrb[0].mxu0
      %v3595 = vpop.f32.mrb[0].mxu0
      %v3596 = vadd.f32 %v3316, %v3595
      %v3597 = vpop.f32.mrb[0].mxu0
      %3598 = vmatprep.mubr.bf16.mxu0 0
      %3599 = vmatmul.mubr.bf16.gmra.mrb[0].mxu0 %v3288
      %v3600 = vpop.f32.mrb[0].mxu0
      %v3601 = vadd.f32 %v3316, %v3600
      %v3602 = vpop.f32.mrb[0].mxu0
      %v3603 = vpop.f32.mrb[0].mxu0
      %v3604 = vadd.f32 %v3316, %v3603
      %v3605 = vpop.f32.mrb[0].mxu0
      %3606 = vmatprep.mubr.bf16.mxu0 0
      %3607 = vmatmul.mubr.bf16.gmra.mrb[0].mxu0 %v3289
      %v3608 = vpop.f32.mrb[0].mxu0
      %v3609 = vadd.f32 %v3316, %v3608
      %v3610 = vpop.f32.mrb[0].mxu0
      %v3611 = vpop.f32.mrb[0].mxu0
      %v3612 = vadd.f32 %v3316, %v3611
      %v3613 = vpop.f32.mrb[0].mxu0
      %3614 = vmatprep.mubr.bf16.mxu0 0
      %3615 = vmatmul.mubr.bf16.gmra.mrb[0].mxu0 %v3290
      %v3616 = vpop.f32.mrb[0].mxu0
      %v3617 = vadd.f32 %v3316, %v3616
      %v3618 = vpop.f32.mrb[0].mxu0
      %v3619 = vpop.f32.mrb[0].mxu0
      %v3620 = vadd.f32 %v3316, %v3619
      %v3621 = vpop.f32.mrb[0].mxu0
      %3622 = vmatprep.mubr.bf16.mxu0 0
      %3623 = vmatmul.mubr.bf16.gmra.mrb[0].mxu0 %v3291
      %v3624 = vpop.f32.mrb[0].mxu0
      %v3625 = vadd.f32 %v3316, %v3624
      %v3626 = vpop.f32.mrb[0].mxu0
      %v3627 = vpop.f32.mrb[0].mxu0
      %v3628 = vadd.f32 %v3316, %v3627
      %v3629 = vpop.f32.mrb[0].mxu0
      %3630 = vmatprep.mubr.bf16.mxu0 0
      %3631 = vmatmul.mubr.bf16.gmra.mrb[0].mxu0 %v3292
      %v3632 = vpop.f32.mrb[0].mxu0
      %v3633 = vadd.f32 %v3316, %v3632
      %v3634 = vpop.f32.mrb[0].mxu0
      %v3635 = vpop.f32.mrb[0].mxu0
      %v3636 = vadd.f32 %v3316, %v3635
      %v3637 = vpop.f32.mrb[0].mxu0
      %3638 = vmatprep.mubr.bf16.mxu0 0
      %3639 = vmatmul.mubr.bf16.gmra.mrb[0].mxu0 %v3293
      %v3640 = vpop.f32.mrb[0].mxu0
      %v3641 = vadd.f32 %v3316, %v3640
      %v3642 = vpop.f32.mrb[0].mxu0
      %v3643 = vpop.f32.mrb[0].mxu0
      %v3644 = vadd.f32 %v3316, %v3643
      %v3645 = vpop.f32.mrb[0].mxu0
      %3646 = vmatprep.mubr.bf16.mxu0 0
      %3647 = vmatmul.mubr.bf16.gmra.mrb[0].mxu0 %v3294
      %v3648 = vpop.f32.mrb[0].mxu0
      %v3649 = vadd.f32 %v3316, %v3648
      %v3650 = vpop.f32.mrb[0].mxu0
      %v3651 = vpop.f32.mrb[0].mxu0
      %v3652 = vpop.f32.mrb[0].mxu0
      %3653 = vdwg.mxu0
      %v3654 = vmax.f32 %v3401, 0.0
      %v3655 = vmax.f32 %v3404, 0.0
      %v3656 = vmax.f32 %v3409, 0.0
      %v3657 = vmax.f32 %v3412, 0.0
      %v3658 = vmax.f32 %v3417, 0.0
      %v3659 = vmax.f32 %v3420, 0.0
      %v3660 = vmax.f32 %v3425, 0.0
      %v3661 = vmax.f32 %v3428, 0.0
      %v3662 = vmax.f32 %v3433, 0.0
      %v3663 = vmax.f32 %v3436, 0.0
      %v3664 = vmax.f32 %v3441, 0.0
      %v3665 = vmax.f32 %v3444, 0.0
      %v3666 = vmax.f32 %v3449, 0.0
      %v3667 = vmax.f32 %v3452, 0.0
      %v3668 = vmax.f32 %v3457, 0.0
      %v3669 = vmax.f32 %v3460, 0.0
      %v3670 = vmax.f32 %v3465, 0.0
      %v3671 = vmax.f32 %v3468, 0.0
      %v3672 = vmax.f32 %v3473, 0.0
      %v3673 = vmax.f32 %v3476, 0.0
      %v3674 = vmax.f32 %v3481, 0.0
      %v3675 = vmax.f32 %v3484, 0.0
      %v3676 = vmax.f32 %v3489, 0.0
      %v3677 = vmax.f32 %v3492, 0.0
      %v3678 = vmax.f32 %v3497, 0.0
      %v3679 = vmax.f32 %v3500, 0.0
      %v3680 = vmax.f32 %v3505, 0.0
      %v3681 = vmax.f32 %v3508, 0.0
      %v3682 = vmax.f32 %v3513, 0.0
      %v3683 = vmax.f32 %v3516, 0.0
      %v3684 = vmax.f32 %v3521, 0.0
      %v3685 = vmax.f32 %v3524, 0.0
      %v3686 = vmax.f32 %v3529, 0.0
      %v3687 = vmax.f32 %v3532, 0.0
      %v3688 = vmax.f32 %v3537, 0.0
      %v3689 = vmax.f32 %v3540, 0.0
      %v3690 = vmax.f32 %v3545, 0.0
      %v3691 = vmax.f32 %v3548, 0.0
      %v3692 = vmax.f32 %v3553, 0.0
      %v3693 = vmax.f32 %v3556, 0.0
      %v3694 = vmax.f32 %v3561, 0.0
      %v3695 = vmax.f32 %v3564, 0.0
      %v3696 = vmax.f32 %v3569, 0.0
      %v3697 = vmax.f32 %v3572, 0.0
      %v3698 = vmax.f32 %v3577, 0.0
      %v3699 = vmax.f32 %v3580, 0.0
      %v3700 = vmax.f32 %v3585, 0.0
      %v3701 = vmax.f32 %v3588, 0.0
      %v3702 = vmax.f32 %v3593, 0.0
      %v3703 = vmax.f32 %v3596, 0.0
      %v3704 = vmax.f32 %v3601, 0.0
      %v3705 = vmax.f32 %v3604, 0.0
      %v3706 = vmax.f32 %v3609, 0.0
      %v3707 = vmax.f32 %v3612, 0.0
      %v3708 = vmax.f32 %v3617, 0.0
      %v3709 = vmax.f32 %v3620, 0.0
      %v3710 = vmax.f32 %v3625, 0.0
      %v3711 = vmax.f32 %v3628, 0.0
      %v3712 = vmax.f32 %v3633, 0.0
      %v3713 = vmax.f32 %v3636, 0.0
      %v3714 = vmax.f32 %v3641, 0.0
      %v3715 = vmax.f32 %v3644, 0.0
      %v3716 = vmax.f32 %v3649, 0.0
      %v3717 = vld [vmem:[%s6] sm:$0x1]
      %v3719 = vlaneseq
      %v3720 = vshrl.u32 %v3719, 7
      %v3721 = vsub.s32 0, %v3720
      %v3722 = vrot.slane %v3717, %v3721
      %v3724 = vmul.f32 %v3654, %v3722
      %v3725 = vmul.f32 %v3655, %v3722
      %v3726 = vmul.f32 %v3656, %v3722
      %v3727 = vmul.f32 %v3657, %v3722
      %v3728 = vmul.f32 %v3658, %v3722
      %v3729 = vmul.f32 %v3659, %v3722
      %v3730 = vmul.f32 %v3660, %v3722
      %v3731 = vmul.f32 %v3661, %v3722
      %v3732 = vmul.f32 %v3662, %v3722
      %v3733 = vmul.f32 %v3663, %v3722
      %v3734 = vmul.f32 %v3664, %v3722
      %v3735 = vmul.f32 %v3665, %v3722
      %v3736 = vmul.f32 %v3666, %v3722
      %v3737 = vmul.f32 %v3667, %v3722
      %v3738 = vmul.f32 %v3668, %v3722
      %v3739 = vmul.f32 %v3669, %v3722
      %v3740 = vmul.f32 %v3670, %v3722
      %v3741 = vmul.f32 %v3671, %v3722
      %v3742 = vmul.f32 %v3672, %v3722
      %v3743 = vmul.f32 %v3673, %v3722
      %v3744 = vmul.f32 %v3674, %v3722
      %v3745 = vmul.f32 %v3675, %v3722
      %v3746 = vmul.f32 %v3676, %v3722
      %v3747 = vmul.f32 %v3677, %v3722
      %v3748 = vmul.f32 %v3678, %v3722
      %v3749 = vmul.f32 %v3679, %v3722
      %v3750 = vmul.f32 %v3680, %v3722
      %v3751 = vmul.f32 %v3681, %v3722
      %v3752 = vmul.f32 %v3682, %v3722
      %v3753 = vmul.f32 %v3683, %v3722
      %v3754 = vmul.f32 %v3684, %v3722
      %v3755 = vmul.f32 %v3685, %v3722
      %v3756 = vmul.f32 %v3686, %v3722
      %v3757 = vmul.f32 %v3687, %v3722
      %v3758 = vmul.f32 %v3688, %v3722
      %v3759 = vmul.f32 %v3689, %v3722
      %v3760 = vmul.f32 %v3690, %v3722
      %v3761 = vmul.f32 %v3691, %v3722
      %v3762 = vmul.f32 %v3692, %v3722
      %v3763 = vmul.f32 %v3693, %v3722
      %v3764 = vmul.f32 %v3694, %v3722
      %v3765 = vmul.f32 %v3695, %v3722
      %v3766 = vmul.f32 %v3696, %v3722
      %v3767 = vmul.f32 %v3697, %v3722
      %v3768 = vmul.f32 %v3698, %v3722
      %v3769 = vmul.f32 %v3699, %v3722
      %v3770 = vmul.f32 %v3700, %v3722
      %v3771 = vmul.f32 %v3701, %v3722
      %v3772 = vmul.f32 %v3702, %v3722
      %v3773 = vmul.f32 %v3703, %v3722
      %v3774 = vmul.f32 %v3704, %v3722
      %v3775 = vmul.f32 %v3705, %v3722
      %v3776 = vmul.f32 %v3706, %v3722
      %v3777 = vmul.f32 %v3707, %v3722
      %v3778 = vmul.f32 %v3708, %v3722
      %v3779 = vmul.f32 %v3709, %v3722
      %v3780 = vmul.f32 %v3710, %v3722
      %v3781 = vmul.f32 %v3711, %v3722
      %v3782 = vmul.f32 %v3712, %v3722
      %v3783 = vmul.f32 %v3713, %v3722
      %v3784 = vmul.f32 %v3714, %v3722
      %v3785 = vmul.f32 %v3715, %v3722
      %v3786 = vmul.f32 %v3716, %v3722
      %3787 = vadd.xlane.f32.xlu0 %v3724
      %v3788 = vpop.xlane.xlu0 %3787
      %3789 = vadd.xlane.f32.xlu0 %v3725
      %v3790 = vpop.xlane.xlu0 %3789
      %3791 = vadd.xlane.f32.xlu0 %v3726
      %v3792 = vpop.xlane.xlu0 %3791
      %3793 = vadd.xlane.f32.xlu0 %v3727
      %v3794 = vpop.xlane.xlu0 %3793
      %3795 = vadd.xlane.f32.xlu0 %v3728
      %v3796 = vpop.xlane.xlu0 %3795
      %3797 = vadd.xlane.f32.xlu0 %v3729
      %v3798 = vpop.xlane.xlu0 %3797
      %3799 = vadd.xlane.f32.xlu0 %v3730
      %v3800 = vpop.xlane.xlu0 %3799
      %3801 = vadd.xlane.f32.xlu0 %v3731
      %v3802 = vpop.xlane.xlu0 %3801
      %3803 = vadd.xlane.f32.xlu0 %v3732
      %v3804 = vpop.xlane.xlu0 %3803
      %3805 = vadd.xlane.f32.xlu0 %v3733
      %v3806 = vpop.xlane.xlu0 %3805
      %3807 = vadd.xlane.f32.xlu0 %v3734
      %v3808 = vpop.xlane.xlu0 %3807
      %3809 = vadd.xlane.f32.xlu0 %v3735
      %v3810 = vpop.xlane.xlu0 %3809
      %3811 = vadd.xlane.f32.xlu0 %v3736
      %v3812 = vpop.xlane.xlu0 %3811
      %3813 = vadd.xlane.f32.xlu0 %v3737
      %v3814 = vpop.xlane.xlu0 %3813
      %3815 = vadd.xlane.f32.xlu0 %v3738
      %v3816 = vpop.xlane.xlu0 %3815
      %3817 = vadd.xlane.f32.xlu0 %v3739
      %v3818 = vpop.xlane.xlu0 %3817
      %3819 = vadd.xlane.f32.xlu0 %v3740
      %v3820 = vpop.xlane.xlu0 %3819
      %3821 = vadd.xlane.f32.xlu0 %v3741
      %v3822 = vpop.xlane.xlu0 %3821
      %3823 = vadd.xlane.f32.xlu0 %v3742
      %v3824 = vpop.xlane.xlu0 %3823
      %3825 = vadd.xlane.f32.xlu0 %v3743
      %v3826 = vpop.xlane.xlu0 %3825
      %3827 = vadd.xlane.f32.xlu0 %v3744
      %v3828 = vpop.xlane.xlu0 %3827
      %3829 = vadd.xlane.f32.xlu0 %v3745
      %v3830 = vpop.xlane.xlu0 %3829
      %3831 = vadd.xlane.f32.xlu0 %v3746
      %v3832 = vpop.xlane.xlu0 %3831
      %3833 = vadd.xlane.f32.xlu0 %v3747
      %v3834 = vpop.xlane.xlu0 %3833
      %3835 = vadd.xlane.f32.xlu0 %v3748
      %v3836 = vpop.xlane.xlu0 %3835
      %3837 = vadd.xlane.f32.xlu0 %v3749
      %v3838 = vpop.xlane.xlu0 %3837
      %3839 = vadd.xlane.f32.xlu0 %v3750
      %v3840 = vpop.xlane.xlu0 %3839
      %3841 = vadd.xlane.f32.xlu0 %v3751
      %v3842 = vpop.xlane.xlu0 %3841
      %3843 = vadd.xlane.f32.xlu0 %v3752
      %v3844 = vpop.xlane.xlu0 %3843
      %3845 = vadd.xlane.f32.xlu0 %v3753
      %v3846 = vpop.xlane.xlu0 %3845
      %3847 = vadd.xlane.f32.xlu0 %v3754
      %v3848 = vpop.xlane.xlu0 %3847
      %3849 = vadd.xlane.f32.xlu0 %v3755
      %v3850 = vpop.xlane.xlu0 %3849
      %3851 = vadd.xlane.f32.xlu0 %v3756
      %v3852 = vpop.xlane.xlu0 %3851
      %3853 = vadd.xlane.f32.xlu0 %v3757
      %v3854 = vpop.xlane.xlu0 %3853
      %3855 = vadd.xlane.f32.xlu0 %v3758
      %v3856 = vpop.xlane.xlu0 %3855
      %3857 = vadd.xlane.f32.xlu0 %v3759
      %v3858 = vpop.xlane.xlu0 %3857
      %3859 = vadd.xlane.f32.xlu0 %v3760
      %v3860 = vpop.xlane.xlu0 %3859
      %3861 = vadd.xlane.f32.xlu0 %v3761
      %v3862 = vpop.xlane.xlu0 %3861
      %3863 = vadd.xlane.f32.xlu0 %v3762
      %v3864 = vpop.xlane.xlu0 %3863
      %3865 = vadd.xlane.f32.xlu0 %v3763
      %v3866 = vpop.xlane.xlu0 %3865
      %3867 = vadd.xlane.f32.xlu0 %v3764
      %v3868 = vpop.xlane.xlu0 %3867
      %3869 = vadd.xlane.f32.xlu0 %v3765
      %v3870 = vpop.xlane.xlu0 %3869
      %3871 = vadd.xlane.f32.xlu0 %v3766
      %v3872 = vpop.xlane.xlu0 %3871
      %3873 = vadd.xlane.f32.xlu0 %v3767
      %v3874 = vpop.xlane.xlu0 %3873
      %3875 = vadd.xlane.f32.xlu0 %v3768
      %v3876 = vpop.xlane.xlu0 %3875
      %3877 = vadd.xlane.f32.xlu0 %v3769
      %v3878 = vpop.xlane.xlu0 %3877
      %3879 = vadd.xlane.f32.xlu0 %v3770
      %v3880 = vpop.xlane.xlu0 %3879
      %3881 = vadd.xlane.f32.xlu0 %v3771
      %v3882 = vpop.xlane.xlu0 %3881
      %3883 = vadd.xlane.f32.xlu0 %v3772
      %v3884 = vpop.xlane.xlu0 %3883
      %3885 = vadd.xlane.f32.xlu0 %v3773
      %v3886 = vpop.xlane.xlu0 %3885
      %3887 = vadd.xlane.f32.xlu0 %v3774
      %v3888 = vpop.xlane.xlu0 %3887
      %3889 = vadd.xlane.f32.xlu0 %v3775
      %v3890 = vpop.xlane.xlu0 %3889
      %3891 = vadd.xlane.f32.xlu0 %v3776
      %v3892 = vpop.xlane.xlu0 %3891
      %3893 = vadd.xlane.f32.xlu0 %v3777
      %v3894 = vpop.xlane.xlu0 %3893
      %3895 = vadd.xlane.f32.xlu0 %v3778
      %v3896 = vpop.xlane.xlu0 %3895
      %3897 = vadd.xlane.f32.xlu0 %v3779
      %v3898 = vpop.xlane.xlu0 %3897
      %3899 = vadd.xlane.f32.xlu0 %v3780
      %v3900 = vpop.xlane.xlu0 %3899
      %3901 = vadd.xlane.f32.xlu0 %v3781
      %v3902 = vpop.xlane.xlu0 %3901
      %3903 = vadd.xlane.f32.xlu0 %v3782
      %v3904 = vpop.xlane.xlu0 %3903
      %3905 = vadd.xlane.f32.xlu0 %v3783
      %v3906 = vpop.xlane.xlu0 %3905
      %3907 = vadd.xlane.f32.xlu0 %v3784
      %v3908 = vpop.xlane.xlu0 %3907
      %3909 = vadd.xlane.f32.xlu0 %v3785
      %v3910 = vpop.xlane.xlu0 %3909
      %3911 = vadd.xlane.f32.xlu0 %v3786
      %v3912 = vpop.xlane.xlu0 %3911
      %v3913 = vld [vmem:[#allocation2] sm:$0x1]
      %v3915 = vlaneseq
      %v3916 = vshrl.u32 %v3915, 7
      %v3917 = vsub.s32 0, %v3916
      %v3918 = vrot.slane %v3913, %v3917
      %v3920 = vadd.f32 %v3788, %v3918
      %v3921 = vadd.f32 %v3790, %v3918
      %v3922 = vadd.f32 %v3792, %v3918
      %v3923 = vadd.f32 %v3794, %v3918
      %v3924 = vadd.f32 %v3796, %v3918
      %v3925 = vadd.f32 %v3798, %v3918
      %v3926 = vadd.f32 %v3800, %v3918
      %v3927 = vadd.f32 %v3802, %v3918
      %v3928 = vadd.f32 %v3804, %v3918
      %v3929 = vadd.f32 %v3806, %v3918
      %v3930 = vadd.f32 %v3808, %v3918
      %v3931 = vadd.f32 %v3810, %v3918
      %v3932 = vadd.f32 %v3812, %v3918
      %v3933 = vadd.f32 %v3814, %v3918
      %v3934 = vadd.f32 %v3816, %v3918
      %v3935 = vadd.f32 %v3818, %v3918
      %v3936 = vadd.f32 %v3820, %v3918
      %v3937 = vadd.f32 %v3822, %v3918
      %v3938 = vadd.f32 %v3824, %v3918
      %v3939 = vadd.f32 %v3826, %v3918
      %v3940 = vadd.f32 %v3828, %v3918
      %v3941 = vadd.f32 %v3830, %v3918
      %v3942 = vadd.f32 %v3832, %v3918
      %v3943 = vadd.f32 %v3834, %v3918
      %v3944 = vadd.f32 %v3836, %v3918
      %v3945 = vadd.f32 %v3838, %v3918
      %v3946 = vadd.f32 %v3840, %v3918
      %v3947 = vadd.f32 %v3842, %v3918
      %v3948 = vadd.f32 %v3844, %v3918
      %v3949 = vadd.f32 %v3846, %v3918
      %v3950 = vadd.f32 %v3848, %v3918
      %v3951 = vadd.f32 %v3850, %v3918
      %v3952 = vadd.f32 %v3852, %v3918
      %v3953 = vadd.f32 %v3854, %v3918
      %v3954 = vadd.f32 %v3856, %v3918
      %v3955 = vadd.f32 %v3858, %v3918
      %v3956 = vadd.f32 %v3860, %v3918
      %v3957 = vadd.f32 %v3862, %v3918
      %v3958 = vadd.f32 %v3864, %v3918
      %v3959 = vadd.f32 %v3866, %v3918
      %v3960 = vadd.f32 %v3868, %v3918
      %v3961 = vadd.f32 %v3870, %v3918
      %v3962 = vadd.f32 %v3872, %v3918
      %v3963 = vadd.f32 %v3874, %v3918
      %v3964 = vadd.f32 %v3876, %v3918
      %v3965 = vadd.f32 %v3878, %v3918
      %v3966 = vadd.f32 %v3880, %v3918
      %v3967 = vadd.f32 %v3882, %v3918
      %v3968 = vadd.f32 %v3884, %v3918
      %v3969 = vadd.f32 %v3886, %v3918
      %v3970 = vadd.f32 %v3888, %v3918
      %v3971 = vadd.f32 %v3890, %v3918
      %v3972 = vadd.f32 %v3892, %v3918
      %v3973 = vadd.f32 %v3894, %v3918
      %v3974 = vadd.f32 %v3896, %v3918
      %v3975 = vadd.f32 %v3898, %v3918
      %v3976 = vadd.f32 %v3900, %v3918
      %v3977 = vadd.f32 %v3902, %v3918
      %v3978 = vadd.f32 %v3904, %v3918
      %v3979 = vadd.f32 %v3906, %v3918
      %v3980 = vadd.f32 %v3908, %v3918
      %v3981 = vadd.f32 %v3910, %v3918
      %v3982 = vadd.f32 %v3912, %v3918
      %v3983 = vxor.u32 %v3920, 2147483648
      %v3984 = vxor.u32 %v3921, 2147483648
      %v3985 = vxor.u32 %v3922, 2147483648
      %v3986 = vxor.u32 %v3923, 2147483648
      %v3987 = vxor.u32 %v3924, 2147483648
      %v3988 = vxor.u32 %v3925, 2147483648
      %v3989 = vxor.u32 %v3926, 2147483648
      %v3990 = vxor.u32 %v3927, 2147483648
      %v3991 = vxor.u32 %v3928, 2147483648
      %v3992 = vxor.u32 %v3929, 2147483648
      %v3993 = vxor.u32 %v3930, 2147483648
      %v3994 = vxor.u32 %v3931, 2147483648
      %v3995 = vxor.u32 %v3932, 2147483648
      %v3996 = vxor.u32 %v3933, 2147483648
      %v3997 = vxor.u32 %v3934, 2147483648
      %v3998 = vxor.u32 %v3935, 2147483648
      %v3999 = vxor.u32 %v3936, 2147483648
      %v4000 = vxor.u32 %v3937, 2147483648
      %v4001 = vxor.u32 %v3938, 2147483648
      %v4002 = vxor.u32 %v3939, 2147483648
      %v4003 = vxor.u32 %v3940, 2147483648
      %v4004 = vxor.u32 %v3941, 2147483648
      %v4005 = vxor.u32 %v3942, 2147483648
      %v4006 = vxor.u32 %v3943, 2147483648
      %v4007 = vxor.u32 %v3944, 2147483648
      %v4008 = vxor.u32 %v3945, 2147483648
      %v4009 = vxor.u32 %v3946, 2147483648
      %v4010 = vxor.u32 %v3947, 2147483648
      %v4011 = vxor.u32 %v3948, 2147483648
      %v4012 = vxor.u32 %v3949, 2147483648
      %v4013 = vxor.u32 %v3950, 2147483648
      %v4014 = vxor.u32 %v3951, 2147483648
      %v4015 = vxor.u32 %v3952, 2147483648
      %v4016 = vxor.u32 %v3953, 2147483648
      %v4017 = vxor.u32 %v3954, 2147483648
      %v4018 = vxor.u32 %v3955, 2147483648
      %v4019 = vxor.u32 %v3956, 2147483648
      %v4020 = vxor.u32 %v3957, 2147483648
      %v4021 = vxor.u32 %v3958, 2147483648
      %v4022 = vxor.u32 %v3959, 2147483648
      %v4023 = vxor.u32 %v3960, 2147483648
      %v4024 = vxor.u32 %v3961, 2147483648
      %v4025 = vxor.u32 %v3962, 2147483648
      %v4026 = vxor.u32 %v3963, 2147483648
      %v4027 = vxor.u32 %v3964, 2147483648
      %v4028 = vxor.u32 %v3965, 2147483648
      %v4029 = vxor.u32 %v3966, 2147483648
      %v4030 = vxor.u32 %v3967, 2147483648
      %v4031 = vxor.u32 %v3968, 2147483648
      %v4032 = vxor.u32 %v3969, 2147483648
      %v4033 = vxor.u32 %v3970, 2147483648
      %v4034 = vxor.u32 %v3971, 2147483648
      %v4035 = vxor.u32 %v3972, 2147483648
      %v4036 = vxor.u32 %v3973, 2147483648
      %v4037 = vxor.u32 %v3974, 2147483648
      %v4038 = vxor.u32 %v3975, 2147483648
      %v4039 = vxor.u32 %v3976, 2147483648
      %v4040 = vxor.u32 %v3977, 2147483648
      %v4041 = vxor.u32 %v3978, 2147483648
      %v4042 = vxor.u32 %v3979, 2147483648
      %v4043 = vxor.u32 %v3980, 2147483648
      %v4044 = vxor.u32 %v3981, 2147483648
      %v4045 = vxor.u32 %v3982, 2147483648
      %v4046 = vmul.f32 %v3983, 1.442695
      %v4047 = vpow.pop %v4046
      %v4048 = vmul.f32 %v3984, 1.442695
      %v4049 = vpow.pop %v4048
      %v4050 = vmul.f32 %v3985, 1.442695
      %v4051 = vpow.pop %v4050
      %v4052 = vmul.f32 %v3986, 1.442695
      %v4053 = vpow.pop %v4052
      %v4054 = vmul.f32 %v3987, 1.442695
      %v4055 = vpow.pop %v4054
      %v4056 = vmul.f32 %v3988, 1.442695
      %v4057 = vpow.pop %v4056
      %v4058 = vmul.f32 %v3989, 1.442695
      %v4059 = vpow.pop %v4058
      %v4060 = vmul.f32 %v3990, 1.442695
      %v4061 = vpow.pop %v4060
      %v4062 = vmul.f32 %v3991, 1.442695
      %v4063 = vpow.pop %v4062
      %v4064 = vmul.f32 %v3992, 1.442695
      %v4065 = vpow.pop %v4064
      %v4066 = vmul.f32 %v3993, 1.442695
      %v4067 = vpow.pop %v4066
      %v4068 = vmul.f32 %v3994, 1.442695
      %v4069 = vpow.pop %v4068
      %v4070 = vmul.f32 %v3995, 1.442695
      %v4071 = vpow.pop %v4070
      %v4072 = vmul.f32 %v3996, 1.442695
      %v4073 = vpow.pop %v4072
      %v4074 = vmul.f32 %v3997, 1.442695
      %v4075 = vpow.pop %v4074
      %v4076 = vmul.f32 %v3998, 1.442695
      %v4077 = vpow.pop %v4076
      %v4078 = vmul.f32 %v3999, 1.442695
      %v4079 = vpow.pop %v4078
      %v4080 = vmul.f32 %v4000, 1.442695
      %v4081 = vpow.pop %v4080
      %v4082 = vmul.f32 %v4001, 1.442695
      %v4083 = vpow.pop %v4082
      %v4084 = vmul.f32 %v4002, 1.442695
      %v4085 = vpow.pop %v4084
      %v4086 = vmul.f32 %v4003, 1.442695
      %v4087 = vpow.pop %v4086
      %v4088 = vmul.f32 %v4004, 1.442695
      %v4089 = vpow.pop %v4088
      %v4090 = vmul.f32 %v4005, 1.442695
      %v4091 = vpow.pop %v4090
      %v4092 = vmul.f32 %v4006, 1.442695
      %v4093 = vpow.pop %v4092
      %v4094 = vmul.f32 %v4007, 1.442695
      %v4095 = vpow.pop %v4094
      %v4096 = vmul.f32 %v4008, 1.442695
      %v4097 = vpow.pop %v4096
      %v4098 = vmul.f32 %v4009, 1.442695
      %v4099 = vpow.pop %v4098
      %v4100 = vmul.f32 %v4010, 1.442695
      %v4101 = vpow.pop %v4100
      %v4102 = vmul.f32 %v4011, 1.442695
      %v4103 = vpow.pop %v4102
      %v4104 = vmul.f32 %v4012, 1.442695
      %v4105 = vpow.pop %v4104
      %v4106 = vmul.f32 %v4013, 1.442695
      %v4107 = vpow.pop %v4106
      %v4108 = vmul.f32 %v4014, 1.442695
      %v4109 = vpow.pop %v4108
      %v4110 = vmul.f32 %v4015, 1.442695
      %v4111 = vpow.pop %v4110
      %v4112 = vmul.f32 %v4016, 1.442695
      %v4113 = vpow.pop %v4112
      %v4114 = vmul.f32 %v4017, 1.442695
      %v4115 = vpow.pop %v4114
      %v4116 = vmul.f32 %v4018, 1.442695
      %v4117 = vpow.pop %v4116
      %v4118 = vmul.f32 %v4019, 1.442695
      %v4119 = vpow.pop %v4118
      %v4120 = vmul.f32 %v4020, 1.442695
      %v4121 = vpow.pop %v4120
      %v4122 = vmul.f32 %v4021, 1.442695
      %v4123 = vpow.pop %v4122
      %v4124 = vmul.f32 %v4022, 1.442695
      %v4125 = vpow.pop %v4124
      %v4126 = vmul.f32 %v4023, 1.442695
      %v4127 = vpow.pop %v4126
      %v4128 = vmul.f32 %v4024, 1.442695
      %v4129 = vpow.pop %v4128
      %v4130 = vmul.f32 %v4025, 1.442695
      %v4131 = vpow.pop %v4130
      %v4132 = vmul.f32 %v4026, 1.442695
      %v4133 = vpow.pop %v4132
      %v4134 = vmul.f32 %v4027, 1.442695
      %v4135 = vpow.pop %v4134
      %v4136 = vmul.f32 %v4028, 1.442695
      %v4137 = vpow.pop %v4136
      %v4138 = vmul.f32 %v4029, 1.442695
      %v4139 = vpow.pop %v4138
      %v4140 = vmul.f32 %v4030, 1.442695
      %v4141 = vpow.pop %v4140
      %v4142 = vmul.f32 %v4031, 1.442695
      %v4143 = vpow.pop %v4142
      %v4144 = vmul.f32 %v4032, 1.442695
      %v4145 = vpow.pop %v4144
      %v4146 = vmul.f32 %v4033, 1.442695
      %v4147 = vpow.pop %v4146
      %v4148 = vmul.f32 %v4034, 1.442695
      %v4149 = vpow.pop %v4148
      %v4150 = vmul.f32 %v4035, 1.442695
      %v4151 = vpow.pop %v4150
      %v4152 = vmul.f32 %v4036, 1.442695
      %v4153 = vpow.pop %v4152
      %v4154 = vmul.f32 %v4037, 1.442695
      %v4155 = vpow.pop %v4154
      %v4156 = vmul.f32 %v4038, 1.442695
      %v4157 = vpow.pop %v4156
      %v4158 = vmul.f32 %v4039, 1.442695
      %v4159 = vpow.pop %v4158
      %v4160 = vmul.f32 %v4040, 1.442695
      %v4161 = vpow.pop %v4160
      %v4162 = vmul.f32 %v4041, 1.442695
      %v4163 = vpow.pop %v4162
      %v4164 = vmul.f32 %v4042, 1.442695
      %v4165 = vpow.pop %v4164
      %v4166 = vmul.f32 %v4043, 1.442695
      %v4167 = vpow.pop %v4166
      %v4168 = vmul.f32 %v4044, 1.442695
      %v4169 = vpow.pop %v4168
      %v4170 = vmul.f32 %v4045, 1.442695
      %v4171 = vpow.pop %v4170
      %v4172 = vadd.f32 %v4047, 1.0
      %v4173 = vadd.f32 %v4049, 1.0
      %v4174 = vadd.f32 %v4051, 1.0
      %v4175 = vadd.f32 %v4053, 1.0
      %v4176 = vadd.f32 %v4055, 1.0
      %v4177 = vadd.f32 %v4057, 1.0
      %v4178 = vadd.f32 %v4059, 1.0
      %v4179 = vadd.f32 %v4061, 1.0
      %v4180 = vadd.f32 %v4063, 1.0
      %v4181 = vadd.f32 %v4065, 1.0
      %v4182 = vadd.f32 %v4067, 1.0
      %v4183 = vadd.f32 %v4069, 1.0
      %v4184 = vadd.f32 %v4071, 1.0
      %v4185 = vadd.f32 %v4073, 1.0
      %v4186 = vadd.f32 %v4075, 1.0
      %v4187 = vadd.f32 %v4077, 1.0
      %v4188 = vadd.f32 %v4079, 1.0
      %v4189 = vadd.f32 %v4081, 1.0
      %v4190 = vadd.f32 %v4083, 1.0
      %v4191 = vadd.f32 %v4085, 1.0
      %v4192 = vadd.f32 %v4087, 1.0
      %v4193 = vadd.f32 %v4089, 1.0
      %v4194 = vadd.f32 %v4091, 1.0
      %v4195 = vadd.f32 %v4093, 1.0
      %v4196 = vadd.f32 %v4095, 1.0
      %v4197 = vadd.f32 %v4097, 1.0
      %v4198 = vadd.f32 %v4099, 1.0
      %v4199 = vadd.f32 %v4101, 1.0
      %v4200 = vadd.f32 %v4103, 1.0
      %v4201 = vadd.f32 %v4105, 1.0
      %v4202 = vadd.f32 %v4107, 1.0
      %v4203 = vadd.f32 %v4109, 1.0
      %v4204 = vadd.f32 %v4111, 1.0
      %v4205 = vadd.f32 %v4113, 1.0
      %v4206 = vadd.f32 %v4115, 1.0
      %v4207 = vadd.f32 %v4117, 1.0
      %v4208 = vadd.f32 %v4119, 1.0
      %v4209 = vadd.f32 %v4121, 1.0
      %v4210 = vadd.f32 %v4123, 1.0
      %v4211 = vadd.f32 %v4125, 1.0
      %v4212 = vadd.f32 %v4127, 1.0
      %v4213 = vadd.f32 %v4129, 1.0
      %v4214 = vadd.f32 %v4131, 1.0
      %v4215 = vadd.f32 %v4133, 1.0
      %v4216 = vadd.f32 %v4135, 1.0
      %v4217 = vadd.f32 %v4137, 1.0
      %v4218 = vadd.f32 %v4139, 1.0
      %v4219 = vadd.f32 %v4141, 1.0
      %v4220 = vadd.f32 %v4143, 1.0
      %v4221 = vadd.f32 %v4145, 1.0
      %v4222 = vadd.f32 %v4147, 1.0
      %v4223 = vadd.f32 %v4149, 1.0
      %v4224 = vadd.f32 %v4151, 1.0
      %v4225 = vadd.f32 %v4153, 1.0
      %v4226 = vadd.f32 %v4155, 1.0
      %v4227 = vadd.f32 %v4157, 1.0
      %v4228 = vadd.f32 %v4159, 1.0
      %v4229 = vadd.f32 %v4161, 1.0
      %v4230 = vadd.f32 %v4163, 1.0
      %v4231 = vadd.f32 %v4165, 1.0
      %v4232 = vadd.f32 %v4167, 1.0
      %v4233 = vadd.f32 %v4169, 1.0
      %v4234 = vadd.f32 %v4171, 1.0
      %v4235 = vrcp.pop %v4172
      %v4236 = vmul.f32 1.0, %v4235
      %v4237 = vrcp.pop %v4173
      %v4238 = vmul.f32 1.0, %v4237
      %v4239 = vrcp.pop %v4174
      %v4240 = vmul.f32 1.0, %v4239
      %v4241 = vrcp.pop %v4175
      %v4242 = vmul.f32 1.0, %v4241
      %v4243 = vrcp.pop %v4176
      %v4244 = vmul.f32 1.0, %v4243
      %v4245 = vrcp.pop %v4177
      %v4246 = vmul.f32 1.0, %v4245
      %v4247 = vrcp.pop %v4178
      %v4248 = vmul.f32 1.0, %v4247
      %v4249 = vrcp.pop %v4179
      %v4250 = vmul.f32 1.0, %v4249
      %v4251 = vrcp.pop %v4180
      %v4252 = vmul.f32 1.0, %v4251
      %v4253 = vrcp.pop %v4181
      %v4254 = vmul.f32 1.0, %v4253
      %v4255 = vrcp.pop %v4182
      %v4256 = vmul.f32 1.0, %v4255
      %v4257 = vrcp.pop %v4183
      %v4258 = vmul.f32 1.0, %v4257
      %v4259 = vrcp.pop %v4184
      %v4260 = vmul.f32 1.0, %v4259
      %v4261 = vrcp.pop %v4185
      %v4262 = vmul.f32 1.0, %v4261
      %v4263 = vrcp.pop %v4186
      %v4264 = vmul.f32 1.0, %v4263
      %v4265 = vrcp.pop %v4187
      %v4266 = vmul.f32 1.0, %v4265
      %v4267 = vrcp.pop %v4188
      %v4268 = vmul.f32 1.0, %v4267
      %v4269 = vrcp.pop %v4189
      %v4270 = vmul.f32 1.0, %v4269
      %v4271 = vrcp.pop %v4190
      %v4272 = vmul.f32 1.0, %v4271
      %v4273 = vrcp.pop %v4191
      %v4274 = vmul.f32 1.0, %v4273
      %v4275 = vrcp.pop %v4192
      %v4276 = vmul.f32 1.0, %v4275
      %v4277 = vrcp.pop %v4193
      %v4278 = vmul.f32 1.0, %v4277
      %v4279 = vrcp.pop %v4194
      %v4280 = vmul.f32 1.0, %v4279
      %v4281 = vrcp.pop %v4195
      %v4282 = vmul.f32 1.0, %v4281
      %v4283 = vrcp.pop %v4196
      %v4284 = vmul.f32 1.0, %v4283
      %v4285 = vrcp.pop %v4197
      %v4286 = vmul.f32 1.0, %v4285
      %v4287 = vrcp.pop %v4198
      %v4288 = vmul.f32 1.0, %v4287
      %v4289 = vrcp.pop %v4199
      %v4290 = vmul.f32 1.0, %v4289
      %v4291 = vrcp.pop %v4200
      %v4292 = vmul.f32 1.0, %v4291
      %v4293 = vrcp.pop %v4201
      %v4294 = vmul.f32 1.0, %v4293
      %v4295 = vrcp.pop %v4202
      %v4296 = vmul.f32 1.0, %v4295
      %v4297 = vrcp.pop %v4203
      %v4298 = vmul.f32 1.0, %v4297
      %v4299 = vrcp.pop %v4204
      %v4300 = vmul.f32 1.0, %v4299
      %v4301 = vrcp.pop %v4205
      %v4302 = vmul.f32 1.0, %v4301
      %v4303 = vrcp.pop %v4206
      %v4304 = vmul.f32 1.0, %v4303
      %v4305 = vrcp.pop %v4207
      %v4306 = vmul.f32 1.0, %v4305
      %v4307 = vrcp.pop %v4208
      %v4308 = vmul.f32 1.0, %v4307
      %v4309 = vrcp.pop %v4209
      %v4310 = vmul.f32 1.0, %v4309
      %v4311 = vrcp.pop %v4210
      %v4312 = vmul.f32 1.0, %v4311
      %v4313 = vrcp.pop %v4211
      %v4314 = vmul.f32 1.0, %v4313
      %v4315 = vrcp.pop %v4212
      %v4316 = vmul.f32 1.0, %v4315
      %v4317 = vrcp.pop %v4213
      %v4318 = vmul.f32 1.0, %v4317
      %v4319 = vrcp.pop %v4214
      %v4320 = vmul.f32 1.0, %v4319
      %v4321 = vrcp.pop %v4215
      %v4322 = vmul.f32 1.0, %v4321
      %v4323 = vrcp.pop %v4216
      %v4324 = vmul.f32 1.0, %v4323
      %v4325 = vrcp.pop %v4217
      %v4326 = vmul.f32 1.0, %v4325
      %v4327 = vrcp.pop %v4218
      %v4328 = vmul.f32 1.0, %v4327
      %v4329 = vrcp.pop %v4219
      %v4330 = vmul.f32 1.0, %v4329
      %v4331 = vrcp.pop %v4220
      %v4332 = vmul.f32 1.0, %v4331
      %v4333 = vrcp.pop %v4221
      %v4334 = vmul.f32 1.0, %v4333
      %v4335 = vrcp.pop %v4222
      %v4336 = vmul.f32 1.0, %v4335
      %v4337 = vrcp.pop %v4223
      %v4338 = vmul.f32 1.0, %v4337
      %v4339 = vrcp.pop %v4224
      %v4340 = vmul.f32 1.0, %v4339
      %v4341 = vrcp.pop %v4225
      %v4342 = vmul.f32 1.0, %v4341
      %v4343 = vrcp.pop %v4226
      %v4344 = vmul.f32 1.0, %v4343
      %v4345 = vrcp.pop %v4227
      %v4346 = vmul.f32 1.0, %v4345
      %v4347 = vrcp.pop %v4228
      %v4348 = vmul.f32 1.0, %v4347
      %v4349 = vrcp.pop %v4229
      %v4350 = vmul.f32 1.0, %v4349
      %v4351 = vrcp.pop %v4230
      %v4352 = vmul.f32 1.0, %v4351
      %v4353 = vrcp.pop %v4231
      %v4354 = vmul.f32 1.0, %v4353
      %v4355 = vrcp.pop %v4232
      %v4356 = vmul.f32 1.0, %v4355
      %v4357 = vrcp.pop %v4233
      %v4358 = vmul.f32 1.0, %v4357
      %v4359 = vrcp.pop %v4234
      %v4360 = vmul.f32 1.0, %v4359
      %vm4361 = vcmask 7168
      %4362 = vst.msk [vmem:[%s309] sm:$0xff] %vm4361, %v4236
      %4363 = vst.msk [vmem:[%s309 + $0x8] sm:$0xff] %vm4361, %v4238
      %4364 = vst.msk [vmem:[%s309 + $0x10] sm:$0xff] %vm4361, %v4240
      %4365 = vst.msk [vmem:[%s309 + $0x18] sm:$0xff] %vm4361, %v4242
      %4366 = vst.msk [vmem:[%s309 + $0x20] sm:$0xff] %vm4361, %v4244
      %4367 = vst.msk [vmem:[%s309 + $0x28] sm:$0xff] %vm4361, %v4246
      %4368 = vst.msk [vmem:[%s309 + $0x30] sm:$0xff] %vm4361, %v4248
      %4369 = vst.msk [vmem:[%s309 + $0x38] sm:$0xff] %vm4361, %v4250
      %4370 = vst.msk [vmem:[%s309 + $0x40] sm:$0xff] %vm4361, %v4252
      %4371 = vst.msk [vmem:[%s309 + $0x48] sm:$0xff] %vm4361, %v4254
      %4372 = vst.msk [vmem:[%s309 + $0x50] sm:$0xff] %vm4361, %v4256
      %4373 = vst.msk [vmem:[%s309 + $0x58] sm:$0xff] %vm4361, %v4258
      %4374 = vst.msk [vmem:[%s309 + $0x60] sm:$0xff] %vm4361, %v4260
      %4375 = vst.msk [vmem:[%s309 + $0x68] sm:$0xff] %vm4361, %v4262
      %4376 = vst.msk [vmem:[%s309 + $0x70] sm:$0xff] %vm4361, %v4264
      %4377 = vst.msk [vmem:[%s309 + $0x78] sm:$0xff] %vm4361, %v4266
      %4378 = vst.msk [vmem:[%s309 + $0x80] sm:$0xff] %vm4361, %v4268
      %4379 = vst.msk [vmem:[%s309 + $0x88] sm:$0xff] %vm4361, %v4270
      %4380 = vst.msk [vmem:[%s309 + $0x90] sm:$0xff] %vm4361, %v4272
      %4381 = vst.msk [vmem:[%s309 + $0x98] sm:$0xff] %vm4361, %v4274
      %4382 = vst.msk [vmem:[%s309 + $0xa0] sm:$0xff] %vm4361, %v4276
      %4383 = vst.msk [vmem:[%s309 + $0xa8] sm:$0xff] %vm4361, %v4278
      %4384 = vst.msk [vmem:[%s309 + $0xb0] sm:$0xff] %vm4361, %v4280
      %4385 = vst.msk [vmem:[%s309 + $0xb8] sm:$0xff] %vm4361, %v4282
      %4386 = vst.msk [vmem:[%s309 + $0xc0] sm:$0xff] %vm4361, %v4284
      %4387 = vst.msk [vmem:[%s309 + $0xc8] sm:$0xff] %vm4361, %v4286
      %4388 = vst.msk [vmem:[%s309 + $0xd0] sm:$0xff] %vm4361, %v4288
      %4389 = vst.msk [vmem:[%s309 + $0xd8] sm:$0xff] %vm4361, %v4290
      %4390 = vst.msk [vmem:[%s309 + $0xe0] sm:$0xff] %vm4361, %v4292
      %4391 = vst.msk [vmem:[%s309 + $0xe8] sm:$0xff] %vm4361, %v4294
      %4392 = vst.msk [vmem:[%s309 + $0xf0] sm:$0xff] %vm4361, %v4296
      %4393 = vst.msk [vmem:[%s309 + $0xf8] sm:$0xff] %vm4361, %v4298
      %4394 = vst.msk [vmem:[%s309 + $0x100] sm:$0xff] %vm4361, %v4300
      %4395 = vst.msk [vmem:[%s309 + $0x108] sm:$0xff] %vm4361, %v4302
      %4396 = vst.msk [vmem:[%s309 + $0x110] sm:$0xff] %vm4361, %v4304
      %4397 = vst.msk [vmem:[%s309 + $0x118] sm:$0xff] %vm4361, %v4306
      %4398 = vst.msk [vmem:[%s309 + $0x120] sm:$0xff] %vm4361, %v4308
      %4399 = vst.msk [vmem:[%s309 + $0x128] sm:$0xff] %vm4361, %v4310
      %4400 = vst.msk [vmem:[%s309 + $0x130] sm:$0xff] %vm4361, %v4312
      %4401 = vst.msk [vmem:[%s309 + $0x138] sm:$0xff] %vm4361, %v4314
      %4402 = vst.msk [vmem:[%s309 + $0x140] sm:$0xff] %vm4361, %v4316
      %4403 = vst.msk [vmem:[%s309 + $0x148] sm:$0xff] %vm4361, %v4318
      %4404 = vst.msk [vmem:[%s309 + $0x150] sm:$0xff] %vm4361, %v4320
      %4405 = vst.msk [vmem:[%s309 + $0x158] sm:$0xff] %vm4361, %v4322
      %4406 = vst.msk [vmem:[%s309 + $0x160] sm:$0xff] %vm4361, %v4324
      %4407 = vst.msk [vmem:[%s309 + $0x168] sm:$0xff] %vm4361, %v4326
      %4408 = vst.msk [vmem:[%s309 + $0x170] sm:$0xff] %vm4361, %v4328
      %4409 = vst.msk [vmem:[%s309 + $0x178] sm:$0xff] %vm4361, %v4330
      %4410 = vst.msk [vmem:[%s309 + $0x180] sm:$0xff] %vm4361, %v4332
      %4411 = vst.msk [vmem:[%s309 + $0x188] sm:$0xff] %vm4361, %v4334
      %4412 = vst.msk [vmem:[%s309 + $0x190] sm:$0xff] %vm4361, %v4336
      %4413 = vst.msk [vmem:[%s309 + $0x198] sm:$0xff] %vm4361, %v4338
      %4414 = vst.msk [vmem:[%s309 + $0x1a0] sm:$0xff] %vm4361, %v4340
      %4415 = vst.msk [vmem:[%s309 + $0x1a8] sm:$0xff] %vm4361, %v4342
      %4416 = vst.msk [vmem:[%s309 + $0x1b0] sm:$0xff] %vm4361, %v4344
      %4417 = vst.msk [vmem:[%s309 + $0x1b8] sm:$0xff] %vm4361, %v4346
      %4418 = vst.msk [vmem:[%s309 + $0x1c0] sm:$0xff] %vm4361, %v4348
      %4419 = vst.msk [vmem:[%s309 + $0x1c8] sm:$0xff] %vm4361, %v4350
      %4420 = vst.msk [vmem:[%s309 + $0x1d0] sm:$0xff] %vm4361, %v4352
      %4421 = vst.msk [vmem:[%s309 + $0x1d8] sm:$0xff] %vm4361, %v4354
      %4422 = vst.msk [vmem:[%s309 + $0x1e0] sm:$0xff] %vm4361, %v4356
      %4423 = vst.msk [vmem:[%s309 + $0x1e8] sm:$0xff] %vm4361, %v4358
      %4424 = vst.msk [vmem:[%s309 + $0x1f0] sm:$0xff] %vm4361, %v4360
      %s4425 = smul.u32 63, %s21
      %p4426 = scmp.lt.s32.totalorder %s4425, 125
      %s4427 = scalar_select %p4426, %s4425, 125
      %s4428 = smul.addr %s4427, 8
      %s4429 = scalar_lea.vmem %s8, %s4428
      // Predicated region
      $region53: #{tpu_custom_call.1} parent=51 // pred_check
        %p4430 = pneg %p212
      $region54: #{tpu_custom_call.1} parent=51 // pred_check_branch
        %4432 = sbr.rel (%p4430) target = $region56
      $region55: #{tpu_custom_call.1} parent=51 // pred_region
        %s4433 = smul.u32 63, %s21
      $region56: #{tpu_custom_call.1} parent=51 // pred_fallthru
        _
    $region52: #{tpu_custom_call.1} parent=5 // pred_fallthru
      _
    %p4434 = scmp.le.s32.totalorder 2, %s16
    // Predicated region
    $region57: #{tpu_custom_call.1} parent=5 // pred_check
      %p4435 = pneg %p4434
    $region58: #{tpu_custom_call.1} parent=5 // pred_check_branch
      %4437 = sbr.rel (%p4435) target = $region60
    $region59: #{tpu_custom_call.1} parent=5 // pred_region
      %s4438 = ssub.s32 %s16, 2
      // Predicated region
      $region61: #{tpu_custom_call.1} parent=59 // pred_check
        %p4439 = pneg %p218
      $region62: #{tpu_custom_call.1} parent=59 // pred_check_branch
        %4441 = sbr.rel (%p4439) target = $region64
      $region63: #{tpu_custom_call.1} parent=59 // pred_region
        %s4442 = smul.u32 63, %s22
        %p4443 = scmp.lt.s32.totalorder %s4442, 125
        %s4444 = scalar_select %p4443, %s4442, 125
        %s4445 = smul.addr %s4444, 8
        %s4446 = scalar_lea.vmem %s8, %s4445
      $region64: #{tpu_custom_call.1} parent=59 // pred_fallthru
        _
    $region60: #{tpu_custom_call.1} parent=5 // pred_fallthru
      _
  $region6: #{tpu_custom_call.1} parent=0 // loop_footer
    %s20 = sadd.s32 1, %s16
  $region7: #{tpu_custom_call.1} parent=0 // loop_footer_branch
    %15 = sbr.rel target = $region3
  $region8: #{tpu_custom_call.1} parent=0 // loop_exit
    _

</llo_original>
